<compile_context>
chip_gen: v7x
topology: tpu7x:2x2x1
jax: 0.10.0
libtpu: 0.0.40
codegen_flags: <defaults>
</compile_context>

<pallas_src>
import math

import jax
import jax.numpy as jnp
from jax.experimental import pallas as pl
from jax.experimental.pallas import tpu as pltpu


def _round_up(a, b):
    return ((a + b - 1) // b) * b


def _make_kernel(Kc, tt, H8, SDp, precision):
    """Per-(batch, time-tile, column-block) kernel.

    main_ref : (1, tt, SDp)   non-overlapping main slab (reduced-time x (S*Dp))
    halo_ref : (1, H8, SDp)   first H8 rows of the *next* tile (trailing halo)
    w_ref    : (Kc, SDp, cn)  folded depthwise*pointwise weights, grouped by shift
    b_ref    : (1, cn) f32    fused (depthwise+pointwise) bias
    o_ref    : (1, tt, cn)
    slab_ref : (tt+H8, SDp)   VMEM scratch: main+halo stitched once per step
    """

    def kernel(main_ref, halo_ref, w_ref, b_ref, o_ref, slab_ref):
        # Stitch the overlapping window once in VMEM (replaces the v2 host-side
        # duplicated slabs, i.e. a full extra activation HBM round trip, with a
        # single in-kernel copy).
        slab_ref[0:tt, :] = main_ref[0]
        slab_ref[tt:tt + H8, :] = halo_ref[0]

        # Tap j=0 reads the main block directly (8/16-aligned, independent of the
        # stitch) so the MXU can start while the stitch stores drain.
        acc = jnp.dot(main_ref[0], w_ref[0],
                      preferred_element_type=jnp.float32, precision=precision)
        # Taps j>=1: shifted windows of the stitched slab.  Kc = ceil(K/S) is small
        # and static -> unrolled MXU dots with f32 accumulation; the accumulator
        # RMW (Kc-1 extra passes over a tt x cn f32 tile) stays well under the MXU
        # time for the default tiles.
        # TODO(synk): if the bundle dump shows Mosaic materializing realignment
        # copies for these sublane-offset operand feeds, switch to pltpu.roll
        # (XLU slot overlaps the MXU) for the shifted windows.
        for j in range(1, Kc):
            acc = acc + jnp.dot(slab_ref[j:j + tt, :], w_ref[j],
                                preferred_element_type=jnp.float32,
                                precision=precision)
        o_ref[0] = (acc + b_ref[...]).astype(o_ref.dtype)

    return kernel


def causal_temporal_reduction(x, lengths, params, *, kernel_size=5,
                              reduction_factor=2, reduction_state=None,
                              time_tile=None, mxu_precision=None):
    """Pallas implementation of CausalTemporalReduction.forward.

    x:               (B, T, D)  float32 or bfloat16
    lengths:         (B,) int32 or None
    params:          (w_dw (D*4,1,K), b_dw (D*4,), w_pw (D, D*4, 1), b_pw (D,))
                     in the PyTorch Conv1d weight layout.
    reduction_state: optional streaming state, (B, K-S, D) *time-major*
                     (the PyTorch module stores it channel-major (B, D, K-S)).
    time_tile:       output-time rows per grid step (None = auto from VMEM budget).
    mxu_precision:   override MXU precision (e.g. jax.lax.Precision.DEFAULT to
                     trade exact f32 semantics for speed on v5e).

    Returns (y (B, T_out, D), new_lengths, new_reduction_state)
    """
    w_dw, b_dw, w_pw, b_pw = params
    B, T, D = x.shape
    K, S = kernel_size, reduction_factor
    assert K > S, "kernel_size must be greater than reduction_factor"
    M = w_dw.shape[0] // D                      # channel multiplier (= 4)

    # ---- causal padding / streaming state (mirrors the PyTorch forward) ----
    if reduction_state is None:
        right_pad = (S - T % S) % S
        x_src, T_src, left_pad = x, T, K - S
        T_cat = T + (K - S) + right_pad
        new_lengths = None if lengths is None else lengths // S
        new_state = None
    else:
        # Streaming branch: concat state, keep last K-S frames as new state, and
        # do NOT rescale lengths.  NOTE: like the PyTorch module, a chunk whose
        # length is not a multiple of S silently drops the trailing partial window.
        x_src = jnp.concatenate([reduction_state, x], axis=1)
        new_state = x_src[:, -(K - S):, :]
        new_lengths = lengths
        T_src, left_pad = x_src.shape[1], 0
        T_cat = T_src

    T_out = (T_cat - K) // S + 1
    assert T_out >= 1, "input too short for a single output frame"
    Hs = (K - 1) // S                           # trailing halo rows needed per tile
    Kc = Hs + 1                                 # number of fused taps (= ceil(K/S))

    act_isz = x.dtype.itemsize
    w_f32 = (x.dtype == jnp.float32)
    w_isz = 4 if w_f32 else act_isz
    row_align = 8 if act_isz >= 4 else (16 if act_isz == 2 else 32)
    H8 = _round_up(max(Hs, 1), row_align)       # halo block rows (sublane aligned)
    Dp = _round_up(D, 128)                      # lane-dense feature dim
    SDp = S * Dp

    # ---- per-generation VMEM budget + tile sizing ----
    try:
        cap = int(pltpu.get_tpu_info().vmem_capacity_bytes * 0.8)
    except Exception:                            # pragma: no cover - conservative
        cap = 64 * 1024 * 1024                   # safe on every generation
    cap = max(cap, 32 * 1024 * 1024)

    def vmem_est(tt_, cn_, nbuf_w):
        b = 2 * tt_ * SDp * act_isz              # main block, double-buffered
        b += 2 * H8 * SDp * act_isz              # halo block, double-buffered
        b += (tt_ + H8) * SDp * act_isz          # slab scratch
        b += nbuf_w * (Kc * SDp * cn_ * w_isz + Dp * 4)   # weights + bias
        b += 2 * tt_ * cn_ * act_isz             # output block, double-buffered
        b += 2 * tt_ * cn_ * 4                   # f32 accumulator + epilogue temp
        b += 2 << 20                             # Mosaic / MXU internal scratch
        return b

    tt = 1024 if time_tile is None else int(time_tile)
    tt = min(tt, _round_up(T_out, row_align))
    tt = _round_up(max(tt, row_align), H8)       # tt must be a multiple of H8
    while vmem_est(tt, Dp, 2) * 1.2 > cap and tt > H8:
        tt = max(H8, _round_up(max(tt // 2, H8), H8))

    NT = int(pl.cdiv(T_out, tt))
    T_out_pad = NT * tt
    Lr = T_out_pad + H8                          # reduced-time rows incl. halo
    Lf = Lr * S                                  # frames needed in padded input

    # Feature-column split: give both v7x TensorCores work for streaming decode.
    NC = 2 if (B * NT == 1 and Dp % 256 == 0) else 1
    cn = Dp // NC

    # ---- host-side layout: ONE pad + a free reshape (no transpose, no dup) ----
    total = left_pad + T_src
    if Lf >= total:
        x_p = jnp.pad(x_src, ((0, 0), (left_pad, Lf - total), (0, Dp - D)))
    else:
        # frames past the last full window are never read -> drop them
        x_p = jnp.pad(x_src[:, :Lf - left_pad, :],
                      ((0, 0), (left_pad, 0), (0, Dp - D)))
    xr = x_p.reshape(B, Lr, SDp)                 # row-major merge -> free reshape

    # ---- fold depthwise into pointwise (exact: depthwise is diagonal in d) ----
    wdw_r = w_dw[:, 0, :].reshape(D, M, K).astype(jnp.float32)      # [d, m, k]
    wpw_r = w_pw[:, :, 0].reshape(D, D, M).astype(jnp.float32)      # [o, d, m]
    W = jnp.einsum('dmk,odm->kdo', wdw_r, wpw_r)                    # (K, D, D)
    bias = (b_pw.astype(jnp.float32) +
            jnp.einsum('dm,odm->o',
                       b_dw.reshape(D, M).astype(jnp.float32), wpw_r))
    # Stack taps by row-shift j = k//S: Wstack[j, (k%S)*Dp + d, o] = W[k, d, o]
    Wpad = jnp.pad(W, ((0, Kc * S - K), (0, Dp - D), (0, Dp - D)))  # (Kc*S, Dp, Dp)
    Wstack = Wpad.reshape(Kc, SDp, Dp)
    if not w_f32:
        Wstack = Wstack.astype(x.dtype)
    bias = jnp.pad(bias, (0, Dp - D)).reshape(1, Dp)                # stays float32

    if mxu_precision is not None:
        precision = mxu_precision
    else:
        precision = (jax.lax.Precision.HIGHEST if w_f32
                     else jax.lax.Precision.DEFAULT)

    vmem_limit = int(min(cap, max(32 * 1024 * 1024,
                                  int(vmem_est(tt, cn, 2) * 1.25))))

    kernel = _make_kernel(Kc, tt, H8, SDp, precision)
    grid = (B, NT, NC)
    tpb = tt // H8                               # halo blocks per time tile

    def run(single_buffer_consts):
        const_kw = {}
        if single_buffer_consts and NC == 1:     # weight block index is constant
            const_kw = dict(pipeline_mode=pl.Buffered(1))
        in_specs = [
            pl.BlockSpec((1, tt, SDp), lambda b, t, c: (b, t, 0)),
            pl.BlockSpec((1, H8, SDp), lambda b, t, c: (b, (t + 1) * tpb, 0)),
            pl.BlockSpec((Kc, SDp, cn), lambda b, t, c: (0, 0, c), **const_kw),
            pl.BlockSpec((1, cn), lambda b, t, c: (0, c), **const_kw),
        ]
        return pl.pallas_call(
            kernel,
            out_shape=jax.ShapeDtypeStruct((B, T_out_pad, Dp), x.dtype),
            grid=grid,
            in_specs=in_specs,
            out_specs=pl.BlockSpec((1, tt, cn), lambda b, t, c: (b, t, c)),
            scratch_shapes=[pltpu.VMEM((tt + H8, SDp), x.dtype)],
            compiler_params=pltpu.CompilerParams(
                dimension_semantics=("parallel", "parallel", "parallel"),
                vmem_limit_bytes=vmem_limit),
        )(xr, xr, Wstack, bias)

    try:
        y_full = run(True)
    except Exception:
        # pipeline_mode / Buffered(1) not supported by this build -> default buffering
        y_full = run(False)

    # Avoid the extra output copy when no padding was introduced (review item).
    if T_out_pad == T_out and Dp == D:
        y = y_full
    elif Dp == D:
        y = y_full[:, :T_out, :]
    else:
        y = y_full[:, :T_out, :D]

    # TODO(synk): EncoderState bookkeeping (state.residual, pad/att mask management,
    # layer-state stacking) is host-side plumbing in the PyTorch module and is not
    # part of the kernel.
    return y, new_lengths, new_state


def reference_forward(x, lengths, params, kernel_size=5, reduction_factor=2):
    """Pure-JAX reference mirroring the PyTorch forward (non-streaming path)."""
    w_dw, b_dw, w_pw, b_pw = params
    B, T, D = x.shape
    K, S = kernel_size, reduction_factor
    xc = jnp.transpose(x, (0, 2, 1))                       # (B, D, T) == torch NCT
    right_pad = (S - T % S) % S
    xc = jnp.pad(xc, ((0, 0), (0, 0), (K - S, right_pad)))
    h = jax.lax.conv_general_dilated(
        xc, w_dw, window_strides=(S,), padding='VALID',
        dimension_numbers=('NCH', 'OIH', 'NCH'), feature_group_count=D,
        precision=jax.lax.Precision.HIGHEST)
    h = h + b_dw[None, :, None]
    y = jax.lax.conv_general_dilated(
        h, w_pw, window_strides=(1,), padding='VALID',
        dimension_numbers=('NCH', 'OIH', 'NCH'),
        precision=jax.lax.Precision.HIGHEST)
    y = y + b_pw[None, :, None]
    y = jnp.transpose(y, (0, 2, 1))
    new_lengths = None if lengths is None else lengths // S
    return y, new_lengths


def make_params(d_model, K, key):
    """Deterministic Conv1d-style uniform init matching the PyTorch module."""
    M = 4
    k1, k2, k3, k4 = jax.random.split(key, 4)
    bound_dw = 1.0 / math.sqrt(K)                          # fan_in = (in/groups)*K
    w_dw = jax.random.uniform(k1, (d_model * M, 1, K), jnp.float32, -bound_dw, bound_dw)
    b_dw = jax.random.uniform(k2, (d_model * M,), jnp.float32, -bound_dw, bound_dw)
    bound_pw = 1.0 / math.sqrt(d_model * M)                # fan_in = d_model*4
    w_pw = jax.random.uniform(k3, (d_model, d_model * M, 1), jnp.float32, -bound_pw, bound_pw)
    b_pw = jax.random.uniform(k4, (d_model,), jnp.float32, -bound_pw, bound_pw)
    return (w_dw, b_dw, w_pw, b_pw)


if __name__ == "__main__":
    K, S = 5, 2
    key = jax.random.PRNGKey(0)
    kp, kx, kx2, kp2 = jax.random.split(key, 4)

    # --- batch (non-streaming) path, f32, small shapes ---
    d_model, B, T = 32, 2, 16
    params = make_params(d_model, K, kp)
    x = jax.random.normal(kx, (B, T, d_model), jnp.float32)
    lengths = jnp.array([T, T - 4], dtype=jnp.int32)

    y, new_lengths, _ = causal_temporal_reduction(
        x, lengths, params, kernel_size=K, reduction_factor=S)
    y = jax.block_until_ready(y)
    y_ref, len_ref = reference_forward(x, lengths, params, K, S)
    assert y.shape == (B, T // S, d_model), y.shape
    err = float(jnp.max(jnp.abs(y - y_ref)))
    assert err < 2e-3, err
    assert jnp.array_equal(new_lengths, len_ref)

    # --- multi-tile path (small time_tile forces NT>1 -> exercises the halo) ---
    T2 = 64
    x2 = jax.random.normal(kx2, (B, T2, d_model), jnp.float32)
    y2, _, _ = causal_temporal_reduction(
        x2, None, params, kernel_size=K, reduction_factor=S, time_tile=8)
    y2 = jax.block_until_ready(y2)
    y2_ref, _ = reference_forward(x2, None, params, K, S)
    err2 = float(jnp.max(jnp.abs(y2 - y2_ref)))
    assert err2 < 2e-3, err2

    # --- streaming path (zero state == causal left pad when T % S == 0) ---
    state0 = jnp.zeros((B, K - S, d_model), jnp.float32)
    y_s, len_s, new_state = causal_temporal_reduction(
        x, lengths, params, kernel_size=K, reduction_factor=S, reduction_state=state0)
    y_s = jax.block_until_ready(y_s)
    assert jnp.allclose(y_s, y, atol=1e-5, rtol=1e-5), float(jnp.max(jnp.abs(y_s - y)))
    assert jnp.array_equal(new_state, x[:, -(K - S):, :])
    assert jnp.array_equal(len_s, lengths)

    # --- bf16 fast path (fold done in f32, cast once; f32 MXU accumulation) ---
    y_bf16, _, _ = causal_temporal_reduction(
        x.astype(jnp.bfloat16), lengths, params, kernel_size=K, reduction_factor=S)
    y_bf16 = jax.block_until_ready(y_bf16)
    assert float(jnp.max(jnp.abs(y_bf16.astype(jnp.float32) - y_ref))) < 5e-2

    # --- single-tile, B=1, wider D: exercises the feature-column split path ---
    d2, B1, T1 = 256, 1, 8
    params2 = make_params(d2, K, kp2)
    x3 = jax.random.normal(jax.random.PRNGKey(3), (B1, T1, d2), jnp.float32)
    y3, _, _ = causal_temporal_reduction(x3, None, params2, kernel_size=K,
                                         reduction_factor=S)
    y3 = jax.block_until_ready(y3)
    y3_ref, _ = reference_forward(x3, None, params2, K, S)
    err3 = float(jnp.max(jnp.abs(y3 - y3_ref)))
    assert err3 < 2e-3, err3

    print("KERNEL_OK")
</pallas_src>

<mosaic_0001>
module attributes {stable_mosaic.version = 11 : i64} {
  func.func @kernel(%arg0: i32, %arg1: i32, %arg2: i32, %arg3: memref<1x8x256xf32, #tpu.memory_space<vmem>>, %arg4: memref<1x8x256xf32, #tpu.memory_space<vmem>>, %arg5: memref<3x256x128xf32, #tpu.memory_space<vmem>>, %arg6: memref<1x128xf32, #tpu.memory_space<vmem>>, %arg7: memref<1x8x128xf32, #tpu.memory_space<vmem>>, %arg8: memref<16x256xf32, #tpu.memory_space<vmem>>) attributes {dimension_semantics = [#tpu.dimension_semantics<parallel>, #tpu.dimension_semantics<parallel>, #tpu.dimension_semantics<parallel>], iteration_bounds = array<i64: 2, 1, 1>, scalar_prefetch = 0 : i64, scratch_operands = 1 : i64, tpu.core_type = #tpu.core_type<tc>, window_params = [{transform_indices = @transform_0, window_bounds = array<i64: 1, 8, 256>}, {transform_indices = @transform_1, window_bounds = array<i64: 1, 8, 256>}, {pipeline_mode = #tpu.pipeline_mode<synchronous>, transform_indices = @transform_2, window_bounds = array<i64: 3, 256, 128>}, {pipeline_mode = #tpu.pipeline_mode<synchronous>, transform_indices = @transform_3, window_bounds = array<i64: 1, 128>}, {transform_indices = @transform_4, window_bounds = array<i64: 1, 8, 128>}]} {
    %c0 = arith.constant 0 : index
    %c0_0 = arith.constant 0 : index
    %c0_1 = arith.constant 0 : index
    %0 = vector.load %arg3[%c0, %c0_0, %c0_1] : memref<1x8x256xf32, #tpu.memory_space<vmem>>, vector<1x8x256xf32>
    %1 = vector.shape_cast %0 : vector<1x8x256xf32> to vector<8x256xf32>
    %c0_2 = arith.constant 0 : index
    %c0_3 = arith.constant 0 : index
    %2 = vector.load %arg8[%c0_2, %c0_3] : memref<16x256xf32, #tpu.memory_space<vmem>>, vector<8x256xf32>
    tpu.vector_store %arg8[%c0_2, %c0_3], %1 {strides = array<i32>} : memref<16x256xf32, #tpu.memory_space<vmem>>, vector<8x256xf32>,
    %c0_4 = arith.constant 0 : index
    %c0_5 = arith.constant 0 : index
    %c0_6 = arith.constant 0 : index
    %3 = vector.load %arg4[%c0_4, %c0_5, %c0_6] : memref<1x8x256xf32, #tpu.memory_space<vmem>>, vector<1x8x256xf32>
    %4 = vector.shape_cast %3 : vector<1x8x256xf32> to vector<8x256xf32>
    %c8 = arith.constant 8 : index
    %c0_7 = arith.constant 0 : index
    %5 = vector.load %arg8[%c8, %c0_7] : memref<16x256xf32, #tpu.memory_space<vmem>>, vector<8x256xf32>
    tpu.vector_store %arg8[%c8, %c0_7], %4 {strides = array<i32>} : memref<16x256xf32, #tpu.memory_space<vmem>>, vector<8x256xf32>,
    %c0_8 = arith.constant 0 : index
    %c0_9 = arith.constant 0 : index
    %c0_10 = arith.constant 0 : index
    %6 = vector.load %arg3[%c0_8, %c0_9, %c0_10] : memref<1x8x256xf32, #tpu.memory_space<vmem>>, vector<1x8x256xf32>
    %7 = vector.shape_cast %6 : vector<1x8x256xf32> to vector<8x256xf32>
    %c0_11 = arith.constant 0 : index
    %c0_12 = arith.constant 0 : index
    %c0_13 = arith.constant 0 : index
    %8 = vector.load %arg5[%c0_11, %c0_12, %c0_13] : memref<3x256x128xf32, #tpu.memory_space<vmem>>, vector<1x256x128xf32>
    %9 = vector.shape_cast %8 : vector<1x256x128xf32> to vector<256x128xf32>
    %cst = arith.constant dense<0.000000e+00> : vector<8x128xf32>
    %10 = tpu.matmul %7, %9, %cst {dimension_numbers = #tpu.dot_dimension_numbers<[1], [0], [0], [1], [0, 0, 1, 1], [], []>, precision = #tpu.contract_precision<fp32>} : vector<8x256xf32>, vector<256x128xf32>, vector<8x128xf32> -> vector<8x128xf32>
    %c1 = arith.constant 1 : index
    %c0_14 = arith.constant 0 : index
    %11 = vector.load %arg8[%c1, %c0_14] : memref<16x256xf32, #tpu.memory_space<vmem>>, vector<8x256xf32>
    %c1_15 = arith.constant 1 : index
    %c0_16 = arith.constant 0 : index
    %c0_17 = arith.constant 0 : index
    %12 = vector.load %arg5[%c1_15, %c0_16, %c0_17] : memref<3x256x128xf32, #tpu.memory_space<vmem>>, vector<1x256x128xf32>
    %13 = vector.shape_cast %12 : vector<1x256x128xf32> to vector<256x128xf32>
    %cst_18 = arith.constant dense<0.000000e+00> : vector<8x128xf32>
    %14 = tpu.matmul %11, %13, %cst_18 {dimension_numbers = #tpu.dot_dimension_numbers<[1], [0], [0], [1], [0, 0, 1, 1], [], []>, precision = #tpu.contract_precision<fp32>} : vector<8x256xf32>, vector<256x128xf32>, vector<8x128xf32> -> vector<8x128xf32>
    %15 = arith.addf %10, %14 : vector<8x128xf32>
    %c2 = arith.constant 2 : index
    %c0_19 = arith.constant 0 : index
    %16 = vector.load %arg8[%c2, %c0_19] : memref<16x256xf32, #tpu.memory_space<vmem>>, vector<8x256xf32>
    %c2_20 = arith.constant 2 : index
    %c0_21 = arith.constant 0 : index
    %c0_22 = arith.constant 0 : index
    %17 = vector.load %arg5[%c2_20, %c0_21, %c0_22] : memref<3x256x128xf32, #tpu.memory_space<vmem>>, vector<1x256x128xf32>
    %18 = vector.shape_cast %17 : vector<1x256x128xf32> to vector<256x128xf32>
    %cst_23 = arith.constant dense<0.000000e+00> : vector<8x128xf32>
    %19 = tpu.matmul %16, %18, %cst_23 {dimension_numbers = #tpu.dot_dimension_numbers<[1], [0], [0], [1], [0, 0, 1, 1], [], []>, precision = #tpu.contract_precision<fp32>} : vector<8x256xf32>, vector<256x128xf32>, vector<8x128xf32> -> vector<8x128xf32>
    %20 = arith.addf %15, %19 : vector<8x128xf32>
    %c0_24 = arith.constant 0 : index
    %c0_25 = arith.constant 0 : index
    %21 = vector.load %arg6[%c0_24, %c0_25] : memref<1x128xf32, #tpu.memory_space<vmem>>, vector<1x128xf32>
    %22 = vector.broadcast %21 : vector<1x128xf32> to vector<8x128xf32>
    %23 = arith.addf %20, %22 : vector<8x128xf32>
    %c0_26 = arith.constant 0 : index
    %c0_27 = arith.constant 0 : index
    %c0_28 = arith.constant 0 : index
    %24 = vector.load %arg7[%c0_26, %c0_27, %c0_28] : memref<1x8x128xf32, #tpu.memory_space<vmem>>, vector<1x8x128xf32>
    %25 = vector.shape_cast %24 : vector<1x8x128xf32> to vector<8x128xf32>
    %26 = vector.shape_cast %23 : vector<8x128xf32> to vector<1x8x128xf32>
    tpu.vector_store %arg7[%c0_26, %c0_27, %c0_28], %26 {strides = array<i32>} : memref<1x8x128xf32, #tpu.memory_space<vmem>>, vector<1x8x128xf32>,
    return
  }
  func.func @transform_0(%arg0: i32, %arg1: i32, %arg2: i32) -> (i32, i32, i32) {
    %c0_i32 = arith.constant 0 : i32
    %c0_i32_0 = arith.constant 0 : i32
    return %arg0, %arg1, %c0_i32 : i32, i32, i32
  }
  func.func @transform_1(%arg0: i32, %arg1: i32, %arg2: i32) -> (i32, i32, i32) {
    %c1_i32 = arith.constant 1 : i32
    %0 = arith.addi %arg1, %c1_i32 : i32
    %c1_i32_0 = arith.constant 1 : i32
    %1 = arith.muli %0, %c1_i32_0 : i32
    %c0_i32 = arith.constant 0 : i32
    %c0_i32_1 = arith.constant 0 : i32
    return %arg0, %1, %c0_i32 : i32, i32, i32
  }
  func.func @transform_2(%arg0: i32, %arg1: i32, %arg2: i32) -> (i32, i32, i32) {
    %c0_i32 = arith.constant 0 : i32
    %c0_i32_0 = arith.constant 0 : i32
    %c0_i32_1 = arith.constant 0 : i32
    return %c0_i32, %c0_i32_0, %arg2 : i32, i32, i32
  }
  func.func @transform_3(%arg0: i32, %arg1: i32, %arg2: i32) -> (i32, i32) {
    %c0_i32 = arith.constant 0 : i32
    %c0_i32_0 = arith.constant 0 : i32
    return %c0_i32, %arg2 : i32, i32
  }
  func.func @transform_4(%arg0: i32, %arg1: i32, %arg2: i32) -> (i32, i32, i32) {
    %c0_i32 = arith.constant 0 : i32
    return %arg0, %arg1, %arg2 : i32, i32, i32
  }
}

module attributes {stable_mosaic.version = 11 : i64} {
  func.func @kernel(%arg0: i32, %arg1: i32, %arg2: i32, %arg3: memref<1x8x256xf32, #tpu.memory_space<vmem>>, %arg4: memref<1x8x256xf32, #tpu.memory_space<vmem>>, %arg5: memref<3x256x128xf32, #tpu.memory_space<vmem>>, %arg6: memref<1x128xf32, #tpu.memory_space<vmem>>, %arg7: memref<1x8x128xf32, #tpu.memory_space<vmem>>, %arg8: memref<16x256xf32, #tpu.memory_space<vmem>>) attributes {dimension_semantics = [#tpu.dimension_semantics<parallel>, #tpu.dimension_semantics<parallel>, #tpu.dimension_semantics<parallel>], iteration_bounds = array<i64: 2, 1, 1>, scalar_prefetch = 0 : i64, scratch_operands = 1 : i64, tpu.core_type = #tpu.core_type<tc>, window_params = [{transform_indices = @transform_0, window_bounds = array<i64: 1, 8, 256>}, {transform_indices = @transform_1, window_bounds = array<i64: 1, 8, 256>}, {transform_indices = @transform_2, window_bounds = array<i64: 3, 256, 128>}, {transform_indices = @transform_3, window_bounds = array<i64: 1, 128>}, {transform_indices = @transform_4, window_bounds = array<i64: 1, 8, 128>}]} {
    %c0 = arith.constant 0 : index
    %c0_0 = arith.constant 0 : index
    %c0_1 = arith.constant 0 : index
    %0 = vector.load %arg3[%c0, %c0_0, %c0_1] : memref<1x8x256xf32, #tpu.memory_space<vmem>>, vector<1x8x256xf32>
    %1 = vector.shape_cast %0 : vector<1x8x256xf32> to vector<8x256xf32>
    %c0_2 = arith.constant 0 : index
    %c0_3 = arith.constant 0 : index
    %2 = vector.load %arg8[%c0_2, %c0_3] : memref<16x256xf32, #tpu.memory_space<vmem>>, vector<8x256xf32>
    tpu.vector_store %arg8[%c0_2, %c0_3], %1 {strides = array<i32>} : memref<16x256xf32, #tpu.memory_space<vmem>>, vector<8x256xf32>,
    %c0_4 = arith.constant 0 : index
    %c0_5 = arith.constant 0 : index
    %c0_6 = arith.constant 0 : index
    %3 = vector.load %arg4[%c0_4, %c0_5, %c0_6] : memref<1x8x256xf32, #tpu.memory_space<vmem>>, vector<1x8x256xf32>
    %4 = vector.shape_cast %3 : vector<1x8x256xf32> to vector<8x256xf32>
    %c8 = arith.constant 8 : index
    %c0_7 = arith.constant 0 : index
    %5 = vector.load %arg8[%c8, %c0_7] : memref<16x256xf32, #tpu.memory_space<vmem>>, vector<8x256xf32>
    tpu.vector_store %arg8[%c8, %c0_7], %4 {strides = array<i32>} : memref<16x256xf32, #tpu.memory_space<vmem>>, vector<8x256xf32>,
    %c0_8 = arith.constant 0 : index
    %c0_9 = arith.constant 0 : index
    %c0_10 = arith.constant 0 : index
    %6 = vector.load %arg3[%c0_8, %c0_9, %c0_10] : memref<1x8x256xf32, #tpu.memory_space<vmem>>, vector<1x8x256xf32>
    %7 = vector.shape_cast %6 : vector<1x8x256xf32> to vector<8x256xf32>
    %c0_11 = arith.constant 0 : index
    %c0_12 = arith.constant 0 : index
    %c0_13 = arith.constant 0 : index
    %8 = vector.load %arg5[%c0_11, %c0_12, %c0_13] : memref<3x256x128xf32, #tpu.memory_space<vmem>>, vector<1x256x128xf32>
    %9 = vector.shape_cast %8 : vector<1x256x128xf32> to vector<256x128xf32>
    %cst = arith.constant dense<0.000000e+00> : vector<8x128xf32>
    %10 = tpu.matmul %7, %9, %cst {dimension_numbers = #tpu.dot_dimension_numbers<[1], [0], [0], [1], [0, 0, 1, 1], [], []>, precision = #tpu.contract_precision<fp32>} : vector<8x256xf32>, vector<256x128xf32>, vector<8x128xf32> -> vector<8x128xf32>
    %c1 = arith.constant 1 : index
    %c0_14 = arith.constant 0 : index
    %11 = vector.load %arg8[%c1, %c0_14] : memref<16x256xf32, #tpu.memory_space<vmem>>, vector<8x256xf32>
    %c1_15 = arith.constant 1 : index
    %c0_16 = arith.constant 0 : index
    %c0_17 = arith.constant 0 : index
    %12 = vector.load %arg5[%c1_15, %c0_16, %c0_17] : memref<3x256x128xf32, #tpu.memory_space<vmem>>, vector<1x256x128xf32>
    %13 = vector.shape_cast %12 : vector<1x256x128xf32> to vector<256x128xf32>
    %cst_18 = arith.constant dense<0.000000e+00> : vector<8x128xf32>
    %14 = tpu.matmul %11, %13, %cst_18 {dimension_numbers = #tpu.dot_dimension_numbers<[1], [0], [0], [1], [0, 0, 1, 1], [], []>, precision = #tpu.contract_precision<fp32>} : vector<8x256xf32>, vector<256x128xf32>, vector<8x128xf32> -> vector<8x128xf32>
    %15 = arith.addf %10, %14 : vector<8x128xf32>
    %c2 = arith.constant 2 : index
    %c0_19 = arith.constant 0 : index
    %16 = vector.load %arg8[%c2, %c0_19] : memref<16x256xf32, #tpu.memory_space<vmem>>, vector<8x256xf32>
    %c2_20 = arith.constant 2 : index
    %c0_21 = arith.constant 0 : index
    %c0_22 = arith.constant 0 : index
    %17 = vector.load %arg5[%c2_20, %c0_21, %c0_22] : memref<3x256x128xf32, #tpu.memory_space<vmem>>, vector<1x256x128xf32>
    %18 = vector.shape_cast %17 : vector<1x256x128xf32> to vector<256x128xf32>
    %cst_23 = arith.constant dense<0.000000e+00> : vector<8x128xf32>
    %19 = tpu.matmul %16, %18, %cst_23 {dimension_numbers = #tpu.dot_dimension_numbers<[1], [0], [0], [1], [0, 0, 1, 1], [], []>, precision = #tpu.contract_precision<fp32>} : vector<8x256xf32>, vector<256x128xf32>, vector<8x128xf32> -> vector<8x128xf32>
    %20 = arith.addf %15, %19 : vector<8x128xf32>
    %c0_24 = arith.constant 0 : index
    %c0_25 = arith.constant 0 : index
    %21 = vector.load %arg6[%c0_24, %c0_25] : memref<1x128xf32, #tpu.memory_space<vmem>>, vector<1x128xf32>
    %22 = vector.broadcast %21 : vector<1x128xf32> to vector<8x128xf32>
    %23 = arith.addf %20, %22 : vector<8x128xf32>
    %c0_26 = arith.constant 0 : index
    %c0_27 = arith.constant 0 : index
    %c0_28 = arith.constant 0 : index
    %24 = vector.load %arg7[%c0_26, %c0_27, %c0_28] : memref<1x8x128xf32, #tpu.memory_space<vmem>>, vector<1x8x128xf32>
    %25 = vector.shape_cast %24 : vector<1x8x128xf32> to vector<8x128xf32>
    %26 = vector.shape_cast %23 : vector<8x128xf32> to vector<1x8x128xf32>
    tpu.vector_store %arg7[%c0_26, %c0_27, %c0_28], %26 {strides = array<i32>} : memref<1x8x128xf32, #tpu.memory_space<vmem>>, vector<1x8x128xf32>,
    return
  }
  func.func @transform_0(%arg0: i32, %arg1: i32, %arg2: i32) -> (i32, i32, i32) {
    %c0_i32 = arith.constant 0 : i32
    %c0_i32_0 = arith.constant 0 : i32
    return %arg0, %arg1, %c0_i32 : i32, i32, i32
  }
  func.func @transform_1(%arg0: i32, %arg1: i32, %arg2: i32) -> (i32, i32, i32) {
    %c1_i32 = arith.constant 1 : i32
    %0 = arith.addi %arg1, %c1_i32 : i32
    %c1_i32_0 = arith.constant 1 : i32
    %1 = arith.muli %0, %c1_i32_0 : i32
    %c0_i32 = arith.constant 0 : i32
    %c0_i32_1 = arith.constant 0 : i32
    return %arg0, %1, %c0_i32 : i32, i32, i32
  }
  func.func @transform_2(%arg0: i32, %arg1: i32, %arg2: i32) -> (i32, i32, i32) {
    %c0_i32 = arith.constant 0 : i32
    %c0_i32_0 = arith.constant 0 : i32
    %c0_i32_1 = arith.constant 0 : i32
    return %c0_i32, %c0_i32_0, %arg2 : i32, i32, i32
  }
  func.func @transform_3(%arg0: i32, %arg1: i32, %arg2: i32) -> (i32, i32) {
    %c0_i32 = arith.constant 0 : i32
    %c0_i32_0 = arith.constant 0 : i32
    return %c0_i32, %arg2 : i32, i32
  }
  func.func @transform_4(%arg0: i32, %arg1: i32, %arg2: i32) -> (i32, i32, i32) {
    %c0_i32 = arith.constant 0 : i32
    return %arg0, %arg1, %arg2 : i32, i32, i32
  }
}

</mosaic_0001>

<llo_original>
// kernel: tpu_custom_call.1
$region0: #{tpu_custom_call.1}
  #allocation0 [shape = 'u32[]', space=smem, size = 0x4, offset = 0x4, fixed_abs, tag = 'smem constant byte address 0x4 - core index']
  #allocation1 [shape = 'u32[144,128]{1,0:T(1,128)}', space=vmem, size = 0x12000, scoped, tag = 'internal scratch']
  #allocation2 [shape = 'f32[16,256]{1,0:T(8,128)}', space=vmem, size = 0x4000, scoped, tag = 'scratch operand']
  %s0 = inlined_call_operand.hbm [shape: f32[2,16,256], index: 0, kind: input, shape index: {}]
  %s1 = inlined_call_operand.hbm [shape: f32[2,16,256], index: 1, kind: input, shape index: {}]
  %s2 = inlined_call_operand.hbm [shape: f32[3,256,128], index: 2, kind: input, shape index: {}]
  %s3 = inlined_call_operand.vmem [shape: f32[1,128], index: 3, kind: input, shape index: {}]
  %s4 = inlined_call_operand.hbm [shape: f32[2,8,128], index: 4, kind: output, shape index: {}]
  %s5 = sld [smem:[#allocation0]]
  $region61: #{tpu_custom_call.1} parent=0
    _
  %s7 = ssub.s32 1, %s5
  %s8 = scalar_select 0, %s7, %s5
  $region1: #{tpu_custom_call.1} parent=0
    #allocation3 [shape = 'u8[16384]{0}', space=vmem, size = 0x4000, scoped, tag = 'input window, operand 0']
    #allocation4 [shape = 's32[2]{0}', space=sflag, size = 0x8, scoped, tag = 'scoped memory for tpu_custom_call.1']
    #allocation5 [shape = 's32[2]{0}', space=sflag, size = 0x8, scoped, tag = 'scoped memory for tpu_custom_call.1']
    #allocation6 [shape = 'u8[16384]{0}', space=vmem, size = 0x4000, scoped, tag = 'input window, operand 1']
    #allocation7 [shape = 's32[2]{0}', space=sflag, size = 0x8, scoped, tag = 'scoped memory for tpu_custom_call.1']
    #allocation8 [shape = 'u8[393216]{0}', space=vmem, size = 0x60000, scoped, tag = 'input window, operand 2, single buffered']
    #allocation9 [shape = 'u8[8192]{0}', space=vmem, size = 0x2000, scoped, tag = 'output window, operand 0']
    %9 = vsyncpa [#allocation4], 0
    %s10 = scalar_lea.sflag [#allocation4], 1
    %11 = vsyncpa %s10, 0
    %12 = vsyncpa [#allocation7], 0
    %s13 = scalar_lea.sflag [#allocation7], 1
    %14 = vsyncpa %s13, 0
    %15 = vsyncpa [#allocation5], 0
    %s16 = scalar_lea.sflag [#allocation5], 1
    %17 = vsyncpa %s16, 0
    loop: start=0, step=1, limit=4
    $region2: #{tpu_custom_call.1} parent=1 // loop_pre_header
      _
    $region3: #{tpu_custom_call.1} parent=1 // loop_header
      %s19 = sphi 0, %s23
      %p20 = scmp.ge.s32.totalorder %s19, 4
      %s26 = sphi 0, %s45
      %s27 = sphi 0, %s41
      %s28 = sphi 0, %s37
      %s29 = sphi 0, %s26
      %s30 = sphi 0, %s27
      %s31 = sphi 0, %s28
      %s32 = sphi 0, %s29
      %s33 = sphi 0, %s30
      %s34 = sphi 0, %s31
      %s50 = sphi 0, %s52
      %s53 = sphi 0, %s50
      %s54 = sphi 0, %s53
      %s70 = sphi 0, %s54
      %s80 = sphi 0, %s82
      %s83 = sphi 0, %s80
      %s84 = sphi 0, %s83
      %s100 = sphi 0, %s84
      %s106 = sphi 0, %s108
      %s109 = sphi 0, %s106
      %s110 = sphi 0, %s109
      %s126 = sphi 0, %s110
      %s132 = sphi 0, %s134
      %s135 = sphi 0, %s132
      %s136 = sphi 0, %s135
      %s152 = sphi 0, %s136
      %s162 = sphi 0, %s164
      %s165 = sphi 0, %s162
      %s166 = sphi 0, %s165
      %s182 = sphi 0, %s166
    $region4: #{tpu_custom_call.1} parent=1 // loop_header_branch
      %22 = sbr.rel (%p20) target = $region8
    $region5: #{tpu_custom_call.1} parent=1 // loop_body
      %s24 = ssub.s32 %s19, 1
      %s25 = ssub.s32 %s19, 2
      %s35 = sadd.s32 1, %s28
      %p36 = scmp.ge.s32.totalorder %s35, 1
      %s37 = scalar_select %p36, 0, %s35
      %s38 = sadd.s32 1, %s27
      %s39 = scalar_select %p36, %s38, %s27
      %p40 = scmp.ge.s32.totalorder %s39, 1
      %s41 = scalar_select %p40, 0, %s39
      %s42 = sadd.s32 1, %s26
      %s43 = scalar_select %p40, %s42, %s26
      %p44 = scmp.ge.s32.totalorder %s43, 2
      %s45 = scalar_select %p44, 0, %s43
      %s46 = ssub.s32 %s26, %s45
      %s47 = ssub.s32 %s27, %s41
      %s48 = sor.u32 %s46, %s47
      %p49 = scmp.eq.s32.totalorder %s48, 0
      %s51 = sadd.s32 %s50, 1
      %s52 = scalar_select %p49, %s50, %s51
      %p55 = pneg %p49
      %p56 = scmp.eq.s32.totalorder %s19, 1
      %p57 = por %p55, %p56
      %p58 = scmp.ne.s32.totalorder %s50, %s53
      %p59 = scmp.eq.s32.totalorder %s19, 0
      %p60 = por %p58, %p59
      %p61 = scmp.ne.s32.totalorder %s50, %s53
      %p62 = scmp.eq.s32.totalorder %s24, 1
      %p63 = por %p61, %p62
      %p64 = scmp.ne.s32.totalorder %s53, %s54
      %p65 = scmp.eq.s32.totalorder %s24, 0
      %p66 = por %p64, %p65
      %p67 = scmp.ne.s32.totalorder %s53, %s54
      %p68 = scmp.eq.s32.totalorder %s25, 1
      %p69 = por %p67, %p68
      %p71 = scmp.ne.s32.totalorder %s54, %s70
      %p72 = scmp.eq.s32.totalorder %s25, 0
      %p73 = por %p71, %p72
      %s74 = sadd.s32 %s27, 1
      %s75 = sadd.s32 %s41, 1
      %s76 = ssub.s32 %s26, %s45
      %s77 = ssub.s32 %s74, %s75
      %s78 = sor.u32 %s76, %s77
      %p79 = scmp.eq.s32.totalorder %s78, 0
      %s81 = sadd.s32 %s80, 1
      %s82 = scalar_select %p79, %s80, %s81
      %p85 = pneg %p79
      %p86 = scmp.eq.s32.totalorder %s19, 1
      %p87 = por %p85, %p86
      %p88 = scmp.ne.s32.totalorder %s80, %s83
      %p89 = scmp.eq.s32.totalorder %s19, 0
      %p90 = por %p88, %p89
      %p91 = scmp.ne.s32.totalorder %s80, %s83
      %p92 = scmp.eq.s32.totalorder %s24, 1
      %p93 = por %p91, %p92
      %p94 = scmp.ne.s32.totalorder %s83, %s84
      %p95 = scmp.eq.s32.totalorder %s24, 0
      %p96 = por %p94, %p95
      %p97 = scmp.ne.s32.totalorder %s83, %s84
      %p98 = scmp.eq.s32.totalorder %s25, 1
      %p99 = por %p97, %p98
      %p101 = scmp.ne.s32.totalorder %s84, %s100
      %p102 = scmp.eq.s32.totalorder %s25, 0
      %p103 = por %p101, %p102
      %s104 = ssub.s32 %s28, %s37
      %p105 = scmp.eq.s32.totalorder %s104, 0
      %s107 = sadd.s32 %s106, 1
      %s108 = scalar_select %p105, %s106, %s107
      %p111 = pneg %p105
      %p112 = scmp.eq.s32.totalorder %s19, 1
      %p113 = por %p111, %p112
      %p114 = scmp.ne.s32.totalorder %s106, %s109
      %p115 = scmp.eq.s32.totalorder %s19, 0
      %p116 = por %p114, %p115
      %p117 = scmp.ne.s32.totalorder %s106, %s109
      %p118 = scmp.eq.s32.totalorder %s24, 1
      %p119 = por %p117, %p118
      %p120 = scmp.ne.s32.totalorder %s109, %s110
      %p121 = scmp.eq.s32.totalorder %s24, 0
      %p122 = por %p120, %p121
      %p123 = scmp.ne.s32.totalorder %s109, %s110
      %p124 = scmp.eq.s32.totalorder %s25, 1
      %p125 = por %p123, %p124
      %p127 = scmp.ne.s32.totalorder %s110, %s126
      %p128 = scmp.eq.s32.totalorder %s25, 0
      %p129 = por %p127, %p128
      %s130 = ssub.s32 %s28, %s37
      %p131 = scmp.eq.s32.totalorder %s130, 0
      %s133 = sadd.s32 %s132, 1
      %s134 = scalar_select %p131, %s132, %s133
      %p137 = pneg %p131
      %p138 = scmp.eq.s32.totalorder %s19, 1
      %p139 = por %p137, %p138
      %p140 = scmp.ne.s32.totalorder %s132, %s135
      %p141 = scmp.eq.s32.totalorder %s19, 0
      %p142 = por %p140, %p141
      %p143 = scmp.ne.s32.totalorder %s132, %s135
      %p144 = scmp.eq.s32.totalorder %s24, 1
      %p145 = por %p143, %p144
      %p146 = scmp.ne.s32.totalorder %s135, %s136
      %p147 = scmp.eq.s32.totalorder %s24, 0
      %p148 = por %p146, %p147
      %p149 = scmp.ne.s32.totalorder %s135, %s136
      %p150 = scmp.eq.s32.totalorder %s25, 1
      %p151 = por %p149, %p150
      %p153 = scmp.ne.s32.totalorder %s136, %s152
      %p154 = scmp.eq.s32.totalorder %s25, 0
      %p155 = por %p153, %p154
      %s156 = ssub.s32 %s26, %s45
      %s157 = ssub.s32 %s27, %s41
      %s158 = sor.u32 %s156, %s157
      %s159 = ssub.s32 %s28, %s37
      %s160 = sor.u32 %s158, %s159
      %p161 = scmp.eq.s32.totalorder %s160, 0
      %s163 = sadd.s32 %s162, 1
      %s164 = scalar_select %p161, %s162, %s163
      %p167 = pneg %p161
      %p168 = scmp.eq.s32.totalorder %s19, 1
      %p169 = por %p167, %p168
      %p170 = scmp.ne.s32.totalorder %s162, %s165
      %p171 = scmp.eq.s32.totalorder %s19, 0
      %p172 = por %p170, %p171
      %p173 = scmp.ne.s32.totalorder %s162, %s165
      %p174 = scmp.eq.s32.totalorder %s24, 1
      %p175 = por %p173, %p174
      %p176 = scmp.ne.s32.totalorder %s165, %s166
      %p177 = scmp.eq.s32.totalorder %s24, 0
      %p178 = por %p176, %p177
      %p179 = scmp.ne.s32.totalorder %s165, %s166
      %p180 = scmp.eq.s32.totalorder %s25, 1
      %p181 = por %p179, %p180
      %p183 = scmp.ne.s32.totalorder %s166, %s182
      %p184 = scmp.eq.s32.totalorder %s25, 0
      %p185 = por %p183, %p184
      %p186 = scmp.le.s32.totalorder 1, %s19
      %p187 = scmp.lt.s32.totalorder %s19, 3
      %p188 = pnand %p186, %p187
      %p189 = pneg %p188
      // Predicated region
      $region9: #{tpu_custom_call.1} parent=5 // pred_check
        _
      $region10: #{tpu_custom_call.1} parent=5 // pred_check_branch
        %191 = sbr.rel (%p188) target = $region12
      $region11: #{tpu_custom_call.1} parent=5 // pred_region
        %s192 = ssub.s32 %s19, 1
        // Predicated region
        $region13: #{tpu_custom_call.1} parent=11 // pred_check
          %p193 = pneg %p122
        $region14: #{tpu_custom_call.1} parent=11 // pred_check_branch
          %195 = sbr.rel (%p193) target = $region16
        $region15: #{tpu_custom_call.1} parent=11 // pred_region
          %s197 = ssub.s32 12288, 12288
          %198 = vsyncadd [#allocation7], %s197
          %s199 = smul.addr %s31, 128
          %s200 = scalar_lea.hbm %s2, %s199
          %s201 = sshll.u32 [#allocation8], 4
          %s202 = int_to_ptr.vmem [resolvable:$true] %s201
          %207 = dma.hbm_to_vmem [thread:$0]  %s200, 12288, %s202, [#allocation7], 128, 128, 8
        $region16: #{tpu_custom_call.1} parent=11 // pred_fallthru
          _
        // Predicated region
        $region17: #{tpu_custom_call.1} parent=11 // pred_check
          %p208 = pneg %p148
        $region18: #{tpu_custom_call.1} parent=11 // pred_check_branch
          %210 = sbr.rel (%p208) target = $region20
        $region19: #{tpu_custom_call.1} parent=11 // pred_region
          %p211 = scmp.lt.s32.totalorder %s31, 0
          %s212 = scalar_select %p211, %s31, 0
          %s213 = scalar_lea.vmem %s3, %s212
        $region20: #{tpu_custom_call.1} parent=11 // pred_fallthru
          _
      $region12: #{tpu_custom_call.1} parent=5 // pred_fallthru
        _
      %p214 = scmp.lt.s32.totalorder %s19, 2
      // Predicated region
      $region21: #{tpu_custom_call.1} parent=5 // pred_check
        %p215 = pneg %p214
      $region22: #{tpu_custom_call.1} parent=5 // pred_check_branch
        %217 = sbr.rel (%p215) target = $region24
      $region23: #{tpu_custom_call.1} parent=5 // pred_region
        // Predicated region
        $region25: #{tpu_custom_call.1} parent=23 // pred_check
          %p218 = pneg %p60
        $region26: #{tpu_custom_call.1} parent=23 // pred_check_branch
          %220 = sbr.rel (%p218) target = $region28
        $region27: #{tpu_custom_call.1} parent=23 // pred_region
          %s221 = sand.u32 %s50, 1
          %s222 = scalar_lea.sflag [#allocation4], %s221
          %s223 = sand.u32 %s50, 1
          %s224 = smul.addr %s223, 16
          %s225 = scalar_lea.vmem [#allocation3], %s224
          %s227 = ssub.s32 256, 256
          %228 = vsyncadd %s222, %s227
          %s229 = smul.addr %s27, 2
          %s230 = smul.addr %s26, 4
          %s231 = sadd.s32 %s229, %s230
          %s232 = smul.addr %s231, 128
          %s233 = scalar_lea.hbm %s0, %s232
          %s235 = sshll.u32 %s225, 4
          %s236 = int_to_ptr.vmem [resolvable:$true] %s235
          %238 = dma.hbm_to_vmem [thread:$0]  %s233, 256, %s236, %s222
        $region28: #{tpu_custom_call.1} parent=23 // pred_fallthru
          _
        // Predicated region
        $region29: #{tpu_custom_call.1} parent=23 // pred_check
          %p239 = pneg %p90
        $region30: #{tpu_custom_call.1} parent=23 // pred_check_branch
          %241 = sbr.rel (%p239) target = $region32
        $region31: #{tpu_custom_call.1} parent=23 // pred_region
          %s242 = sand.u32 %s19, 1
          %s243 = scalar_lea.sflag [#allocation7], %s242
          %s244 = sand.u32 %s80, 1
          %s245 = smul.addr %s244, 16
          %s246 = scalar_lea.vmem [#allocation6], %s245
          %s247 = sadd.s32 %s27, 1
          %s249 = ssub.s32 256, 256
          %250 = vsyncadd %s243, %s249
          %s251 = smul.addr %s247, 2
          %s252 = smul.addr %s26, 4
          %s253 = sadd.s32 %s251, %s252
          %s254 = smul.addr %s253, 128
          %s255 = scalar_lea.hbm %s1, %s254
          %s257 = sshll.u32 %s246, 4
          %s258 = int_to_ptr.vmem [resolvable:$true] %s257
          %260 = dma.hbm_to_vmem [thread:$0]  %s255, 256, %s258, %s243
        $region32: #{tpu_custom_call.1} parent=23 // pred_fallthru
          _
      $region24: #{tpu_custom_call.1} parent=5 // pred_fallthru
        _
      %p261 = scmp.le.s32.totalorder 1, %s19
      %p262 = scmp.lt.s32.totalorder %s19, 3
      %p263 = pnand %p261, %p262
      %p264 = pneg %p263
      // Predicated region
      $region33: #{tpu_custom_call.1} parent=5 // pred_check
        _
      $region34: #{tpu_custom_call.1} parent=5 // pred_check_branch
        %266 = sbr.rel (%p263) target = $region36
      $region35: #{tpu_custom_call.1} parent=5 // pred_region
        %s267 = ssub.s32 %s19, 1
        %s268 = sand.u32 %s53, 1
        %s269 = scalar_lea.sflag [#allocation4], %s268
        %s270 = sand.u32 %s53, 1
        %s271 = smul.addr %s270, 16
        %s272 = scalar_lea.vmem [#allocation3], %s271
        // Predicated region
        $region37: #{tpu_custom_call.1} parent=35 // pred_check
          %p273 = pneg %p66
        $region38: #{tpu_custom_call.1} parent=35 // pred_check_branch
          %275 = sbr.rel (%p273) target = $region40
        $region39: #{tpu_custom_call.1} parent=35 // pred_region
          %276 = dma.done %s269, 256
        $region40: #{tpu_custom_call.1} parent=35 // pred_fallthru
          _
        %s277 = sand.u32 %s24, 1
        %s278 = scalar_lea.sflag [#allocation7], %s277
        %s279 = sand.u32 %s83, 1
        %s280 = smul.addr %s279, 16
        %s281 = scalar_lea.vmem [#allocation6], %s280
        // Predicated region
        $region41: #{tpu_custom_call.1} parent=35 // pred_check
          %p282 = pneg %p96
        $region42: #{tpu_custom_call.1} parent=35 // pred_check_branch
          %284 = sbr.rel (%p282) target = $region44
        $region43: #{tpu_custom_call.1} parent=35 // pred_region
          %285 = dma.done %s278, 256
        $region44: #{tpu_custom_call.1} parent=35 // pred_fallthru
          _
        // Predicated region
        $region45: #{tpu_custom_call.1} parent=35 // pred_check
          %p286 = pneg %p122
        $region46: #{tpu_custom_call.1} parent=35 // pred_check_branch
          %288 = sbr.rel (%p286) target = $region48
        $region47: #{tpu_custom_call.1} parent=35 // pred_region
          %289 = dma.done [#allocation7], 12288
        $region48: #{tpu_custom_call.1} parent=35 // pred_fallthru
          _
        %s290 = sand.u32 %s53, 1
        %s291 = scalar_lea.sflag [#allocation4], %s290
        %s292 = sand.u32 %s53, 1
        %s293 = smul.addr %s292, 16
        %s294 = scalar_lea.vmem [#allocation3], %s293
        %p295 = pneg %p66
        %p296 = pneg %p63
        %s297 = sand.u32 %s24, 1
        %s298 = scalar_lea.sflag [#allocation7], %s297
        %s299 = sand.u32 %s83, 1
        %s300 = smul.addr %s299, 16
        %s301 = scalar_lea.vmem [#allocation6], %s300
        %p302 = pneg %p96
        %p303 = pneg %p93
        %p304 = pneg %p122
        %p305 = pneg %p119
        %p306 = scmp.lt.s32.totalorder %s31, 0
        %s307 = scalar_select %p306, %s31, 0
        %s308 = scalar_lea.vmem %s3, %s307
        %p309 = pneg %p148
        %p310 = pneg %p145
        %p311 = pneg %p178
        %p312 = pneg %p175
        %s313 = sand.u32 %s165, 1
        %s314 = scalar_lea.sflag [#allocation5], %s313
        %s315 = sand.u32 %s165, 1
        %s316 = smul.addr %s315, 8
        %s317 = scalar_lea.vmem [#allocation9], %s316
        %s318 = sadd.s32 %s30, 1
        %p319 = scmp.lt.s32.totalorder %s31, 0
        %s320 = scalar_select %p319, %s31, 0
        %s321 = scalar_lea.vmem %s3, %s320
        %v322 = vld [vmem:[%s272] sm:$0xff]
        %v323 = vld [vmem:[%s272 + $0x8] sm:$0xff]
        %324 = vst [vmem:[#allocation2] sm:$0xff] %v322
        %325 = vst [vmem:[#allocation2 + $0x8] sm:$0xff] %v323
        %v326 = vld [vmem:[%s281] sm:$0xff]
        %v327 = vld [vmem:[%s281 + $0x8] sm:$0xff]
        %328 = vst [vmem:[#allocation2 + $0x10] sm:$0xff] %v326
        %329 = vst [vmem:[#allocation2 + $0x18] sm:$0xff] %v327
        %v330 = vld [vmem:[%s272] sm:$0xff]
        %v331 = vld [vmem:[%s272 + $0x8] sm:$0xff]
        %v332 = vld [vmem:[#allocation8] sm:$0xff]
        %v333 = vld [vmem:[#allocation8 + $0x8] sm:$0xff]
        %v334 = vld [vmem:[#allocation8 + $0x10] sm:$0xff]
        %v335 = vld [vmem:[#allocation8 + $0x18] sm:$0xff]
        %v336 = vld [vmem:[#allocation8 + $0x20] sm:$0xff]
        %v337 = vld [vmem:[#allocation8 + $0x28] sm:$0xff]
        %v338 = vld [vmem:[#allocation8 + $0x30] sm:$0xff]
        %v339 = vld [vmem:[#allocation8 + $0x38] sm:$0xff]
        %v340 = vld [vmem:[#allocation8 + $0x40] sm:$0xff]
        %v341 = vld [vmem:[#allocation8 + $0x48] sm:$0xff]
        %v342 = vld [vmem:[#allocation8 + $0x50] sm:$0xff]
        %v343 = vld [vmem:[#allocation8 + $0x58] sm:$0xff]
        %v344 = vld [vmem:[#allocation8 + $0x60] sm:$0xff]
        %v345 = vld [vmem:[#allocation8 + $0x68] sm:$0xff]
        %v346 = vld [vmem:[#allocation8 + $0x70] sm:$0xff]
        %v347 = vld [vmem:[#allocation8 + $0x78] sm:$0xff]
        %v348 = vld [vmem:[#allocation8 + $0x80] sm:$0xff]
        %v349 = vld [vmem:[#allocation8 + $0x88] sm:$0xff]
        %v350 = vld [vmem:[#allocation8 + $0x90] sm:$0xff]
        %v351 = vld [vmem:[#allocation8 + $0x98] sm:$0xff]
        %v352 = vld [vmem:[#allocation8 + $0xa0] sm:$0xff]
        %v353 = vld [vmem:[#allocation8 + $0xa8] sm:$0xff]
        %v354 = vld [vmem:[#allocation8 + $0xb0] sm:$0xff]
        %v355 = vld [vmem:[#allocation8 + $0xb8] sm:$0xff]
        %v356 = vld [vmem:[#allocation8 + $0xc0] sm:$0xff]
        %v357 = vld [vmem:[#allocation8 + $0xc8] sm:$0xff]
        %v358 = vld [vmem:[#allocation8 + $0xd0] sm:$0xff]
        %v359 = vld [vmem:[#allocation8 + $0xd8] sm:$0xff]
        %v360 = vld [vmem:[#allocation8 + $0xe0] sm:$0xff]
        %v361 = vld [vmem:[#allocation8 + $0xe8] sm:$0xff]
        %v362 = vld [vmem:[#allocation8 + $0xf0] sm:$0xff]
        %v363 = vld [vmem:[#allocation8 + $0xf8] sm:$0xff]
        %v364 = vld [vmem:[#allocation2] sm:$0xfe]
        %v365 = vld [vmem:[#allocation2 + $0x8] sm:$0xfe]
        %v366 = vld [vmem:[#allocation2 + $0x10] sm:$0x1]
        %v367 = vld [vmem:[#allocation2 + $0x18] sm:$0x1]
        %s368 = scalar_lea.vmem [#allocation8], 256
        %v369 = vld [vmem:[%s368] sm:$0xff]
        %v370 = vld [vmem:[%s368 + $0x8] sm:$0xff]
        %v371 = vld [vmem:[%s368 + $0x10] sm:$0xff]
        %v372 = vld [vmem:[%s368 + $0x18] sm:$0xff]
        %v373 = vld [vmem:[%s368 + $0x20] sm:$0xff]
        %v374 = vld [vmem:[%s368 + $0x28] sm:$0xff]
        %v375 = vld [vmem:[%s368 + $0x30] sm:$0xff]
        %v376 = vld [vmem:[%s368 + $0x38] sm:$0xff]
        %v377 = vld [vmem:[%s368 + $0x40] sm:$0xff]
        %v378 = vld [vmem:[%s368 + $0x48] sm:$0xff]
        %v379 = vld [vmem:[%s368 + $0x50] sm:$0xff]
        %v380 = vld [vmem:[%s368 + $0x58] sm:$0xff]
        %v381 = vld [vmem:[%s368 + $0x60] sm:$0xff]
        %v382 = vld [vmem:[%s368 + $0x68] sm:$0xff]
        %v383 = vld [vmem:[%s368 + $0x70] sm:$0xff]
        %v384 = vld [vmem:[%s368 + $0x78] sm:$0xff]
        %v385 = vld [vmem:[%s368 + $0x80] sm:$0xff]
        %v386 = vld [vmem:[%s368 + $0x88] sm:$0xff]
        %v387 = vld [vmem:[%s368 + $0x90] sm:$0xff]
        %v388 = vld [vmem:[%s368 + $0x98] sm:$0xff]
        %v389 = vld [vmem:[%s368 + $0xa0] sm:$0xff]
        %v390 = vld [vmem:[%s368 + $0xa8] sm:$0xff]
        %v391 = vld [vmem:[%s368 + $0xb0] sm:$0xff]
        %v392 = vld [vmem:[%s368 + $0xb8] sm:$0xff]
        %v393 = vld [vmem:[%s368 + $0xc0] sm:$0xff]
        %v394 = vld [vmem:[%s368 + $0xc8] sm:$0xff]
        %v395 = vld [vmem:[%s368 + $0xd0] sm:$0xff]
        %v396 = vld [vmem:[%s368 + $0xd8] sm:$0xff]
        %v397 = vld [vmem:[%s368 + $0xe0] sm:$0xff]
        %v398 = vld [vmem:[%s368 + $0xe8] sm:$0xff]
        %v399 = vld [vmem:[%s368 + $0xf0] sm:$0xff]
        %v400 = vld [vmem:[%s368 + $0xf8] sm:$0xff]
        %vm405 = vcmask 1046528
        %v406 = vrot.slane %v364, 1
        %v407 = vrot.slane %v366, 1
        %v408 = vsel %vm405, %v406, %v407
        %v409 = vrot.slane %v365, 1
        %v410 = vrot.slane %v367, 1
        %v411 = vsel %vm405, %v409, %v410
        %414 = vmatprep.subr.mxu0 0.0
        %v415 = vand.u32 %v369, 4294901760
        %416 = vmatpush1.msra.mxu0 %v415
        %417 = vmatprep.subr.mxu0 0.0
        %v418 = vand.u32 %v370, 4294901760
        %419 = vmatpush1.msra.mxu0 %v418
        %420 = vmatprep.subr.mxu0 0.0
        %v421 = vand.u32 %v371, 4294901760
        %422 = vmatpush1.msra.mxu0 %v421
        %423 = vmatprep.subr.mxu0 0.0
        %v424 = vand.u32 %v372, 4294901760
        %425 = vmatpush1.msra.mxu0 %v424
        %426 = vmatprep.subr.mxu0 0.0
        %v427 = vand.u32 %v373, 4294901760
        %428 = vmatpush1.msra.mxu0 %v427
        %429 = vmatprep.subr.mxu0 0.0
        %v430 = vand.u32 %v374, 4294901760
        %431 = vmatpush1.msra.mxu0 %v430
        %432 = vmatprep.subr.mxu0 0.0
        %v433 = vand.u32 %v375, 4294901760
        %434 = vmatpush1.msra.mxu0 %v433
        %435 = vmatprep.subr.mxu0 0.0
        %v436 = vand.u32 %v376, 4294901760
        %437 = vmatpush1.msra.mxu0 %v436
        %438 = vmatprep.subr.mxu0 0.0
        %v439 = vand.u32 %v377, 4294901760
        %440 = vmatpush1.msra.mxu0 %v439
        %441 = vmatprep.subr.mxu0 0.0
        %v442 = vand.u32 %v378, 4294901760
        %443 = vmatpush1.msra.mxu0 %v442
        %444 = vmatprep.subr.mxu0 0.0
        %v445 = vand.u32 %v379, 4294901760
        %446 = vmatpush1.msra.mxu0 %v445
        %447 = vmatprep.subr.mxu0 0.0
        %v448 = vand.u32 %v380, 4294901760
        %449 = vmatpush1.msra.mxu0 %v448
        %450 = vmatprep.subr.mxu0 0.0
        %v451 = vand.u32 %v381, 4294901760
        %452 = vmatpush1.msra.mxu0 %v451
        %453 = vmatprep.subr.mxu0 0.0
        %v454 = vand.u32 %v382, 4294901760
        %455 = vmatpush1.msra.mxu0 %v454
        %456 = vmatprep.subr.mxu0 0.0
        %v457 = vand.u32 %v383, 4294901760
        %458 = vmatpush1.msra.mxu0 %v457
        %459 = vmatprep.subr.mxu0 0.0
        %v460 = vand.u32 %v384, 4294901760
        %461 = vmatpush1.msra.mxu0 %v460
        %462 = vmatprep.subr.mxu0 0.0
        %v463 = vand.u32 %v385, 4294901760
        %464 = vmatpush1.msra.mxu0 %v463
        %465 = vmatprep.subr.mxu0 0.0
        %v466 = vand.u32 %v386, 4294901760
        %467 = vmatpush1.msra.mxu0 %v466
        %468 = vmatprep.subr.mxu0 0.0
        %v469 = vand.u32 %v387, 4294901760
        %470 = vmatpush1.msra.mxu0 %v469
        %471 = vmatprep.subr.mxu0 0.0
        %v472 = vand.u32 %v388, 4294901760
        %473 = vmatpush1.msra.mxu0 %v472
        %474 = vmatprep.subr.mxu0 0.0
        %v475 = vand.u32 %v389, 4294901760
        %476 = vmatpush1.msra.mxu0 %v475
        %477 = vmatprep.subr.mxu0 0.0
        %v478 = vand.u32 %v390, 4294901760
        %479 = vmatpush1.msra.mxu0 %v478
        %480 = vmatprep.subr.mxu0 0.0
        %v481 = vand.u32 %v391, 4294901760
        %482 = vmatpush1.msra.mxu0 %v481
        %483 = vmatprep.subr.mxu0 0.0
        %v484 = vand.u32 %v392, 4294901760
        %485 = vmatpush1.msra.mxu0 %v484
        %486 = vmatprep.subr.mxu0 0.0
        %v487 = vand.u32 %v393, 4294901760
        %488 = vmatpush1.msra.mxu0 %v487
        %489 = vmatprep.subr.mxu0 0.0
        %v490 = vand.u32 %v394, 4294901760
        %491 = vmatpush1.msra.mxu0 %v490
        %492 = vmatprep.subr.mxu0 0.0
        %v493 = vand.u32 %v395, 4294901760
        %494 = vmatpush1.msra.mxu0 %v493
        %495 = vmatprep.subr.mxu0 0.0
        %v496 = vand.u32 %v396, 4294901760
        %497 = vmatpush1.msra.mxu0 %v496
        %498 = vmatprep.subr.mxu0 0.0
        %v499 = vand.u32 %v397, 4294901760
        %500 = vmatpush1.msra.mxu0 %v499
        %501 = vmatprep.subr.mxu0 0.0
        %v502 = vand.u32 %v398, 4294901760
        %503 = vmatpush1.msra.mxu0 %v502
        %504 = vmatprep.subr.mxu0 0.0
        %v505 = vand.u32 %v399, 4294901760
        %506 = vmatpush1.msra.mxu0 %v505
        %507 = vmatprep.subr.mxu0 0.0
        %v508 = vand.u32 %v400, 4294901760
        %509 = vmatpush1.msra.mxu0 %v508
        %v510 = vand.u32 %v411, 4294901760
        %v511 = vsub.f32 %v411, %v510
        %v512 = vand.u32 %v511, 4294901760
        %v513 = vsub.f32 %v511, %v512
        %v514 = vand.u32 %v513, 4294901760
        %515 = vmatprep.mubr.f32.mxu0 %v514
        %v516 = vand.u32 %v408, 4294901760
        %v517 = vsub.f32 %v408, %v516
        %v518 = vand.u32 %v517, 4294901760
        %v519 = vsub.f32 %v517, %v518
        %v520 = vand.u32 %v519, 4294901760
        %521 = vmatmul.mubr.f32.gmra.mrb[0].mxu0 %v520
        %v522 = vpop.f32.mrb[0].mxu0
        %v523 = vadd.f32 0.0, %v522
        %v524 = vpop.f32.mrb[0].mxu0
        %525 = vdwg.mxu0
        %526 = vmatprep.subr.mxu0 0.0
        %v527 = vand.u32 %v369, 4294901760
        %v528 = vsub.f32 %v369, %v527
        %v529 = vand.u32 %v528, 4294901760
        %v530 = vsub.f32 %v528, %v529
        %v531 = vand.u32 %v530, 4294901760
        %532 = vmatpush1.msra.mxu0 %v531
        %533 = vmatprep.subr.mxu0 0.0
        %v534 = vand.u32 %v370, 4294901760
        %v535 = vsub.f32 %v370, %v534
        %v536 = vand.u32 %v535, 4294901760
        %v537 = vsub.f32 %v535, %v536
        %v538 = vand.u32 %v537, 4294901760
        %539 = vmatpush1.msra.mxu0 %v538
        %540 = vmatprep.subr.mxu0 0.0
        %v541 = vand.u32 %v371, 4294901760
        %v542 = vsub.f32 %v371, %v541
        %v543 = vand.u32 %v542, 4294901760
        %v544 = vsub.f32 %v542, %v543
        %v545 = vand.u32 %v544, 4294901760
        %546 = vmatpush1.msra.mxu0 %v545
        %547 = vmatprep.subr.mxu0 0.0
        %v548 = vand.u32 %v372, 4294901760
        %v549 = vsub.f32 %v372, %v548
        %v550 = vand.u32 %v549, 4294901760
        %v551 = vsub.f32 %v549, %v550
        %v552 = vand.u32 %v551, 4294901760
        %553 = vmatpush1.msra.mxu0 %v552
        %554 = vmatprep.subr.mxu0 0.0
        %v555 = vand.u32 %v373, 4294901760
        %v556 = vsub.f32 %v373, %v555
        %v557 = vand.u32 %v556, 4294901760
        %v558 = vsub.f32 %v556, %v557
        %v559 = vand.u32 %v558, 4294901760
        %560 = vmatpush1.msra.mxu0 %v559
        %561 = vmatprep.subr.mxu0 0.0
        %v562 = vand.u32 %v374, 4294901760
        %v563 = vsub.f32 %v374, %v562
        %v564 = vand.u32 %v563, 4294901760
        %v565 = vsub.f32 %v563, %v564
        %v566 = vand.u32 %v565, 4294901760
        %567 = vmatpush1.msra.mxu0 %v566
        %568 = vmatprep.subr.mxu0 0.0
        %v569 = vand.u32 %v375, 4294901760
        %v570 = vsub.f32 %v375, %v569
        %v571 = vand.u32 %v570, 4294901760
        %v572 = vsub.f32 %v570, %v571
        %v573 = vand.u32 %v572, 4294901760
        %574 = vmatpush1.msra.mxu0 %v573
        %575 = vmatprep.subr.mxu0 0.0
        %v576 = vand.u32 %v376, 4294901760
        %v577 = vsub.f32 %v376, %v576
        %v578 = vand.u32 %v577, 4294901760
        %v579 = vsub.f32 %v577, %v578
        %v580 = vand.u32 %v579, 4294901760
        %581 = vmatpush1.msra.mxu0 %v580
        %582 = vmatprep.subr.mxu0 0.0
        %v583 = vand.u32 %v377, 4294901760
        %v584 = vsub.f32 %v377, %v583
        %v585 = vand.u32 %v584, 4294901760
        %v586 = vsub.f32 %v584, %v585
        %v587 = vand.u32 %v586, 4294901760
        %588 = vmatpush1.msra.mxu0 %v587
        %589 = vmatprep.subr.mxu0 0.0
        %v590 = vand.u32 %v378, 4294901760
        %v591 = vsub.f32 %v378, %v590
        %v592 = vand.u32 %v591, 4294901760
        %v593 = vsub.f32 %v591, %v592
        %v594 = vand.u32 %v593, 4294901760
        %595 = vmatpush1.msra.mxu0 %v594
        %596 = vmatprep.subr.mxu0 0.0
        %v597 = vand.u32 %v379, 4294901760
        %v598 = vsub.f32 %v379, %v597
        %v599 = vand.u32 %v598, 4294901760
        %v600 = vsub.f32 %v598, %v599
        %v601 = vand.u32 %v600, 4294901760
        %602 = vmatpush1.msra.mxu0 %v601
        %603 = vmatprep.subr.mxu0 0.0
        %v604 = vand.u32 %v380, 4294901760
        %v605 = vsub.f32 %v380, %v604
        %v606 = vand.u32 %v605, 4294901760
        %v607 = vsub.f32 %v605, %v606
        %v608 = vand.u32 %v607, 4294901760
        %609 = vmatpush1.msra.mxu0 %v608
        %610 = vmatprep.subr.mxu0 0.0
        %v611 = vand.u32 %v381, 4294901760
        %v612 = vsub.f32 %v381, %v611
        %v613 = vand.u32 %v612, 4294901760
        %v614 = vsub.f32 %v612, %v613
        %v615 = vand.u32 %v614, 4294901760
        %616 = vmatpush1.msra.mxu0 %v615
        %617 = vmatprep.subr.mxu0 0.0
        %v618 = vand.u32 %v382, 4294901760
        %v619 = vsub.f32 %v382, %v618
        %v620 = vand.u32 %v619, 4294901760
        %v621 = vsub.f32 %v619, %v620
        %v622 = vand.u32 %v621, 4294901760
        %623 = vmatpush1.msra.mxu0 %v622
        %624 = vmatprep.subr.mxu0 0.0
        %v625 = vand.u32 %v383, 4294901760
        %v626 = vsub.f32 %v383, %v625
        %v627 = vand.u32 %v626, 4294901760
        %v628 = vsub.f32 %v626, %v627
        %v629 = vand.u32 %v628, 4294901760
        %630 = vmatpush1.msra.mxu0 %v629
        %631 = vmatprep.subr.mxu0 0.0
        %v632 = vand.u32 %v384, 4294901760
        %v633 = vsub.f32 %v384, %v632
        %v634 = vand.u32 %v633, 4294901760
        %v635 = vsub.f32 %v633, %v634
        %v636 = vand.u32 %v635, 4294901760
        %637 = vmatpush1.msra.mxu0 %v636
        %638 = vmatprep.subr.mxu0 0.0
        %v639 = vand.u32 %v385, 4294901760
        %v640 = vsub.f32 %v385, %v639
        %v641 = vand.u32 %v640, 4294901760
        %v642 = vsub.f32 %v640, %v641
        %v643 = vand.u32 %v642, 4294901760
        %644 = vmatpush1.msra.mxu0 %v643
        %645 = vmatprep.subr.mxu0 0.0
        %v646 = vand.u32 %v386, 4294901760
        %v647 = vsub.f32 %v386, %v646
        %v648 = vand.u32 %v647, 4294901760
        %v649 = vsub.f32 %v647, %v648
        %v650 = vand.u32 %v649, 4294901760
        %651 = vmatpush1.msra.mxu0 %v650
        %652 = vmatprep.subr.mxu0 0.0
        %v653 = vand.u32 %v387, 4294901760
        %v654 = vsub.f32 %v387, %v653
        %v655 = vand.u32 %v654, 4294901760
        %v656 = vsub.f32 %v654, %v655
        %v657 = vand.u32 %v656, 4294901760
        %658 = vmatpush1.msra.mxu0 %v657
        %659 = vmatprep.subr.mxu0 0.0
        %v660 = vand.u32 %v388, 4294901760
        %v661 = vsub.f32 %v388, %v660
        %v662 = vand.u32 %v661, 4294901760
        %v663 = vsub.f32 %v661, %v662
        %v664 = vand.u32 %v663, 4294901760
        %665 = vmatpush1.msra.mxu0 %v664
        %666 = vmatprep.subr.mxu0 0.0
        %v667 = vand.u32 %v389, 4294901760
        %v668 = vsub.f32 %v389, %v667
        %v669 = vand.u32 %v668, 4294901760
        %v670 = vsub.f32 %v668, %v669
        %v671 = vand.u32 %v670, 4294901760
        %672 = vmatpush1.msra.mxu0 %v671
        %673 = vmatprep.subr.mxu0 0.0
        %v674 = vand.u32 %v390, 4294901760
        %v675 = vsub.f32 %v390, %v674
        %v676 = vand.u32 %v675, 4294901760
        %v677 = vsub.f32 %v675, %v676
        %v678 = vand.u32 %v677, 4294901760
        %679 = vmatpush1.msra.mxu0 %v678
        %680 = vmatprep.subr.mxu0 0.0
        %v681 = vand.u32 %v391, 4294901760
        %v682 = vsub.f32 %v391, %v681
        %v683 = vand.u32 %v682, 4294901760
        %v684 = vsub.f32 %v682, %v683
        %v685 = vand.u32 %v684, 4294901760
        %686 = vmatpush1.msra.mxu0 %v685
        %687 = vmatprep.subr.mxu0 0.0
        %v688 = vand.u32 %v392, 4294901760
        %v689 = vsub.f32 %v392, %v688
        %v690 = vand.u32 %v689, 4294901760
        %v691 = vsub.f32 %v689, %v690
        %v692 = vand.u32 %v691, 4294901760
        %693 = vmatpush1.msra.mxu0 %v692
        %694 = vmatprep.subr.mxu0 0.0
        %v695 = vand.u32 %v393, 4294901760
        %v696 = vsub.f32 %v393, %v695
        %v697 = vand.u32 %v696, 4294901760
        %v698 = vsub.f32 %v696, %v697
        %v699 = vand.u32 %v698, 4294901760
        %700 = vmatpush1.msra.mxu0 %v699
        %701 = vmatprep.subr.mxu0 0.0
        %v702 = vand.u32 %v394, 4294901760
        %v703 = vsub.f32 %v394, %v702
        %v704 = vand.u32 %v703, 4294901760
        %v705 = vsub.f32 %v703, %v704
        %v706 = vand.u32 %v705, 4294901760
        %707 = vmatpush1.msra.mxu0 %v706
        %708 = vmatprep.subr.mxu0 0.0
        %v709 = vand.u32 %v395, 4294901760
        %v710 = vsub.f32 %v395, %v709
        %v711 = vand.u32 %v710, 4294901760
        %v712 = vsub.f32 %v710, %v711
        %v713 = vand.u32 %v712, 4294901760
        %714 = vmatpush1.msra.mxu0 %v713
        %715 = vmatprep.subr.mxu0 0.0
        %v716 = vand.u32 %v396, 4294901760
        %v717 = vsub.f32 %v396, %v716
        %v718 = vand.u32 %v717, 4294901760
        %v719 = vsub.f32 %v717, %v718
        %v720 = vand.u32 %v719, 4294901760
        %721 = vmatpush1.msra.mxu0 %v720
        %722 = vmatprep.subr.mxu0 0.0
        %v723 = vand.u32 %v397, 4294901760
        %v724 = vsub.f32 %v397, %v723
        %v725 = vand.u32 %v724, 4294901760
        %v726 = vsub.f32 %v724, %v725
        %v727 = vand.u32 %v726, 4294901760
        %728 = vmatpush1.msra.mxu0 %v727
        %729 = vmatprep.subr.mxu0 0.0
        %v730 = vand.u32 %v398, 4294901760
        %v731 = vsub.f32 %v398, %v730
        %v732 = vand.u32 %v731, 4294901760
        %v733 = vsub.f32 %v731, %v732
        %v734 = vand.u32 %v733, 4294901760
        %735 = vmatpush1.msra.mxu0 %v734
        %736 = vmatprep.subr.mxu0 0.0
        %v737 = vand.u32 %v399, 4294901760
        %v738 = vsub.f32 %v399, %v737
        %v739 = vand.u32 %v738, 4294901760
        %v740 = vsub.f32 %v738, %v739
        %v741 = vand.u32 %v740, 4294901760
        %742 = vmatpush1.msra.mxu0 %v741
        %743 = vmatprep.subr.mxu0 0.0
        %v744 = vand.u32 %v400, 4294901760
        %v745 = vsub.f32 %v400, %v744
        %v746 = vand.u32 %v745, 4294901760
        %v747 = vsub.f32 %v745, %v746
        %v748 = vand.u32 %v747, 4294901760
        %749 = vmatpush1.msra.mxu0 %v748
        %v750 = vand.u32 %v411, 4294901760
        %751 = vmatprep.mubr.f32.mxu0 %v750
        %v752 = vand.u32 %v408, 4294901760
        %753 = vmatmul.mubr.f32.gmra.mrb[0].mxu0 %v752
        %v754 = vpop.f32.mrb[0].mxu0
        %v755 = vadd.f32 %v523, %v754
        %v756 = vpop.f32.mrb[0].mxu0
        %757 = vdwg.mxu0
        %758 = vmatprep.subr.mxu0 0.0
        %v759 = vand.u32 %v369, 4294901760
        %v760 = vsub.f32 %v369, %v759
        %761 = vmatpush1.msra.mxu0 %v760
        %762 = vmatprep.subr.mxu0 0.0
        %v763 = vand.u32 %v370, 4294901760
        %v764 = vsub.f32 %v370, %v763
        %765 = vmatpush1.msra.mxu0 %v764
        %766 = vmatprep.subr.mxu0 0.0
        %v767 = vand.u32 %v371, 4294901760
        %v768 = vsub.f32 %v371, %v767
        %769 = vmatpush1.msra.mxu0 %v768
        %770 = vmatprep.subr.mxu0 0.0
        %v771 = vand.u32 %v372, 4294901760
        %v772 = vsub.f32 %v372, %v771
        %773 = vmatpush1.msra.mxu0 %v772
        %774 = vmatprep.subr.mxu0 0.0
        %v775 = vand.u32 %v373, 4294901760
        %v776 = vsub.f32 %v373, %v775
        %777 = vmatpush1.msra.mxu0 %v776
        %778 = vmatprep.subr.mxu0 0.0
        %v779 = vand.u32 %v374, 4294901760
        %v780 = vsub.f32 %v374, %v779
        %781 = vmatpush1.msra.mxu0 %v780
        %782 = vmatprep.subr.mxu0 0.0
        %v783 = vand.u32 %v375, 4294901760
        %v784 = vsub.f32 %v375, %v783
        %785 = vmatpush1.msra.mxu0 %v784
        %786 = vmatprep.subr.mxu0 0.0
        %v787 = vand.u32 %v376, 4294901760
        %v788 = vsub.f32 %v376, %v787
        %789 = vmatpush1.msra.mxu0 %v788
        %790 = vmatprep.subr.mxu0 0.0
        %v791 = vand.u32 %v377, 4294901760
        %v792 = vsub.f32 %v377, %v791
        %793 = vmatpush1.msra.mxu0 %v792
        %794 = vmatprep.subr.mxu0 0.0
        %v795 = vand.u32 %v378, 4294901760
        %v796 = vsub.f32 %v378, %v795
        %797 = vmatpush1.msra.mxu0 %v796
        %798 = vmatprep.subr.mxu0 0.0
        %v799 = vand.u32 %v379, 4294901760
        %v800 = vsub.f32 %v379, %v799
        %801 = vmatpush1.msra.mxu0 %v800
        %802 = vmatprep.subr.mxu0 0.0
        %v803 = vand.u32 %v380, 4294901760
        %v804 = vsub.f32 %v380, %v803
        %805 = vmatpush1.msra.mxu0 %v804
        %806 = vmatprep.subr.mxu0 0.0
        %v807 = vand.u32 %v381, 4294901760
        %v808 = vsub.f32 %v381, %v807
        %809 = vmatpush1.msra.mxu0 %v808
        %810 = vmatprep.subr.mxu0 0.0
        %v811 = vand.u32 %v382, 4294901760
        %v812 = vsub.f32 %v382, %v811
        %813 = vmatpush1.msra.mxu0 %v812
        %814 = vmatprep.subr.mxu0 0.0
        %v815 = vand.u32 %v383, 4294901760
        %v816 = vsub.f32 %v383, %v815
        %817 = vmatpush1.msra.mxu0 %v816
        %818 = vmatprep.subr.mxu0 0.0
        %v819 = vand.u32 %v384, 4294901760
        %v820 = vsub.f32 %v384, %v819
        %821 = vmatpush1.msra.mxu0 %v820
        %822 = vmatprep.subr.mxu0 0.0
        %v823 = vand.u32 %v385, 4294901760
        %v824 = vsub.f32 %v385, %v823
        %825 = vmatpush1.msra.mxu0 %v824
        %826 = vmatprep.subr.mxu0 0.0
        %v827 = vand.u32 %v386, 4294901760
        %v828 = vsub.f32 %v386, %v827
        %829 = vmatpush1.msra.mxu0 %v828
        %830 = vmatprep.subr.mxu0 0.0
        %v831 = vand.u32 %v387, 4294901760
        %v832 = vsub.f32 %v387, %v831
        %833 = vmatpush1.msra.mxu0 %v832
        %834 = vmatprep.subr.mxu0 0.0
        %v835 = vand.u32 %v388, 4294901760
        %v836 = vsub.f32 %v388, %v835
        %837 = vmatpush1.msra.mxu0 %v836
        %838 = vmatprep.subr.mxu0 0.0
        %v839 = vand.u32 %v389, 4294901760
        %v840 = vsub.f32 %v389, %v839
        %841 = vmatpush1.msra.mxu0 %v840
        %842 = vmatprep.subr.mxu0 0.0
        %v843 = vand.u32 %v390, 4294901760
        %v844 = vsub.f32 %v390, %v843
        %845 = vmatpush1.msra.mxu0 %v844
        %846 = vmatprep.subr.mxu0 0.0
        %v847 = vand.u32 %v391, 4294901760
        %v848 = vsub.f32 %v391, %v847
        %849 = vmatpush1.msra.mxu0 %v848
        %850 = vmatprep.subr.mxu0 0.0
        %v851 = vand.u32 %v392, 4294901760
        %v852 = vsub.f32 %v392, %v851
        %853 = vmatpush1.msra.mxu0 %v852
        %854 = vmatprep.subr.mxu0 0.0
        %v855 = vand.u32 %v393, 4294901760
        %v856 = vsub.f32 %v393, %v855
        %857 = vmatpush1.msra.mxu0 %v856
        %858 = vmatprep.subr.mxu0 0.0
        %v859 = vand.u32 %v394, 4294901760
        %v860 = vsub.f32 %v394, %v859
        %861 = vmatpush1.msra.mxu0 %v860
        %862 = vmatprep.subr.mxu0 0.0
        %v863 = vand.u32 %v395, 4294901760
        %v864 = vsub.f32 %v395, %v863
        %865 = vmatpush1.msra.mxu0 %v864
        %866 = vmatprep.subr.mxu0 0.0
        %v867 = vand.u32 %v396, 4294901760
        %v868 = vsub.f32 %v396, %v867
        %869 = vmatpush1.msra.mxu0 %v868
        %870 = vmatprep.subr.mxu0 0.0
        %v871 = vand.u32 %v397, 4294901760
        %v872 = vsub.f32 %v397, %v871
        %873 = vmatpush1.msra.mxu0 %v872
        %874 = vmatprep.subr.mxu0 0.0
        %v875 = vand.u32 %v398, 4294901760
        %v876 = vsub.f32 %v398, %v875
        %877 = vmatpush1.msra.mxu0 %v876
        %878 = vmatprep.subr.mxu0 0.0
        %v879 = vand.u32 %v399, 4294901760
        %v880 = vsub.f32 %v399, %v879
        %881 = vmatpush1.msra.mxu0 %v880
        %882 = vmatprep.subr.mxu0 0.0
        %v883 = vand.u32 %v400, 4294901760
        %v884 = vsub.f32 %v400, %v883
        %885 = vmatpush1.msra.mxu0 %v884
        %v886 = vand.u32 %v411, 4294901760
        %v887 = vsub.f32 %v411, %v886
        %888 = vmatprep.mubr.f32.mxu0 %v887
        %v889 = vand.u32 %v408, 4294901760
        %v890 = vsub.f32 %v408, %v889
        %891 = vmatmul.mubr.f32.gmra.mrb[0].mxu0 %v890
        %v892 = vpop.f32.mrb[0].mxu0
        %v893 = vadd.f32 %v755, %v892
        %v894 = vpop.f32.mrb[0].mxu0
        %895 = vdwg.mxu0
        %896 = vmatprep.subr.mxu0 0.0
        %v897 = vand.u32 %v369, 4294901760
        %898 = vmatpush1.msra.mxu0 %v897
        %899 = vmatprep.subr.mxu0 0.0
        %v900 = vand.u32 %v370, 4294901760
        %901 = vmatpush1.msra.mxu0 %v900
        %902 = vmatprep.subr.mxu0 0.0
        %v903 = vand.u32 %v371, 4294901760
        %904 = vmatpush1.msra.mxu0 %v903
        %905 = vmatprep.subr.mxu0 0.0
        %v906 = vand.u32 %v372, 4294901760
        %907 = vmatpush1.msra.mxu0 %v906
        %908 = vmatprep.subr.mxu0 0.0
        %v909 = vand.u32 %v373, 4294901760
        %910 = vmatpush1.msra.mxu0 %v909
        %911 = vmatprep.subr.mxu0 0.0
        %v912 = vand.u32 %v374, 4294901760
        %913 = vmatpush1.msra.mxu0 %v912
        %914 = vmatprep.subr.mxu0 0.0
        %v915 = vand.u32 %v375, 4294901760
        %916 = vmatpush1.msra.mxu0 %v915
        %917 = vmatprep.subr.mxu0 0.0
        %v918 = vand.u32 %v376, 4294901760
        %919 = vmatpush1.msra.mxu0 %v918
        %920 = vmatprep.subr.mxu0 0.0
        %v921 = vand.u32 %v377, 4294901760
        %922 = vmatpush1.msra.mxu0 %v921
        %923 = vmatprep.subr.mxu0 0.0
        %v924 = vand.u32 %v378, 4294901760
        %925 = vmatpush1.msra.mxu0 %v924
        %926 = vmatprep.subr.mxu0 0.0
        %v927 = vand.u32 %v379, 4294901760
        %928 = vmatpush1.msra.mxu0 %v927
        %929 = vmatprep.subr.mxu0 0.0
        %v930 = vand.u32 %v380, 4294901760
        %931 = vmatpush1.msra.mxu0 %v930
        %932 = vmatprep.subr.mxu0 0.0
        %v933 = vand.u32 %v381, 4294901760
        %934 = vmatpush1.msra.mxu0 %v933
        %935 = vmatprep.subr.mxu0 0.0
        %v936 = vand.u32 %v382, 4294901760
        %937 = vmatpush1.msra.mxu0 %v936
        %938 = vmatprep.subr.mxu0 0.0
        %v939 = vand.u32 %v383, 4294901760
        %940 = vmatpush1.msra.mxu0 %v939
        %941 = vmatprep.subr.mxu0 0.0
        %v942 = vand.u32 %v384, 4294901760
        %943 = vmatpush1.msra.mxu0 %v942
        %944 = vmatprep.subr.mxu0 0.0
        %v945 = vand.u32 %v385, 4294901760
        %946 = vmatpush1.msra.mxu0 %v945
        %947 = vmatprep.subr.mxu0 0.0
        %v948 = vand.u32 %v386, 4294901760
        %949 = vmatpush1.msra.mxu0 %v948
        %950 = vmatprep.subr.mxu0 0.0
        %v951 = vand.u32 %v387, 4294901760
        %952 = vmatpush1.msra.mxu0 %v951
        %953 = vmatprep.subr.mxu0 0.0
        %v954 = vand.u32 %v388, 4294901760
        %955 = vmatpush1.msra.mxu0 %v954
        %956 = vmatprep.subr.mxu0 0.0
        %v957 = vand.u32 %v389, 4294901760
        %958 = vmatpush1.msra.mxu0 %v957
        %959 = vmatprep.subr.mxu0 0.0
        %v960 = vand.u32 %v390, 4294901760
        %961 = vmatpush1.msra.mxu0 %v960
        %962 = vmatprep.subr.mxu0 0.0
        %v963 = vand.u32 %v391, 4294901760
        %964 = vmatpush1.msra.mxu0 %v963
        %965 = vmatprep.subr.mxu0 0.0
        %v966 = vand.u32 %v392, 4294901760
        %967 = vmatpush1.msra.mxu0 %v966
        %968 = vmatprep.subr.mxu0 0.0
        %v969 = vand.u32 %v393, 4294901760
        %970 = vmatpush1.msra.mxu0 %v969
        %971 = vmatprep.subr.mxu0 0.0
        %v972 = vand.u32 %v394, 4294901760
        %973 = vmatpush1.msra.mxu0 %v972
        %974 = vmatprep.subr.mxu0 0.0
        %v975 = vand.u32 %v395, 4294901760
        %976 = vmatpush1.msra.mxu0 %v975
        %977 = vmatprep.subr.mxu0 0.0
        %v978 = vand.u32 %v396, 4294901760
        %979 = vmatpush1.msra.mxu0 %v978
        %980 = vmatprep.subr.mxu0 0.0
        %v981 = vand.u32 %v397, 4294901760
        %982 = vmatpush1.msra.mxu0 %v981
        %983 = vmatprep.subr.mxu0 0.0
        %v984 = vand.u32 %v398, 4294901760
        %985 = vmatpush1.msra.mxu0 %v984
        %986 = vmatprep.subr.mxu0 0.0
        %v987 = vand.u32 %v399, 4294901760
        %988 = vmatpush1.msra.mxu0 %v987
        %989 = vmatprep.subr.mxu0 0.0
        %v990 = vand.u32 %v400, 4294901760
        %991 = vmatpush1.msra.mxu0 %v990
        %v992 = vand.u32 %v411, 4294901760
        %v993 = vsub.f32 %v411, %v992
        %v994 = vand.u32 %v993, 4294901760
        %995 = vmatprep.mubr.f32.mxu0 %v994
        %v996 = vand.u32 %v408, 4294901760
        %v997 = vsub.f32 %v408, %v996
        %v998 = vand.u32 %v997, 4294901760
        %999 = vmatmul.mubr.f32.gmra.mrb[0].mxu0 %v998
        %v1000 = vpop.f32.mrb[0].mxu0
        %v1001 = vadd.f32 %v893, %v1000
        %v1002 = vpop.f32.mrb[0].mxu0
        %1003 = vdwg.mxu0
        %1004 = vmatprep.subr.mxu0 0.0
        %v1005 = vand.u32 %v369, 4294901760
        %v1006 = vsub.f32 %v369, %v1005
        %v1007 = vand.u32 %v1006, 4294901760
        %1008 = vmatpush1.msra.mxu0 %v1007
        %1009 = vmatprep.subr.mxu0 0.0
        %v1010 = vand.u32 %v370, 4294901760
        %v1011 = vsub.f32 %v370, %v1010
        %v1012 = vand.u32 %v1011, 4294901760
        %1013 = vmatpush1.msra.mxu0 %v1012
        %1014 = vmatprep.subr.mxu0 0.0
        %v1015 = vand.u32 %v371, 4294901760
        %v1016 = vsub.f32 %v371, %v1015
        %v1017 = vand.u32 %v1016, 4294901760
        %1018 = vmatpush1.msra.mxu0 %v1017
        %1019 = vmatprep.subr.mxu0 0.0
        %v1020 = vand.u32 %v372, 4294901760
        %v1021 = vsub.f32 %v372, %v1020
        %v1022 = vand.u32 %v1021, 4294901760
        %1023 = vmatpush1.msra.mxu0 %v1022
        %1024 = vmatprep.subr.mxu0 0.0
        %v1025 = vand.u32 %v373, 4294901760
        %v1026 = vsub.f32 %v373, %v1025
        %v1027 = vand.u32 %v1026, 4294901760
        %1028 = vmatpush1.msra.mxu0 %v1027
        %1029 = vmatprep.subr.mxu0 0.0
        %v1030 = vand.u32 %v374, 4294901760
        %v1031 = vsub.f32 %v374, %v1030
        %v1032 = vand.u32 %v1031, 4294901760
        %1033 = vmatpush1.msra.mxu0 %v1032
        %1034 = vmatprep.subr.mxu0 0.0
        %v1035 = vand.u32 %v375, 4294901760
        %v1036 = vsub.f32 %v375, %v1035
        %v1037 = vand.u32 %v1036, 4294901760
        %1038 = vmatpush1.msra.mxu0 %v1037
        %1039 = vmatprep.subr.mxu0 0.0
        %v1040 = vand.u32 %v376, 4294901760
        %v1041 = vsub.f32 %v376, %v1040
        %v1042 = vand.u32 %v1041, 4294901760
        %1043 = vmatpush1.msra.mxu0 %v1042
        %1044 = vmatprep.subr.mxu0 0.0
        %v1045 = vand.u32 %v377, 4294901760
        %v1046 = vsub.f32 %v377, %v1045
        %v1047 = vand.u32 %v1046, 4294901760
        %1048 = vmatpush1.msra.mxu0 %v1047
        %1049 = vmatprep.subr.mxu0 0.0
        %v1050 = vand.u32 %v378, 4294901760
        %v1051 = vsub.f32 %v378, %v1050
        %v1052 = vand.u32 %v1051, 4294901760
        %1053 = vmatpush1.msra.mxu0 %v1052
        %1054 = vmatprep.subr.mxu0 0.0
        %v1055 = vand.u32 %v379, 4294901760
        %v1056 = vsub.f32 %v379, %v1055
        %v1057 = vand.u32 %v1056, 4294901760
        %1058 = vmatpush1.msra.mxu0 %v1057
        %1059 = vmatprep.subr.mxu0 0.0
        %v1060 = vand.u32 %v380, 4294901760
        %v1061 = vsub.f32 %v380, %v1060
        %v1062 = vand.u32 %v1061, 4294901760
        %1063 = vmatpush1.msra.mxu0 %v1062
        %1064 = vmatprep.subr.mxu0 0.0
        %v1065 = vand.u32 %v381, 4294901760
        %v1066 = vsub.f32 %v381, %v1065
        %v1067 = vand.u32 %v1066, 4294901760
        %1068 = vmatpush1.msra.mxu0 %v1067
        %1069 = vmatprep.subr.mxu0 0.0
        %v1070 = vand.u32 %v382, 4294901760
        %v1071 = vsub.f32 %v382, %v1070
        %v1072 = vand.u32 %v1071, 4294901760
        %1073 = vmatpush1.msra.mxu0 %v1072
        %1074 = vmatprep.subr.mxu0 0.0
        %v1075 = vand.u32 %v383, 4294901760
        %v1076 = vsub.f32 %v383, %v1075
        %v1077 = vand.u32 %v1076, 4294901760
        %1078 = vmatpush1.msra.mxu0 %v1077
        %1079 = vmatprep.subr.mxu0 0.0
        %v1080 = vand.u32 %v384, 4294901760
        %v1081 = vsub.f32 %v384, %v1080
        %v1082 = vand.u32 %v1081, 4294901760
        %1083 = vmatpush1.msra.mxu0 %v1082
        %1084 = vmatprep.subr.mxu0 0.0
        %v1085 = vand.u32 %v385, 4294901760
        %v1086 = vsub.f32 %v385, %v1085
        %v1087 = vand.u32 %v1086, 4294901760
        %1088 = vmatpush1.msra.mxu0 %v1087
        %1089 = vmatprep.subr.mxu0 0.0
        %v1090 = vand.u32 %v386, 4294901760
        %v1091 = vsub.f32 %v386, %v1090
        %v1092 = vand.u32 %v1091, 4294901760
        %1093 = vmatpush1.msra.mxu0 %v1092
        %1094 = vmatprep.subr.mxu0 0.0
        %v1095 = vand.u32 %v387, 4294901760
        %v1096 = vsub.f32 %v387, %v1095
        %v1097 = vand.u32 %v1096, 4294901760
        %1098 = vmatpush1.msra.mxu0 %v1097
        %1099 = vmatprep.subr.mxu0 0.0
        %v1100 = vand.u32 %v388, 4294901760
        %v1101 = vsub.f32 %v388, %v1100
        %v1102 = vand.u32 %v1101, 4294901760
        %1103 = vmatpush1.msra.mxu0 %v1102
        %1104 = vmatprep.subr.mxu0 0.0
        %v1105 = vand.u32 %v389, 4294901760
        %v1106 = vsub.f32 %v389, %v1105
        %v1107 = vand.u32 %v1106, 4294901760
        %1108 = vmatpush1.msra.mxu0 %v1107
        %1109 = vmatprep.subr.mxu0 0.0
        %v1110 = vand.u32 %v390, 4294901760
        %v1111 = vsub.f32 %v390, %v1110
        %v1112 = vand.u32 %v1111, 4294901760
        %1113 = vmatpush1.msra.mxu0 %v1112
        %1114 = vmatprep.subr.mxu0 0.0
        %v1115 = vand.u32 %v391, 4294901760
        %v1116 = vsub.f32 %v391, %v1115
        %v1117 = vand.u32 %v1116, 4294901760
        %1118 = vmatpush1.msra.mxu0 %v1117
        %1119 = vmatprep.subr.mxu0 0.0
        %v1120 = vand.u32 %v392, 4294901760
        %v1121 = vsub.f32 %v392, %v1120
        %v1122 = vand.u32 %v1121, 4294901760
        %1123 = vmatpush1.msra.mxu0 %v1122
        %1124 = vmatprep.subr.mxu0 0.0
        %v1125 = vand.u32 %v393, 4294901760
        %v1126 = vsub.f32 %v393, %v1125
        %v1127 = vand.u32 %v1126, 4294901760
        %1128 = vmatpush1.msra.mxu0 %v1127
        %1129 = vmatprep.subr.mxu0 0.0
        %v1130 = vand.u32 %v394, 4294901760
        %v1131 = vsub.f32 %v394, %v1130
        %v1132 = vand.u32 %v1131, 4294901760
        %1133 = vmatpush1.msra.mxu0 %v1132
        %1134 = vmatprep.subr.mxu0 0.0
        %v1135 = vand.u32 %v395, 4294901760
        %v1136 = vsub.f32 %v395, %v1135
        %v1137 = vand.u32 %v1136, 4294901760
        %1138 = vmatpush1.msra.mxu0 %v1137
        %1139 = vmatprep.subr.mxu0 0.0
        %v1140 = vand.u32 %v396, 4294901760
        %v1141 = vsub.f32 %v396, %v1140
        %v1142 = vand.u32 %v1141, 4294901760
        %1143 = vmatpush1.msra.mxu0 %v1142
        %1144 = vmatprep.subr.mxu0 0.0
        %v1145 = vand.u32 %v397, 4294901760
        %v1146 = vsub.f32 %v397, %v1145
        %v1147 = vand.u32 %v1146, 4294901760
        %1148 = vmatpush1.msra.mxu0 %v1147
        %1149 = vmatprep.subr.mxu0 0.0
        %v1150 = vand.u32 %v398, 4294901760
        %v1151 = vsub.f32 %v398, %v1150
        %v1152 = vand.u32 %v1151, 4294901760
        %1153 = vmatpush1.msra.mxu0 %v1152
        %1154 = vmatprep.subr.mxu0 0.0
        %v1155 = vand.u32 %v399, 4294901760
        %v1156 = vsub.f32 %v399, %v1155
        %v1157 = vand.u32 %v1156, 4294901760
        %1158 = vmatpush1.msra.mxu0 %v1157
        %1159 = vmatprep.subr.mxu0 0.0
        %v1160 = vand.u32 %v400, 4294901760
        %v1161 = vsub.f32 %v400, %v1160
        %v1162 = vand.u32 %v1161, 4294901760
        %1163 = vmatpush1.msra.mxu0 %v1162
        %v1164 = vand.u32 %v411, 4294901760
        %1165 = vmatprep.mubr.f32.mxu0 %v1164
        %v1166 = vand.u32 %v408, 4294901760
        %1167 = vmatmul.mubr.f32.gmra.mrb[0].mxu0 %v1166
        %v1168 = vpop.f32.mrb[0].mxu0
        %v1169 = vadd.f32 %v1001, %v1168
        %v1170 = vpop.f32.mrb[0].mxu0
        %1171 = vdwg.mxu0
        %1172 = vmatprep.subr.mxu0 0.0
        %v1173 = vand.u32 %v369, 4294901760
        %1174 = vmatpush1.msra.mxu0 %v1173
        %1175 = vmatprep.subr.mxu0 0.0
        %v1176 = vand.u32 %v370, 4294901760
        %1177 = vmatpush1.msra.mxu0 %v1176
        %1178 = vmatprep.subr.mxu0 0.0
        %v1179 = vand.u32 %v371, 4294901760
        %1180 = vmatpush1.msra.mxu0 %v1179
        %1181 = vmatprep.subr.mxu0 0.0
        %v1182 = vand.u32 %v372, 4294901760
        %1183 = vmatpush1.msra.mxu0 %v1182
        %1184 = vmatprep.subr.mxu0 0.0
        %v1185 = vand.u32 %v373, 4294901760
        %1186 = vmatpush1.msra.mxu0 %v1185
        %1187 = vmatprep.subr.mxu0 0.0
        %v1188 = vand.u32 %v374, 4294901760
        %1189 = vmatpush1.msra.mxu0 %v1188
        %1190 = vmatprep.subr.mxu0 0.0
        %v1191 = vand.u32 %v375, 4294901760
        %1192 = vmatpush1.msra.mxu0 %v1191
        %1193 = vmatprep.subr.mxu0 0.0
        %v1194 = vand.u32 %v376, 4294901760
        %1195 = vmatpush1.msra.mxu0 %v1194
        %1196 = vmatprep.subr.mxu0 0.0
        %v1197 = vand.u32 %v377, 4294901760
        %1198 = vmatpush1.msra.mxu0 %v1197
        %1199 = vmatprep.subr.mxu0 0.0
        %v1200 = vand.u32 %v378, 4294901760
        %1201 = vmatpush1.msra.mxu0 %v1200
        %1202 = vmatprep.subr.mxu0 0.0
        %v1203 = vand.u32 %v379, 4294901760
        %1204 = vmatpush1.msra.mxu0 %v1203
        %1205 = vmatprep.subr.mxu0 0.0
        %v1206 = vand.u32 %v380, 4294901760
        %1207 = vmatpush1.msra.mxu0 %v1206
        %1208 = vmatprep.subr.mxu0 0.0
        %v1209 = vand.u32 %v381, 4294901760
        %1210 = vmatpush1.msra.mxu0 %v1209
        %1211 = vmatprep.subr.mxu0 0.0
        %v1212 = vand.u32 %v382, 4294901760
        %1213 = vmatpush1.msra.mxu0 %v1212
        %1214 = vmatprep.subr.mxu0 0.0
        %v1215 = vand.u32 %v383, 4294901760
        %1216 = vmatpush1.msra.mxu0 %v1215
        %1217 = vmatprep.subr.mxu0 0.0
        %v1218 = vand.u32 %v384, 4294901760
        %1219 = vmatpush1.msra.mxu0 %v1218
        %1220 = vmatprep.subr.mxu0 0.0
        %v1221 = vand.u32 %v385, 4294901760
        %1222 = vmatpush1.msra.mxu0 %v1221
        %1223 = vmatprep.subr.mxu0 0.0
        %v1224 = vand.u32 %v386, 4294901760
        %1225 = vmatpush1.msra.mxu0 %v1224
        %1226 = vmatprep.subr.mxu0 0.0
        %v1227 = vand.u32 %v387, 4294901760
        %1228 = vmatpush1.msra.mxu0 %v1227
        %1229 = vmatprep.subr.mxu0 0.0
        %v1230 = vand.u32 %v388, 4294901760
        %1231 = vmatpush1.msra.mxu0 %v1230
        %1232 = vmatprep.subr.mxu0 0.0
        %v1233 = vand.u32 %v389, 4294901760
        %1234 = vmatpush1.msra.mxu0 %v1233
        %1235 = vmatprep.subr.mxu0 0.0
        %v1236 = vand.u32 %v390, 4294901760
        %1237 = vmatpush1.msra.mxu0 %v1236
        %1238 = vmatprep.subr.mxu0 0.0
        %v1239 = vand.u32 %v391, 4294901760
        %1240 = vmatpush1.msra.mxu0 %v1239
        %1241 = vmatprep.subr.mxu0 0.0
        %v1242 = vand.u32 %v392, 4294901760
        %1243 = vmatpush1.msra.mxu0 %v1242
        %1244 = vmatprep.subr.mxu0 0.0
        %v1245 = vand.u32 %v393, 4294901760
        %1246 = vmatpush1.msra.mxu0 %v1245
        %1247 = vmatprep.subr.mxu0 0.0
        %v1248 = vand.u32 %v394, 4294901760
        %1249 = vmatpush1.msra.mxu0 %v1248
        %1250 = vmatprep.subr.mxu0 0.0
        %v1251 = vand.u32 %v395, 4294901760
        %1252 = vmatpush1.msra.mxu0 %v1251
        %1253 = vmatprep.subr.mxu0 0.0
        %v1254 = vand.u32 %v396, 4294901760
        %1255 = vmatpush1.msra.mxu0 %v1254
        %1256 = vmatprep.subr.mxu0 0.0
        %v1257 = vand.u32 %v397, 4294901760
        %1258 = vmatpush1.msra.mxu0 %v1257
        %1259 = vmatprep.subr.mxu0 0.0
        %v1260 = vand.u32 %v398, 4294901760
        %1261 = vmatpush1.msra.mxu0 %v1260
        %1262 = vmatprep.subr.mxu0 0.0
        %v1263 = vand.u32 %v399, 4294901760
        %1264 = vmatpush1.msra.mxu0 %v1263
        %1265 = vmatprep.subr.mxu0 0.0
        %v1266 = vand.u32 %v400, 4294901760
        %1267 = vmatpush1.msra.mxu0 %v1266
        %v1268 = vand.u32 %v411, 4294901760
        %1269 = vmatprep.mubr.f32.mxu0 %v1268
        %v1270 = vand.u32 %v408, 4294901760
        %1271 = vmatmul.mubr.f32.gmra.mrb[0].mxu0 %v1270
        %v1272 = vpop.f32.mrb[0].mxu0
        %v1273 = vadd.f32 %v1169, %v1272
        %v1274 = vpop.f32.mrb[0].mxu0
        %1275 = vdwg.mxu0
        %1276 = vmatprep.subr.mxu0 0.0
        %v1277 = vand.u32 %v332, 4294901760
        %1278 = vmatpush1.msra.mxu0 %v1277
        %1279 = vmatprep.subr.mxu0 0.0
        %v1280 = vand.u32 %v333, 4294901760
        %1281 = vmatpush1.msra.mxu0 %v1280
        %1282 = vmatprep.subr.mxu0 0.0
        %v1283 = vand.u32 %v334, 4294901760
        %1284 = vmatpush1.msra.mxu0 %v1283
        %1285 = vmatprep.subr.mxu0 0.0
        %v1286 = vand.u32 %v335, 4294901760
        %1287 = vmatpush1.msra.mxu0 %v1286
        %1288 = vmatprep.subr.mxu0 0.0
        %v1289 = vand.u32 %v336, 4294901760
        %1290 = vmatpush1.msra.mxu0 %v1289
        %1291 = vmatprep.subr.mxu0 0.0
        %v1292 = vand.u32 %v337, 4294901760
        %1293 = vmatpush1.msra.mxu0 %v1292
        %1294 = vmatprep.subr.mxu0 0.0
        %v1295 = vand.u32 %v338, 4294901760
        %1296 = vmatpush1.msra.mxu0 %v1295
        %1297 = vmatprep.subr.mxu0 0.0
        %v1298 = vand.u32 %v339, 4294901760
        %1299 = vmatpush1.msra.mxu0 %v1298
        %1300 = vmatprep.subr.mxu0 0.0
        %v1301 = vand.u32 %v340, 4294901760
        %1302 = vmatpush1.msra.mxu0 %v1301
        %1303 = vmatprep.subr.mxu0 0.0
        %v1304 = vand.u32 %v341, 4294901760
        %1305 = vmatpush1.msra.mxu0 %v1304
        %1306 = vmatprep.subr.mxu0 0.0
        %v1307 = vand.u32 %v342, 4294901760
        %1308 = vmatpush1.msra.mxu0 %v1307
        %1309 = vmatprep.subr.mxu0 0.0
        %v1310 = vand.u32 %v343, 4294901760
        %1311 = vmatpush1.msra.mxu0 %v1310
        %1312 = vmatprep.subr.mxu0 0.0
        %v1313 = vand.u32 %v344, 4294901760
        %1314 = vmatpush1.msra.mxu0 %v1313
        %1315 = vmatprep.subr.mxu0 0.0
        %v1316 = vand.u32 %v345, 4294901760
        %1317 = vmatpush1.msra.mxu0 %v1316
        %1318 = vmatprep.subr.mxu0 0.0
        %v1319 = vand.u32 %v346, 4294901760
        %1320 = vmatpush1.msra.mxu0 %v1319
        %1321 = vmatprep.subr.mxu0 0.0
        %v1322 = vand.u32 %v347, 4294901760
        %1323 = vmatpush1.msra.mxu0 %v1322
        %1324 = vmatprep.subr.mxu0 0.0
        %v1325 = vand.u32 %v348, 4294901760
        %1326 = vmatpush1.msra.mxu0 %v1325
        %1327 = vmatprep.subr.mxu0 0.0
        %v1328 = vand.u32 %v349, 4294901760
        %1329 = vmatpush1.msra.mxu0 %v1328
        %1330 = vmatprep.subr.mxu0 0.0
        %v1331 = vand.u32 %v350, 4294901760
        %1332 = vmatpush1.msra.mxu0 %v1331
        %1333 = vmatprep.subr.mxu0 0.0
        %v1334 = vand.u32 %v351, 4294901760
        %1335 = vmatpush1.msra.mxu0 %v1334
        %1336 = vmatprep.subr.mxu0 0.0
        %v1337 = vand.u32 %v352, 4294901760
        %1338 = vmatpush1.msra.mxu0 %v1337
        %1339 = vmatprep.subr.mxu0 0.0
        %v1340 = vand.u32 %v353, 4294901760
        %1341 = vmatpush1.msra.mxu0 %v1340
        %1342 = vmatprep.subr.mxu0 0.0
        %v1343 = vand.u32 %v354, 4294901760
        %1344 = vmatpush1.msra.mxu0 %v1343
        %1345 = vmatprep.subr.mxu0 0.0
        %v1346 = vand.u32 %v355, 4294901760
        %1347 = vmatpush1.msra.mxu0 %v1346
        %1348 = vmatprep.subr.mxu0 0.0
        %v1349 = vand.u32 %v356, 4294901760
        %1350 = vmatpush1.msra.mxu0 %v1349
        %1351 = vmatprep.subr.mxu0 0.0
        %v1352 = vand.u32 %v357, 4294901760
        %1353 = vmatpush1.msra.mxu0 %v1352
        %1354 = vmatprep.subr.mxu0 0.0
        %v1355 = vand.u32 %v358, 4294901760
        %1356 = vmatpush1.msra.mxu0 %v1355
        %1357 = vmatprep.subr.mxu0 0.0
        %v1358 = vand.u32 %v359, 4294901760
        %1359 = vmatpush1.msra.mxu0 %v1358
        %1360 = vmatprep.subr.mxu0 0.0
        %v1361 = vand.u32 %v360, 4294901760
        %1362 = vmatpush1.msra.mxu0 %v1361
        %1363 = vmatprep.subr.mxu0 0.0
        %v1364 = vand.u32 %v361, 4294901760
        %1365 = vmatpush1.msra.mxu0 %v1364
        %1366 = vmatprep.subr.mxu0 0.0
        %v1367 = vand.u32 %v362, 4294901760
        %1368 = vmatpush1.msra.mxu0 %v1367
        %1369 = vmatprep.subr.mxu0 0.0
        %v1370 = vand.u32 %v363, 4294901760
        %1371 = vmatpush1.msra.mxu0 %v1370
        %v1372 = vand.u32 %v331, 4294901760
        %v1373 = vsub.f32 %v331, %v1372
        %v1374 = vand.u32 %v1373, 4294901760
        %v1375 = vsub.f32 %v1373, %v1374
        %v1376 = vand.u32 %v1375, 4294901760
        %1377 = vmatprep.mubr.f32.mxu0 %v1376
        %v1378 = vand.u32 %v330, 4294901760
        %v1379 = vsub.f32 %v330, %v1378
        %v1380 = vand.u32 %v1379, 4294901760
        %v1381 = vsub.f32 %v1379, %v1380
        %v1382 = vand.u32 %v1381, 4294901760
        %1383 = vmatmul.mubr.f32.gmra.mrb[0].mxu0 %v1382
        %v1384 = vpop.f32.mrb[0].mxu0
        %v1385 = vadd.f32 %v1273, %v1384
        %v1386 = vpop.f32.mrb[0].mxu0
        %1387 = vdwg.mxu0
        %1388 = vmatprep.subr.mxu0 0.0
        %v1389 = vand.u32 %v332, 4294901760
        %v1390 = vsub.f32 %v332, %v1389
        %v1391 = vand.u32 %v1390, 4294901760
        %v1392 = vsub.f32 %v1390, %v1391
        %v1393 = vand.u32 %v1392, 4294901760
        %1394 = vmatpush1.msra.mxu0 %v1393
        %1395 = vmatprep.subr.mxu0 0.0
        %v1396 = vand.u32 %v333, 4294901760
        %v1397 = vsub.f32 %v333, %v1396
        %v1398 = vand.u32 %v1397, 4294901760
        %v1399 = vsub.f32 %v1397, %v1398
        %v1400 = vand.u32 %v1399, 4294901760
        %1401 = vmatpush1.msra.mxu0 %v1400
        %1402 = vmatprep.subr.mxu0 0.0
        %v1403 = vand.u32 %v334, 4294901760
        %v1404 = vsub.f32 %v334, %v1403
        %v1405 = vand.u32 %v1404, 4294901760
        %v1406 = vsub.f32 %v1404, %v1405
        %v1407 = vand.u32 %v1406, 4294901760
        %1408 = vmatpush1.msra.mxu0 %v1407
        %1409 = vmatprep.subr.mxu0 0.0
        %v1410 = vand.u32 %v335, 4294901760
        %v1411 = vsub.f32 %v335, %v1410
        %v1412 = vand.u32 %v1411, 4294901760
        %v1413 = vsub.f32 %v1411, %v1412
        %v1414 = vand.u32 %v1413, 4294901760
        %1415 = vmatpush1.msra.mxu0 %v1414
        %1416 = vmatprep.subr.mxu0 0.0
        %v1417 = vand.u32 %v336, 4294901760
        %v1418 = vsub.f32 %v336, %v1417
        %v1419 = vand.u32 %v1418, 4294901760
        %v1420 = vsub.f32 %v1418, %v1419
        %v1421 = vand.u32 %v1420, 4294901760
        %1422 = vmatpush1.msra.mxu0 %v1421
        %1423 = vmatprep.subr.mxu0 0.0
        %v1424 = vand.u32 %v337, 4294901760
        %v1425 = vsub.f32 %v337, %v1424
        %v1426 = vand.u32 %v1425, 4294901760
        %v1427 = vsub.f32 %v1425, %v1426
        %v1428 = vand.u32 %v1427, 4294901760
        %1429 = vmatpush1.msra.mxu0 %v1428
        %1430 = vmatprep.subr.mxu0 0.0
        %v1431 = vand.u32 %v338, 4294901760
        %v1432 = vsub.f32 %v338, %v1431
        %v1433 = vand.u32 %v1432, 4294901760
        %v1434 = vsub.f32 %v1432, %v1433
        %v1435 = vand.u32 %v1434, 4294901760
        %1436 = vmatpush1.msra.mxu0 %v1435
        %1437 = vmatprep.subr.mxu0 0.0
        %v1438 = vand.u32 %v339, 4294901760
        %v1439 = vsub.f32 %v339, %v1438
        %v1440 = vand.u32 %v1439, 4294901760
        %v1441 = vsub.f32 %v1439, %v1440
        %v1442 = vand.u32 %v1441, 4294901760
        %1443 = vmatpush1.msra.mxu0 %v1442
        %1444 = vmatprep.subr.mxu0 0.0
        %v1445 = vand.u32 %v340, 4294901760
        %v1446 = vsub.f32 %v340, %v1445
        %v1447 = vand.u32 %v1446, 4294901760
        %v1448 = vsub.f32 %v1446, %v1447
        %v1449 = vand.u32 %v1448, 4294901760
        %1450 = vmatpush1.msra.mxu0 %v1449
        %1451 = vmatprep.subr.mxu0 0.0
        %v1452 = vand.u32 %v341, 4294901760
        %v1453 = vsub.f32 %v341, %v1452
        %v1454 = vand.u32 %v1453, 4294901760
        %v1455 = vsub.f32 %v1453, %v1454
        %v1456 = vand.u32 %v1455, 4294901760
        %1457 = vmatpush1.msra.mxu0 %v1456
        %1458 = vmatprep.subr.mxu0 0.0
        %v1459 = vand.u32 %v342, 4294901760
        %v1460 = vsub.f32 %v342, %v1459
        %v1461 = vand.u32 %v1460, 4294901760
        %v1462 = vsub.f32 %v1460, %v1461
        %v1463 = vand.u32 %v1462, 4294901760
        %1464 = vmatpush1.msra.mxu0 %v1463
        %1465 = vmatprep.subr.mxu0 0.0
        %v1466 = vand.u32 %v343, 4294901760
        %v1467 = vsub.f32 %v343, %v1466
        %v1468 = vand.u32 %v1467, 4294901760
        %v1469 = vsub.f32 %v1467, %v1468
        %v1470 = vand.u32 %v1469, 4294901760
        %1471 = vmatpush1.msra.mxu0 %v1470
        %1472 = vmatprep.subr.mxu0 0.0
        %v1473 = vand.u32 %v344, 4294901760
        %v1474 = vsub.f32 %v344, %v1473
        %v1475 = vand.u32 %v1474, 4294901760
        %v1476 = vsub.f32 %v1474, %v1475
        %v1477 = vand.u32 %v1476, 4294901760
        %1478 = vmatpush1.msra.mxu0 %v1477
        %1479 = vmatprep.subr.mxu0 0.0
        %v1480 = vand.u32 %v345, 4294901760
        %v1481 = vsub.f32 %v345, %v1480
        %v1482 = vand.u32 %v1481, 4294901760
        %v1483 = vsub.f32 %v1481, %v1482
        %v1484 = vand.u32 %v1483, 4294901760
        %1485 = vmatpush1.msra.mxu0 %v1484
        %1486 = vmatprep.subr.mxu0 0.0
        %v1487 = vand.u32 %v346, 4294901760
        %v1488 = vsub.f32 %v346, %v1487
        %v1489 = vand.u32 %v1488, 4294901760
        %v1490 = vsub.f32 %v1488, %v1489
        %v1491 = vand.u32 %v1490, 4294901760
        %1492 = vmatpush1.msra.mxu0 %v1491
        %1493 = vmatprep.subr.mxu0 0.0
        %v1494 = vand.u32 %v347, 4294901760
        %v1495 = vsub.f32 %v347, %v1494
        %v1496 = vand.u32 %v1495, 4294901760
        %v1497 = vsub.f32 %v1495, %v1496
        %v1498 = vand.u32 %v1497, 4294901760
        %1499 = vmatpush1.msra.mxu0 %v1498
        %1500 = vmatprep.subr.mxu0 0.0
        %v1501 = vand.u32 %v348, 4294901760
        %v1502 = vsub.f32 %v348, %v1501
        %v1503 = vand.u32 %v1502, 4294901760
        %v1504 = vsub.f32 %v1502, %v1503
        %v1505 = vand.u32 %v1504, 4294901760
        %1506 = vmatpush1.msra.mxu0 %v1505
        %1507 = vmatprep.subr.mxu0 0.0
        %v1508 = vand.u32 %v349, 4294901760
        %v1509 = vsub.f32 %v349, %v1508
        %v1510 = vand.u32 %v1509, 4294901760
        %v1511 = vsub.f32 %v1509, %v1510
        %v1512 = vand.u32 %v1511, 4294901760
        %1513 = vmatpush1.msra.mxu0 %v1512
        %1514 = vmatprep.subr.mxu0 0.0
        %v1515 = vand.u32 %v350, 4294901760
        %v1516 = vsub.f32 %v350, %v1515
        %v1517 = vand.u32 %v1516, 4294901760
        %v1518 = vsub.f32 %v1516, %v1517
        %v1519 = vand.u32 %v1518, 4294901760
        %1520 = vmatpush1.msra.mxu0 %v1519
        %1521 = vmatprep.subr.mxu0 0.0
        %v1522 = vand.u32 %v351, 4294901760
        %v1523 = vsub.f32 %v351, %v1522
        %v1524 = vand.u32 %v1523, 4294901760
        %v1525 = vsub.f32 %v1523, %v1524
        %v1526 = vand.u32 %v1525, 4294901760
        %1527 = vmatpush1.msra.mxu0 %v1526
        %1528 = vmatprep.subr.mxu0 0.0
        %v1529 = vand.u32 %v352, 4294901760
        %v1530 = vsub.f32 %v352, %v1529
        %v1531 = vand.u32 %v1530, 4294901760
        %v1532 = vsub.f32 %v1530, %v1531
        %v1533 = vand.u32 %v1532, 4294901760
        %1534 = vmatpush1.msra.mxu0 %v1533
        %1535 = vmatprep.subr.mxu0 0.0
        %v1536 = vand.u32 %v353, 4294901760
        %v1537 = vsub.f32 %v353, %v1536
        %v1538 = vand.u32 %v1537, 4294901760
        %v1539 = vsub.f32 %v1537, %v1538
        %v1540 = vand.u32 %v1539, 4294901760
        %1541 = vmatpush1.msra.mxu0 %v1540
        %1542 = vmatprep.subr.mxu0 0.0
        %v1543 = vand.u32 %v354, 4294901760
        %v1544 = vsub.f32 %v354, %v1543
        %v1545 = vand.u32 %v1544, 4294901760
        %v1546 = vsub.f32 %v1544, %v1545
        %v1547 = vand.u32 %v1546, 4294901760
        %1548 = vmatpush1.msra.mxu0 %v1547
        %1549 = vmatprep.subr.mxu0 0.0
        %v1550 = vand.u32 %v355, 4294901760
        %v1551 = vsub.f32 %v355, %v1550
        %v1552 = vand.u32 %v1551, 4294901760
        %v1553 = vsub.f32 %v1551, %v1552
        %v1554 = vand.u32 %v1553, 4294901760
        %1555 = vmatpush1.msra.mxu0 %v1554
        %1556 = vmatprep.subr.mxu0 0.0
        %v1557 = vand.u32 %v356, 4294901760
        %v1558 = vsub.f32 %v356, %v1557
        %v1559 = vand.u32 %v1558, 4294901760
        %v1560 = vsub.f32 %v1558, %v1559
        %v1561 = vand.u32 %v1560, 4294901760
        %1562 = vmatpush1.msra.mxu0 %v1561
        %1563 = vmatprep.subr.mxu0 0.0
        %v1564 = vand.u32 %v357, 4294901760
        %v1565 = vsub.f32 %v357, %v1564
        %v1566 = vand.u32 %v1565, 4294901760
        %v1567 = vsub.f32 %v1565, %v1566
        %v1568 = vand.u32 %v1567, 4294901760
        %1569 = vmatpush1.msra.mxu0 %v1568
        %1570 = vmatprep.subr.mxu0 0.0
        %v1571 = vand.u32 %v358, 4294901760
        %v1572 = vsub.f32 %v358, %v1571
        %v1573 = vand.u32 %v1572, 4294901760
        %v1574 = vsub.f32 %v1572, %v1573
        %v1575 = vand.u32 %v1574, 4294901760
        %1576 = vmatpush1.msra.mxu0 %v1575
        %1577 = vmatprep.subr.mxu0 0.0
        %v1578 = vand.u32 %v359, 4294901760
        %v1579 = vsub.f32 %v359, %v1578
        %v1580 = vand.u32 %v1579, 4294901760
        %v1581 = vsub.f32 %v1579, %v1580
        %v1582 = vand.u32 %v1581, 4294901760
        %1583 = vmatpush1.msra.mxu0 %v1582
        %1584 = vmatprep.subr.mxu0 0.0
        %v1585 = vand.u32 %v360, 4294901760
        %v1586 = vsub.f32 %v360, %v1585
        %v1587 = vand.u32 %v1586, 4294901760
        %v1588 = vsub.f32 %v1586, %v1587
        %v1589 = vand.u32 %v1588, 4294901760
        %1590 = vmatpush1.msra.mxu0 %v1589
        %1591 = vmatprep.subr.mxu0 0.0
        %v1592 = vand.u32 %v361, 4294901760
        %v1593 = vsub.f32 %v361, %v1592
        %v1594 = vand.u32 %v1593, 4294901760
        %v1595 = vsub.f32 %v1593, %v1594
        %v1596 = vand.u32 %v1595, 4294901760
        %1597 = vmatpush1.msra.mxu0 %v1596
        %1598 = vmatprep.subr.mxu0 0.0
        %v1599 = vand.u32 %v362, 4294901760
        %v1600 = vsub.f32 %v362, %v1599
        %v1601 = vand.u32 %v1600, 4294901760
        %v1602 = vsub.f32 %v1600, %v1601
        %v1603 = vand.u32 %v1602, 4294901760
        %1604 = vmatpush1.msra.mxu0 %v1603
        %1605 = vmatprep.subr.mxu0 0.0
        %v1606 = vand.u32 %v363, 4294901760
        %v1607 = vsub.f32 %v363, %v1606
        %v1608 = vand.u32 %v1607, 4294901760
        %v1609 = vsub.f32 %v1607, %v1608
        %v1610 = vand.u32 %v1609, 4294901760
        %1611 = vmatpush1.msra.mxu0 %v1610
        %v1612 = vand.u32 %v331, 4294901760
        %1613 = vmatprep.mubr.f32.mxu0 %v1612
        %v1614 = vand.u32 %v330, 4294901760
        %1615 = vmatmul.mubr.f32.gmra.mrb[0].mxu0 %v1614
        %v1616 = vpop.f32.mrb[0].mxu0
        %v1617 = vadd.f32 %v1385, %v1616
        %v1618 = vpop.f32.mrb[0].mxu0
        %1619 = vdwg.mxu0
        %1620 = vmatprep.subr.mxu0 0.0
        %v1621 = vand.u32 %v332, 4294901760
        %v1622 = vsub.f32 %v332, %v1621
        %1623 = vmatpush1.msra.mxu0 %v1622
        %1624 = vmatprep.subr.mxu0 0.0
        %v1625 = vand.u32 %v333, 4294901760
        %v1626 = vsub.f32 %v333, %v1625
        %1627 = vmatpush1.msra.mxu0 %v1626
        %1628 = vmatprep.subr.mxu0 0.0
        %v1629 = vand.u32 %v334, 4294901760
        %v1630 = vsub.f32 %v334, %v1629
        %1631 = vmatpush1.msra.mxu0 %v1630
        %1632 = vmatprep.subr.mxu0 0.0
        %v1633 = vand.u32 %v335, 4294901760
        %v1634 = vsub.f32 %v335, %v1633
        %1635 = vmatpush1.msra.mxu0 %v1634
        %1636 = vmatprep.subr.mxu0 0.0
        %v1637 = vand.u32 %v336, 4294901760
        %v1638 = vsub.f32 %v336, %v1637
        %1639 = vmatpush1.msra.mxu0 %v1638
        %1640 = vmatprep.subr.mxu0 0.0
        %v1641 = vand.u32 %v337, 4294901760
        %v1642 = vsub.f32 %v337, %v1641
        %1643 = vmatpush1.msra.mxu0 %v1642
        %1644 = vmatprep.subr.mxu0 0.0
        %v1645 = vand.u32 %v338, 4294901760
        %v1646 = vsub.f32 %v338, %v1645
        %1647 = vmatpush1.msra.mxu0 %v1646
        %1648 = vmatprep.subr.mxu0 0.0
        %v1649 = vand.u32 %v339, 4294901760
        %v1650 = vsub.f32 %v339, %v1649
        %1651 = vmatpush1.msra.mxu0 %v1650
        %1652 = vmatprep.subr.mxu0 0.0
        %v1653 = vand.u32 %v340, 4294901760
        %v1654 = vsub.f32 %v340, %v1653
        %1655 = vmatpush1.msra.mxu0 %v1654
        %1656 = vmatprep.subr.mxu0 0.0
        %v1657 = vand.u32 %v341, 4294901760
        %v1658 = vsub.f32 %v341, %v1657
        %1659 = vmatpush1.msra.mxu0 %v1658
        %1660 = vmatprep.subr.mxu0 0.0
        %v1661 = vand.u32 %v342, 4294901760
        %v1662 = vsub.f32 %v342, %v1661
        %1663 = vmatpush1.msra.mxu0 %v1662
        %1664 = vmatprep.subr.mxu0 0.0
        %v1665 = vand.u32 %v343, 4294901760
        %v1666 = vsub.f32 %v343, %v1665
        %1667 = vmatpush1.msra.mxu0 %v1666
        %1668 = vmatprep.subr.mxu0 0.0
        %v1669 = vand.u32 %v344, 4294901760
        %v1670 = vsub.f32 %v344, %v1669
        %1671 = vmatpush1.msra.mxu0 %v1670
        %1672 = vmatprep.subr.mxu0 0.0
        %v1673 = vand.u32 %v345, 4294901760
        %v1674 = vsub.f32 %v345, %v1673
        %1675 = vmatpush1.msra.mxu0 %v1674
        %1676 = vmatprep.subr.mxu0 0.0
        %v1677 = vand.u32 %v346, 4294901760
        %v1678 = vsub.f32 %v346, %v1677
        %1679 = vmatpush1.msra.mxu0 %v1678
        %1680 = vmatprep.subr.mxu0 0.0
        %v1681 = vand.u32 %v347, 4294901760
        %v1682 = vsub.f32 %v347, %v1681
        %1683 = vmatpush1.msra.mxu0 %v1682
        %1684 = vmatprep.subr.mxu0 0.0
        %v1685 = vand.u32 %v348, 4294901760
        %v1686 = vsub.f32 %v348, %v1685
        %1687 = vmatpush1.msra.mxu0 %v1686
        %1688 = vmatprep.subr.mxu0 0.0
        %v1689 = vand.u32 %v349, 4294901760
        %v1690 = vsub.f32 %v349, %v1689
        %1691 = vmatpush1.msra.mxu0 %v1690
        %1692 = vmatprep.subr.mxu0 0.0
        %v1693 = vand.u32 %v350, 4294901760
        %v1694 = vsub.f32 %v350, %v1693
        %1695 = vmatpush1.msra.mxu0 %v1694
        %1696 = vmatprep.subr.mxu0 0.0
        %v1697 = vand.u32 %v351, 4294901760
        %v1698 = vsub.f32 %v351, %v1697
        %1699 = vmatpush1.msra.mxu0 %v1698
        %1700 = vmatprep.subr.mxu0 0.0
        %v1701 = vand.u32 %v352, 4294901760
        %v1702 = vsub.f32 %v352, %v1701
        %1703 = vmatpush1.msra.mxu0 %v1702
        %1704 = vmatprep.subr.mxu0 0.0
        %v1705 = vand.u32 %v353, 4294901760
        %v1706 = vsub.f32 %v353, %v1705
        %1707 = vmatpush1.msra.mxu0 %v1706
        %1708 = vmatprep.subr.mxu0 0.0
        %v1709 = vand.u32 %v354, 4294901760
        %v1710 = vsub.f32 %v354, %v1709
        %1711 = vmatpush1.msra.mxu0 %v1710
        %1712 = vmatprep.subr.mxu0 0.0
        %v1713 = vand.u32 %v355, 4294901760
        %v1714 = vsub.f32 %v355, %v1713
        %1715 = vmatpush1.msra.mxu0 %v1714
        %1716 = vmatprep.subr.mxu0 0.0
        %v1717 = vand.u32 %v356, 4294901760
        %v1718 = vsub.f32 %v356, %v1717
        %1719 = vmatpush1.msra.mxu0 %v1718
        %1720 = vmatprep.subr.mxu0 0.0
        %v1721 = vand.u32 %v357, 4294901760
        %v1722 = vsub.f32 %v357, %v1721
        %1723 = vmatpush1.msra.mxu0 %v1722
        %1724 = vmatprep.subr.mxu0 0.0
        %v1725 = vand.u32 %v358, 4294901760
        %v1726 = vsub.f32 %v358, %v1725
        %1727 = vmatpush1.msra.mxu0 %v1726
        %1728 = vmatprep.subr.mxu0 0.0
        %v1729 = vand.u32 %v359, 4294901760
        %v1730 = vsub.f32 %v359, %v1729
        %1731 = vmatpush1.msra.mxu0 %v1730
        %1732 = vmatprep.subr.mxu0 0.0
        %v1733 = vand.u32 %v360, 4294901760
        %v1734 = vsub.f32 %v360, %v1733
        %1735 = vmatpush1.msra.mxu0 %v1734
        %1736 = vmatprep.subr.mxu0 0.0
        %v1737 = vand.u32 %v361, 4294901760
        %v1738 = vsub.f32 %v361, %v1737
        %1739 = vmatpush1.msra.mxu0 %v1738
        %1740 = vmatprep.subr.mxu0 0.0
        %v1741 = vand.u32 %v362, 4294901760
        %v1742 = vsub.f32 %v362, %v1741
        %1743 = vmatpush1.msra.mxu0 %v1742
        %1744 = vmatprep.subr.mxu0 0.0
        %v1745 = vand.u32 %v363, 4294901760
        %v1746 = vsub.f32 %v363, %v1745
        %1747 = vmatpush1.msra.mxu0 %v1746
        %v1748 = vand.u32 %v331, 4294901760
        %v1749 = vsub.f32 %v331, %v1748
        %1750 = vmatprep.mubr.f32.mxu0 %v1749
        %v1751 = vand.u32 %v330, 4294901760
        %v1752 = vsub.f32 %v330, %v1751
        %1753 = vmatmul.mubr.f32.gmra.mrb[0].mxu0 %v1752
        %v1754 = vpop.f32.mrb[0].mxu0
        %v1755 = vadd.f32 %v1617, %v1754
        %v1756 = vpop.f32.mrb[0].mxu0
        %1757 = vdwg.mxu0
        %1758 = vmatprep.subr.mxu0 0.0
        %v1759 = vand.u32 %v332, 4294901760
        %1760 = vmatpush1.msra.mxu0 %v1759
        %1761 = vmatprep.subr.mxu0 0.0
        %v1762 = vand.u32 %v333, 4294901760
        %1763 = vmatpush1.msra.mxu0 %v1762
        %1764 = vmatprep.subr.mxu0 0.0
        %v1765 = vand.u32 %v334, 4294901760
        %1766 = vmatpush1.msra.mxu0 %v1765
        %1767 = vmatprep.subr.mxu0 0.0
        %v1768 = vand.u32 %v335, 4294901760
        %1769 = vmatpush1.msra.mxu0 %v1768
        %1770 = vmatprep.subr.mxu0 0.0
        %v1771 = vand.u32 %v336, 4294901760
        %1772 = vmatpush1.msra.mxu0 %v1771
        %1773 = vmatprep.subr.mxu0 0.0
        %v1774 = vand.u32 %v337, 4294901760
        %1775 = vmatpush1.msra.mxu0 %v1774
        %1776 = vmatprep.subr.mxu0 0.0
        %v1777 = vand.u32 %v338, 4294901760
        %1778 = vmatpush1.msra.mxu0 %v1777
        %1779 = vmatprep.subr.mxu0 0.0
        %v1780 = vand.u32 %v339, 4294901760
        %1781 = vmatpush1.msra.mxu0 %v1780
        %1782 = vmatprep.subr.mxu0 0.0
        %v1783 = vand.u32 %v340, 4294901760
        %1784 = vmatpush1.msra.mxu0 %v1783
        %1785 = vmatprep.subr.mxu0 0.0
        %v1786 = vand.u32 %v341, 4294901760
        %1787 = vmatpush1.msra.mxu0 %v1786
        %1788 = vmatprep.subr.mxu0 0.0
        %v1789 = vand.u32 %v342, 4294901760
        %1790 = vmatpush1.msra.mxu0 %v1789
        %1791 = vmatprep.subr.mxu0 0.0
        %v1792 = vand.u32 %v343, 4294901760
        %1793 = vmatpush1.msra.mxu0 %v1792
        %1794 = vmatprep.subr.mxu0 0.0
        %v1795 = vand.u32 %v344, 4294901760
        %1796 = vmatpush1.msra.mxu0 %v1795
        %1797 = vmatprep.subr.mxu0 0.0
        %v1798 = vand.u32 %v345, 4294901760
        %1799 = vmatpush1.msra.mxu0 %v1798
        %1800 = vmatprep.subr.mxu0 0.0
        %v1801 = vand.u32 %v346, 4294901760
        %1802 = vmatpush1.msra.mxu0 %v1801
        %1803 = vmatprep.subr.mxu0 0.0
        %v1804 = vand.u32 %v347, 4294901760
        %1805 = vmatpush1.msra.mxu0 %v1804
        %1806 = vmatprep.subr.mxu0 0.0
        %v1807 = vand.u32 %v348, 4294901760
        %1808 = vmatpush1.msra.mxu0 %v1807
        %1809 = vmatprep.subr.mxu0 0.0
        %v1810 = vand.u32 %v349, 4294901760
        %1811 = vmatpush1.msra.mxu0 %v1810
        %1812 = vmatprep.subr.mxu0 0.0
        %v1813 = vand.u32 %v350, 4294901760
        %1814 = vmatpush1.msra.mxu0 %v1813
        %1815 = vmatprep.subr.mxu0 0.0
        %v1816 = vand.u32 %v351, 4294901760
        %1817 = vmatpush1.msra.mxu0 %v1816
        %1818 = vmatprep.subr.mxu0 0.0
        %v1819 = vand.u32 %v352, 4294901760
        %1820 = vmatpush1.msra.mxu0 %v1819
        %1821 = vmatprep.subr.mxu0 0.0
        %v1822 = vand.u32 %v353, 4294901760
        %1823 = vmatpush1.msra.mxu0 %v1822
        %1824 = vmatprep.subr.mxu0 0.0
        %v1825 = vand.u32 %v354, 4294901760
        %1826 = vmatpush1.msra.mxu0 %v1825
        %1827 = vmatprep.subr.mxu0 0.0
        %v1828 = vand.u32 %v355, 4294901760
        %1829 = vmatpush1.msra.mxu0 %v1828
        %1830 = vmatprep.subr.mxu0 0.0
        %v1831 = vand.u32 %v356, 4294901760
        %1832 = vmatpush1.msra.mxu0 %v1831
        %1833 = vmatprep.subr.mxu0 0.0
        %v1834 = vand.u32 %v357, 4294901760
        %1835 = vmatpush1.msra.mxu0 %v1834
        %1836 = vmatprep.subr.mxu0 0.0
        %v1837 = vand.u32 %v358, 4294901760
        %1838 = vmatpush1.msra.mxu0 %v1837
        %1839 = vmatprep.subr.mxu0 0.0
        %v1840 = vand.u32 %v359, 4294901760
        %1841 = vmatpush1.msra.mxu0 %v1840
        %1842 = vmatprep.subr.mxu0 0.0
        %v1843 = vand.u32 %v360, 4294901760
        %1844 = vmatpush1.msra.mxu0 %v1843
        %1845 = vmatprep.subr.mxu0 0.0
        %v1846 = vand.u32 %v361, 4294901760
        %1847 = vmatpush1.msra.mxu0 %v1846
        %1848 = vmatprep.subr.mxu0 0.0
        %v1849 = vand.u32 %v362, 4294901760
        %1850 = vmatpush1.msra.mxu0 %v1849
        %1851 = vmatprep.subr.mxu0 0.0
        %v1852 = vand.u32 %v363, 4294901760
        %1853 = vmatpush1.msra.mxu0 %v1852
        %v1854 = vand.u32 %v331, 4294901760
        %v1855 = vsub.f32 %v331, %v1854
        %v1856 = vand.u32 %v1855, 4294901760
        %1857 = vmatprep.mubr.f32.mxu0 %v1856
        %v1858 = vand.u32 %v330, 4294901760
        %v1859 = vsub.f32 %v330, %v1858
        %v1860 = vand.u32 %v1859, 4294901760
        %1861 = vmatmul.mubr.f32.gmra.mrb[0].mxu0 %v1860
        %v1862 = vpop.f32.mrb[0].mxu0
        %v1863 = vadd.f32 %v1755, %v1862
        %v1864 = vpop.f32.mrb[0].mxu0
        %1865 = vdwg.mxu0
        %1866 = vmatprep.subr.mxu0 0.0
        %v1867 = vand.u32 %v332, 4294901760
        %v1868 = vsub.f32 %v332, %v1867
        %v1869 = vand.u32 %v1868, 4294901760
        %1870 = vmatpush1.msra.mxu0 %v1869
        %1871 = vmatprep.subr.mxu0 0.0
        %v1872 = vand.u32 %v333, 4294901760
        %v1873 = vsub.f32 %v333, %v1872
        %v1874 = vand.u32 %v1873, 4294901760
        %1875 = vmatpush1.msra.mxu0 %v1874
        %1876 = vmatprep.subr.mxu0 0.0
        %v1877 = vand.u32 %v334, 4294901760
        %v1878 = vsub.f32 %v334, %v1877
        %v1879 = vand.u32 %v1878, 4294901760
        %1880 = vmatpush1.msra.mxu0 %v1879
        %1881 = vmatprep.subr.mxu0 0.0
        %v1882 = vand.u32 %v335, 4294901760
        %v1883 = vsub.f32 %v335, %v1882
        %v1884 = vand.u32 %v1883, 4294901760
        %1885 = vmatpush1.msra.mxu0 %v1884
        %1886 = vmatprep.subr.mxu0 0.0
        %v1887 = vand.u32 %v336, 4294901760
        %v1888 = vsub.f32 %v336, %v1887
        %v1889 = vand.u32 %v1888, 4294901760
        %1890 = vmatpush1.msra.mxu0 %v1889
        %1891 = vmatprep.subr.mxu0 0.0
        %v1892 = vand.u32 %v337, 4294901760
        %v1893 = vsub.f32 %v337, %v1892
        %v1894 = vand.u32 %v1893, 4294901760
        %1895 = vmatpush1.msra.mxu0 %v1894
        %1896 = vmatprep.subr.mxu0 0.0
        %v1897 = vand.u32 %v338, 4294901760
        %v1898 = vsub.f32 %v338, %v1897
        %v1899 = vand.u32 %v1898, 4294901760
        %1900 = vmatpush1.msra.mxu0 %v1899
        %1901 = vmatprep.subr.mxu0 0.0
        %v1902 = vand.u32 %v339, 4294901760
        %v1903 = vsub.f32 %v339, %v1902
        %v1904 = vand.u32 %v1903, 4294901760
        %1905 = vmatpush1.msra.mxu0 %v1904
        %1906 = vmatprep.subr.mxu0 0.0
        %v1907 = vand.u32 %v340, 4294901760
        %v1908 = vsub.f32 %v340, %v1907
        %v1909 = vand.u32 %v1908, 4294901760
        %1910 = vmatpush1.msra.mxu0 %v1909
        %1911 = vmatprep.subr.mxu0 0.0
        %v1912 = vand.u32 %v341, 4294901760
        %v1913 = vsub.f32 %v341, %v1912
        %v1914 = vand.u32 %v1913, 4294901760
        %1915 = vmatpush1.msra.mxu0 %v1914
        %1916 = vmatprep.subr.mxu0 0.0
        %v1917 = vand.u32 %v342, 4294901760
        %v1918 = vsub.f32 %v342, %v1917
        %v1919 = vand.u32 %v1918, 4294901760
        %1920 = vmatpush1.msra.mxu0 %v1919
        %1921 = vmatprep.subr.mxu0 0.0
        %v1922 = vand.u32 %v343, 4294901760
        %v1923 = vsub.f32 %v343, %v1922
        %v1924 = vand.u32 %v1923, 4294901760
        %1925 = vmatpush1.msra.mxu0 %v1924
        %1926 = vmatprep.subr.mxu0 0.0
        %v1927 = vand.u32 %v344, 4294901760
        %v1928 = vsub.f32 %v344, %v1927
        %v1929 = vand.u32 %v1928, 4294901760
        %1930 = vmatpush1.msra.mxu0 %v1929
        %1931 = vmatprep.subr.mxu0 0.0
        %v1932 = vand.u32 %v345, 4294901760
        %v1933 = vsub.f32 %v345, %v1932
        %v1934 = vand.u32 %v1933, 4294901760
        %1935 = vmatpush1.msra.mxu0 %v1934
        %1936 = vmatprep.subr.mxu0 0.0
        %v1937 = vand.u32 %v346, 4294901760
        %v1938 = vsub.f32 %v346, %v1937
        %v1939 = vand.u32 %v1938, 4294901760
        %1940 = vmatpush1.msra.mxu0 %v1939
        %1941 = vmatprep.subr.mxu0 0.0
        %v1942 = vand.u32 %v347, 4294901760
        %v1943 = vsub.f32 %v347, %v1942
        %v1944 = vand.u32 %v1943, 4294901760
        %1945 = vmatpush1.msra.mxu0 %v1944
        %1946 = vmatprep.subr.mxu0 0.0
        %v1947 = vand.u32 %v348, 4294901760
        %v1948 = vsub.f32 %v348, %v1947
        %v1949 = vand.u32 %v1948, 4294901760
        %1950 = vmatpush1.msra.mxu0 %v1949
        %1951 = vmatprep.subr.mxu0 0.0
        %v1952 = vand.u32 %v349, 4294901760
        %v1953 = vsub.f32 %v349, %v1952
        %v1954 = vand.u32 %v1953, 4294901760
        %1955 = vmatpush1.msra.mxu0 %v1954
        %1956 = vmatprep.subr.mxu0 0.0
        %v1957 = vand.u32 %v350, 4294901760
        %v1958 = vsub.f32 %v350, %v1957
        %v1959 = vand.u32 %v1958, 4294901760
        %1960 = vmatpush1.msra.mxu0 %v1959
        %1961 = vmatprep.subr.mxu0 0.0
        %v1962 = vand.u32 %v351, 4294901760
        %v1963 = vsub.f32 %v351, %v1962
        %v1964 = vand.u32 %v1963, 4294901760
        %1965 = vmatpush1.msra.mxu0 %v1964
        %1966 = vmatprep.subr.mxu0 0.0
        %v1967 = vand.u32 %v352, 4294901760
        %v1968 = vsub.f32 %v352, %v1967
        %v1969 = vand.u32 %v1968, 4294901760
        %1970 = vmatpush1.msra.mxu0 %v1969
        %1971 = vmatprep.subr.mxu0 0.0
        %v1972 = vand.u32 %v353, 4294901760
        %v1973 = vsub.f32 %v353, %v1972
        %v1974 = vand.u32 %v1973, 4294901760
        %1975 = vmatpush1.msra.mxu0 %v1974
        %1976 = vmatprep.subr.mxu0 0.0
        %v1977 = vand.u32 %v354, 4294901760
        %v1978 = vsub.f32 %v354, %v1977
        %v1979 = vand.u32 %v1978, 4294901760
        %1980 = vmatpush1.msra.mxu0 %v1979
        %1981 = vmatprep.subr.mxu0 0.0
        %v1982 = vand.u32 %v355, 4294901760
        %v1983 = vsub.f32 %v355, %v1982
        %v1984 = vand.u32 %v1983, 4294901760
        %1985 = vmatpush1.msra.mxu0 %v1984
        %1986 = vmatprep.subr.mxu0 0.0
        %v1987 = vand.u32 %v356, 4294901760
        %v1988 = vsub.f32 %v356, %v1987
        %v1989 = vand.u32 %v1988, 4294901760
        %1990 = vmatpush1.msra.mxu0 %v1989
        %1991 = vmatprep.subr.mxu0 0.0
        %v1992 = vand.u32 %v357, 4294901760
        %v1993 = vsub.f32 %v357, %v1992
        %v1994 = vand.u32 %v1993, 4294901760
        %1995 = vmatpush1.msra.mxu0 %v1994
        %1996 = vmatprep.subr.mxu0 0.0
        %v1997 = vand.u32 %v358, 4294901760
        %v1998 = vsub.f32 %v358, %v1997
        %v1999 = vand.u32 %v1998, 4294901760
        %2000 = vmatpush1.msra.mxu0 %v1999
        %2001 = vmatprep.subr.mxu0 0.0
        %v2002 = vand.u32 %v359, 4294901760
        %v2003 = vsub.f32 %v359, %v2002
        %v2004 = vand.u32 %v2003, 4294901760
        %2005 = vmatpush1.msra.mxu0 %v2004
        %2006 = vmatprep.subr.mxu0 0.0
        %v2007 = vand.u32 %v360, 4294901760
        %v2008 = vsub.f32 %v360, %v2007
        %v2009 = vand.u32 %v2008, 4294901760
        %2010 = vmatpush1.msra.mxu0 %v2009
        %2011 = vmatprep.subr.mxu0 0.0
        %v2012 = vand.u32 %v361, 4294901760
        %v2013 = vsub.f32 %v361, %v2012
        %v2014 = vand.u32 %v2013, 4294901760
        %2015 = vmatpush1.msra.mxu0 %v2014
        %2016 = vmatprep.subr.mxu0 0.0
        %v2017 = vand.u32 %v362, 4294901760
        %v2018 = vsub.f32 %v362, %v2017
        %v2019 = vand.u32 %v2018, 4294901760
        %2020 = vmatpush1.msra.mxu0 %v2019
        %2021 = vmatprep.subr.mxu0 0.0
        %v2022 = vand.u32 %v363, 4294901760
        %v2023 = vsub.f32 %v363, %v2022
        %v2024 = vand.u32 %v2023, 4294901760
        %2025 = vmatpush1.msra.mxu0 %v2024
        %v2026 = vand.u32 %v331, 4294901760
        %2027 = vmatprep.mubr.f32.mxu0 %v2026
        %v2028 = vand.u32 %v330, 4294901760
        %2029 = vmatmul.mubr.f32.gmra.mrb[0].mxu0 %v2028
        %v2030 = vpop.f32.mrb[0].mxu0
        %v2031 = vadd.f32 %v1863, %v2030
        %v2032 = vpop.f32.mrb[0].mxu0
        %2033 = vdwg.mxu0
        %2034 = vmatprep.subr.mxu0 0.0
        %v2035 = vand.u32 %v332, 4294901760
        %2036 = vmatpush1.msra.mxu0 %v2035
        %2037 = vmatprep.subr.mxu0 0.0
        %v2038 = vand.u32 %v333, 4294901760
        %2039 = vmatpush1.msra.mxu0 %v2038
        %2040 = vmatprep.subr.mxu0 0.0
        %v2041 = vand.u32 %v334, 4294901760
        %2042 = vmatpush1.msra.mxu0 %v2041
        %2043 = vmatprep.subr.mxu0 0.0
        %v2044 = vand.u32 %v335, 4294901760
        %2045 = vmatpush1.msra.mxu0 %v2044
        %2046 = vmatprep.subr.mxu0 0.0
        %v2047 = vand.u32 %v336, 4294901760
        %2048 = vmatpush1.msra.mxu0 %v2047
        %2049 = vmatprep.subr.mxu0 0.0
        %v2050 = vand.u32 %v337, 4294901760
        %2051 = vmatpush1.msra.mxu0 %v2050
        %2052 = vmatprep.subr.mxu0 0.0
        %v2053 = vand.u32 %v338, 4294901760
        %2054 = vmatpush1.msra.mxu0 %v2053
        %2055 = vmatprep.subr.mxu0 0.0
        %v2056 = vand.u32 %v339, 4294901760
        %2057 = vmatpush1.msra.mxu0 %v2056
        %2058 = vmatprep.subr.mxu0 0.0
        %v2059 = vand.u32 %v340, 4294901760
        %2060 = vmatpush1.msra.mxu0 %v2059
        %2061 = vmatprep.subr.mxu0 0.0
        %v2062 = vand.u32 %v341, 4294901760
        %2063 = vmatpush1.msra.mxu0 %v2062
        %2064 = vmatprep.subr.mxu0 0.0
        %v2065 = vand.u32 %v342, 4294901760
        %2066 = vmatpush1.msra.mxu0 %v2065
        %2067 = vmatprep.subr.mxu0 0.0
        %v2068 = vand.u32 %v343, 4294901760
        %2069 = vmatpush1.msra.mxu0 %v2068
        %2070 = vmatprep.subr.mxu0 0.0
        %v2071 = vand.u32 %v344, 4294901760
        %2072 = vmatpush1.msra.mxu0 %v2071
        %2073 = vmatprep.subr.mxu0 0.0
        %v2074 = vand.u32 %v345, 4294901760
        %2075 = vmatpush1.msra.mxu0 %v2074
        %2076 = vmatprep.subr.mxu0 0.0
        %v2077 = vand.u32 %v346, 4294901760
        %2078 = vmatpush1.msra.mxu0 %v2077
        %2079 = vmatprep.subr.mxu0 0.0
        %v2080 = vand.u32 %v347, 4294901760
        %2081 = vmatpush1.msra.mxu0 %v2080
        %2082 = vmatprep.subr.mxu0 0.0
        %v2083 = vand.u32 %v348, 4294901760
        %2084 = vmatpush1.msra.mxu0 %v2083
        %2085 = vmatprep.subr.mxu0 0.0
        %v2086 = vand.u32 %v349, 4294901760
        %2087 = vmatpush1.msra.mxu0 %v2086
        %2088 = vmatprep.subr.mxu0 0.0
        %v2089 = vand.u32 %v350, 4294901760
        %2090 = vmatpush1.msra.mxu0 %v2089
        %2091 = vmatprep.subr.mxu0 0.0
        %v2092 = vand.u32 %v351, 4294901760
        %2093 = vmatpush1.msra.mxu0 %v2092
        %2094 = vmatprep.subr.mxu0 0.0
        %v2095 = vand.u32 %v352, 4294901760
        %2096 = vmatpush1.msra.mxu0 %v2095
        %2097 = vmatprep.subr.mxu0 0.0
        %v2098 = vand.u32 %v353, 4294901760
        %2099 = vmatpush1.msra.mxu0 %v2098
        %2100 = vmatprep.subr.mxu0 0.0
        %v2101 = vand.u32 %v354, 4294901760
        %2102 = vmatpush1.msra.mxu0 %v2101
        %2103 = vmatprep.subr.mxu0 0.0
        %v2104 = vand.u32 %v355, 4294901760
        %2105 = vmatpush1.msra.mxu0 %v2104
        %2106 = vmatprep.subr.mxu0 0.0
        %v2107 = vand.u32 %v356, 4294901760
        %2108 = vmatpush1.msra.mxu0 %v2107
        %2109 = vmatprep.subr.mxu0 0.0
        %v2110 = vand.u32 %v357, 4294901760
        %2111 = vmatpush1.msra.mxu0 %v2110
        %2112 = vmatprep.subr.mxu0 0.0
        %v2113 = vand.u32 %v358, 4294901760
        %2114 = vmatpush1.msra.mxu0 %v2113
        %2115 = vmatprep.subr.mxu0 0.0
        %v2116 = vand.u32 %v359, 4294901760
        %2117 = vmatpush1.msra.mxu0 %v2116
        %2118 = vmatprep.subr.mxu0 0.0
        %v2119 = vand.u32 %v360, 4294901760
        %2120 = vmatpush1.msra.mxu0 %v2119
        %2121 = vmatprep.subr.mxu0 0.0
        %v2122 = vand.u32 %v361, 4294901760
        %2123 = vmatpush1.msra.mxu0 %v2122
        %2124 = vmatprep.subr.mxu0 0.0
        %v2125 = vand.u32 %v362, 4294901760
        %2126 = vmatpush1.msra.mxu0 %v2125
        %2127 = vmatprep.subr.mxu0 0.0
        %v2128 = vand.u32 %v363, 4294901760
        %2129 = vmatpush1.msra.mxu0 %v2128
        %v2130 = vand.u32 %v331, 4294901760
        %2131 = vmatprep.mubr.f32.mxu0 %v2130
        %v2132 = vand.u32 %v330, 4294901760
        %2133 = vmatmul.mubr.f32.gmra.mrb[0].mxu0 %v2132
        %v2134 = vpop.f32.mrb[0].mxu0
        %v2135 = vadd.f32 %v2031, %v2134
        %v2136 = vpop.f32.mrb[0].mxu0
        %2137 = vdwg.mxu0
        %v2138 = vld [vmem:[#allocation2] sm:$0xfc]
        %v2139 = vld [vmem:[#allocation2 + $0x8] sm:$0xfc]
        %v2140 = vld [vmem:[#allocation2 + $0x10] sm:$0x3]
        %v2141 = vld [vmem:[#allocation2 + $0x18] sm:$0x3]
        %s2142 = scalar_lea.vmem [#allocation8], 512
        %v2143 = vld [vmem:[%s2142] sm:$0xff]
        %v2144 = vld [vmem:[%s2142 + $0x8] sm:$0xff]
        %v2145 = vld [vmem:[%s2142 + $0x10] sm:$0xff]
        %v2146 = vld [vmem:[%s2142 + $0x18] sm:$0xff]
        %v2147 = vld [vmem:[%s2142 + $0x20] sm:$0xff]
        %v2148 = vld [vmem:[%s2142 + $0x28] sm:$0xff]
        %v2149 = vld [vmem:[%s2142 + $0x30] sm:$0xff]
        %v2150 = vld [vmem:[%s2142 + $0x38] sm:$0xff]
        %v2151 = vld [vmem:[%s2142 + $0x40] sm:$0xff]
        %v2152 = vld [vmem:[%s2142 + $0x48] sm:$0xff]
        %v2153 = vld [vmem:[%s2142 + $0x50] sm:$0xff]
        %v2154 = vld [vmem:[%s2142 + $0x58] sm:$0xff]
        %v2155 = vld [vmem:[%s2142 + $0x60] sm:$0xff]
        %v2156 = vld [vmem:[%s2142 + $0x68] sm:$0xff]
        %v2157 = vld [vmem:[%s2142 + $0x70] sm:$0xff]
        %v2158 = vld [vmem:[%s2142 + $0x78] sm:$0xff]
        %v2159 = vld [vmem:[%s2142 + $0x80] sm:$0xff]
        %v2160 = vld [vmem:[%s2142 + $0x88] sm:$0xff]
        %v2161 = vld [vmem:[%s2142 + $0x90] sm:$0xff]
        %v2162 = vld [vmem:[%s2142 + $0x98] sm:$0xff]
        %v2163 = vld [vmem:[%s2142 + $0xa0] sm:$0xff]
        %v2164 = vld [vmem:[%s2142 + $0xa8] sm:$0xff]
        %v2165 = vld [vmem:[%s2142 + $0xb0] sm:$0xff]
        %v2166 = vld [vmem:[%s2142 + $0xb8] sm:$0xff]
        %v2167 = vld [vmem:[%s2142 + $0xc0] sm:$0xff]
        %v2168 = vld [vmem:[%s2142 + $0xc8] sm:$0xff]
        %v2169 = vld [vmem:[%s2142 + $0xd0] sm:$0xff]
        %v2170 = vld [vmem:[%s2142 + $0xd8] sm:$0xff]
        %v2171 = vld [vmem:[%s2142 + $0xe0] sm:$0xff]
        %v2172 = vld [vmem:[%s2142 + $0xe8] sm:$0xff]
        %v2173 = vld [vmem:[%s2142 + $0xf0] sm:$0xff]
        %v2174 = vld [vmem:[%s2142 + $0xf8] sm:$0xff]
        %vm2179 = vcmask 1045504
        %v2180 = vrot.slane %v2138, 2
        %v2181 = vrot.slane %v2140, 2
        %v2182 = vsel %vm2179, %v2180, %v2181
        %v2183 = vrot.slane %v2139, 2
        %v2184 = vrot.slane %v2141, 2
        %v2185 = vsel %vm2179, %v2183, %v2184
        %2188 = vmatprep.subr.mxu0 0.0
        %v2189 = vand.u32 %v2143, 4294901760
        %2190 = vmatpush1.msra.mxu0 %v2189
        %2191 = vmatprep.subr.mxu0 0.0
        %v2192 = vand.u32 %v2144, 4294901760
        %2193 = vmatpush1.msra.mxu0 %v2192
        %2194 = vmatprep.subr.mxu0 0.0
        %v2195 = vand.u32 %v2145, 4294901760
        %2196 = vmatpush1.msra.mxu0 %v2195
        %2197 = vmatprep.subr.mxu0 0.0
        %v2198 = vand.u32 %v2146, 4294901760
        %2199 = vmatpush1.msra.mxu0 %v2198
        %2200 = vmatprep.subr.mxu0 0.0
        %v2201 = vand.u32 %v2147, 4294901760
        %2202 = vmatpush1.msra.mxu0 %v2201
        %2203 = vmatprep.subr.mxu0 0.0
        %v2204 = vand.u32 %v2148, 4294901760
        %2205 = vmatpush1.msra.mxu0 %v2204
        %2206 = vmatprep.subr.mxu0 0.0
        %v2207 = vand.u32 %v2149, 4294901760
        %2208 = vmatpush1.msra.mxu0 %v2207
        %2209 = vmatprep.subr.mxu0 0.0
        %v2210 = vand.u32 %v2150, 4294901760
        %2211 = vmatpush1.msra.mxu0 %v2210
        %2212 = vmatprep.subr.mxu0 0.0
        %v2213 = vand.u32 %v2151, 4294901760
        %2214 = vmatpush1.msra.mxu0 %v2213
        %2215 = vmatprep.subr.mxu0 0.0
        %v2216 = vand.u32 %v2152, 4294901760
        %2217 = vmatpush1.msra.mxu0 %v2216
        %2218 = vmatprep.subr.mxu0 0.0
        %v2219 = vand.u32 %v2153, 4294901760
        %2220 = vmatpush1.msra.mxu0 %v2219
        %2221 = vmatprep.subr.mxu0 0.0
        %v2222 = vand.u32 %v2154, 4294901760
        %2223 = vmatpush1.msra.mxu0 %v2222
        %2224 = vmatprep.subr.mxu0 0.0
        %v2225 = vand.u32 %v2155, 4294901760
        %2226 = vmatpush1.msra.mxu0 %v2225
        %2227 = vmatprep.subr.mxu0 0.0
        %v2228 = vand.u32 %v2156, 4294901760
        %2229 = vmatpush1.msra.mxu0 %v2228
        %2230 = vmatprep.subr.mxu0 0.0
        %v2231 = vand.u32 %v2157, 4294901760
        %2232 = vmatpush1.msra.mxu0 %v2231
        %2233 = vmatprep.subr.mxu0 0.0
        %v2234 = vand.u32 %v2158, 4294901760
        %2235 = vmatpush1.msra.mxu0 %v2234
        %2236 = vmatprep.subr.mxu0 0.0
        %v2237 = vand.u32 %v2159, 4294901760
        %2238 = vmatpush1.msra.mxu0 %v2237
        %2239 = vmatprep.subr.mxu0 0.0
        %v2240 = vand.u32 %v2160, 4294901760
        %2241 = vmatpush1.msra.mxu0 %v2240
        %2242 = vmatprep.subr.mxu0 0.0
        %v2243 = vand.u32 %v2161, 4294901760
        %2244 = vmatpush1.msra.mxu0 %v2243
        %2245 = vmatprep.subr.mxu0 0.0
        %v2246 = vand.u32 %v2162, 4294901760
        %2247 = vmatpush1.msra.mxu0 %v2246
        %2248 = vmatprep.subr.mxu0 0.0
        %v2249 = vand.u32 %v2163, 4294901760
        %2250 = vmatpush1.msra.mxu0 %v2249
        %2251 = vmatprep.subr.mxu0 0.0
        %v2252 = vand.u32 %v2164, 4294901760
        %2253 = vmatpush1.msra.mxu0 %v2252
        %2254 = vmatprep.subr.mxu0 0.0
        %v2255 = vand.u32 %v2165, 4294901760
        %2256 = vmatpush1.msra.mxu0 %v2255
        %2257 = vmatprep.subr.mxu0 0.0
        %v2258 = vand.u32 %v2166, 4294901760
        %2259 = vmatpush1.msra.mxu0 %v2258
        %2260 = vmatprep.subr.mxu0 0.0
        %v2261 = vand.u32 %v2167, 4294901760
        %2262 = vmatpush1.msra.mxu0 %v2261
        %2263 = vmatprep.subr.mxu0 0.0
        %v2264 = vand.u32 %v2168, 4294901760
        %2265 = vmatpush1.msra.mxu0 %v2264
        %2266 = vmatprep.subr.mxu0 0.0
        %v2267 = vand.u32 %v2169, 4294901760
        %2268 = vmatpush1.msra.mxu0 %v2267
        %2269 = vmatprep.subr.mxu0 0.0
        %v2270 = vand.u32 %v2170, 4294901760
        %2271 = vmatpush1.msra.mxu0 %v2270
        %2272 = vmatprep.subr.mxu0 0.0
        %v2273 = vand.u32 %v2171, 4294901760
        %2274 = vmatpush1.msra.mxu0 %v2273
        %2275 = vmatprep.subr.mxu0 0.0
        %v2276 = vand.u32 %v2172, 4294901760
        %2277 = vmatpush1.msra.mxu0 %v2276
        %2278 = vmatprep.subr.mxu0 0.0
        %v2279 = vand.u32 %v2173, 4294901760
        %2280 = vmatpush1.msra.mxu0 %v2279
        %2281 = vmatprep.subr.mxu0 0.0
        %v2282 = vand.u32 %v2174, 4294901760
        %2283 = vmatpush1.msra.mxu0 %v2282
        %v2284 = vand.u32 %v2185, 4294901760
        %v2285 = vsub.f32 %v2185, %v2284
        %v2286 = vand.u32 %v2285, 4294901760
        %v2287 = vsub.f32 %v2285, %v2286
        %v2288 = vand.u32 %v2287, 4294901760
        %2289 = vmatprep.mubr.f32.mxu0 %v2288
        %v2290 = vand.u32 %v2182, 4294901760
        %v2291 = vsub.f32 %v2182, %v2290
        %v2292 = vand.u32 %v2291, 4294901760
        %v2293 = vsub.f32 %v2291, %v2292
        %v2294 = vand.u32 %v2293, 4294901760
        %2295 = vmatmul.mubr.f32.gmra.mrb[0].mxu0 %v2294
        %v2296 = vpop.f32.mrb[0].mxu0
        %v2297 = vadd.f32 0.0, %v2296
        %v2298 = vpop.f32.mrb[0].mxu0
        %2299 = vdwg.mxu0
        %2300 = vmatprep.subr.mxu0 0.0
        %v2301 = vand.u32 %v2143, 4294901760
        %v2302 = vsub.f32 %v2143, %v2301
        %v2303 = vand.u32 %v2302, 4294901760
        %v2304 = vsub.f32 %v2302, %v2303
        %v2305 = vand.u32 %v2304, 4294901760
        %2306 = vmatpush1.msra.mxu0 %v2305
        %2307 = vmatprep.subr.mxu0 0.0
        %v2308 = vand.u32 %v2144, 4294901760
        %v2309 = vsub.f32 %v2144, %v2308
        %v2310 = vand.u32 %v2309, 4294901760
        %v2311 = vsub.f32 %v2309, %v2310
        %v2312 = vand.u32 %v2311, 4294901760
        %2313 = vmatpush1.msra.mxu0 %v2312
        %2314 = vmatprep.subr.mxu0 0.0
        %v2315 = vand.u32 %v2145, 4294901760
        %v2316 = vsub.f32 %v2145, %v2315
        %v2317 = vand.u32 %v2316, 4294901760
        %v2318 = vsub.f32 %v2316, %v2317
        %v2319 = vand.u32 %v2318, 4294901760
        %2320 = vmatpush1.msra.mxu0 %v2319
        %2321 = vmatprep.subr.mxu0 0.0
        %v2322 = vand.u32 %v2146, 4294901760
        %v2323 = vsub.f32 %v2146, %v2322
        %v2324 = vand.u32 %v2323, 4294901760
        %v2325 = vsub.f32 %v2323, %v2324
        %v2326 = vand.u32 %v2325, 4294901760
        %2327 = vmatpush1.msra.mxu0 %v2326
        %2328 = vmatprep.subr.mxu0 0.0
        %v2329 = vand.u32 %v2147, 4294901760
        %v2330 = vsub.f32 %v2147, %v2329
        %v2331 = vand.u32 %v2330, 4294901760
        %v2332 = vsub.f32 %v2330, %v2331
        %v2333 = vand.u32 %v2332, 4294901760
        %2334 = vmatpush1.msra.mxu0 %v2333
        %2335 = vmatprep.subr.mxu0 0.0
        %v2336 = vand.u32 %v2148, 4294901760
        %v2337 = vsub.f32 %v2148, %v2336
        %v2338 = vand.u32 %v2337, 4294901760
        %v2339 = vsub.f32 %v2337, %v2338
        %v2340 = vand.u32 %v2339, 4294901760
        %2341 = vmatpush1.msra.mxu0 %v2340
        %2342 = vmatprep.subr.mxu0 0.0
        %v2343 = vand.u32 %v2149, 4294901760
        %v2344 = vsub.f32 %v2149, %v2343
        %v2345 = vand.u32 %v2344, 4294901760
        %v2346 = vsub.f32 %v2344, %v2345
        %v2347 = vand.u32 %v2346, 4294901760
        %2348 = vmatpush1.msra.mxu0 %v2347
        %2349 = vmatprep.subr.mxu0 0.0
        %v2350 = vand.u32 %v2150, 4294901760
        %v2351 = vsub.f32 %v2150, %v2350
        %v2352 = vand.u32 %v2351, 4294901760
        %v2353 = vsub.f32 %v2351, %v2352
        %v2354 = vand.u32 %v2353, 4294901760
        %2355 = vmatpush1.msra.mxu0 %v2354
        %2356 = vmatprep.subr.mxu0 0.0
        %v2357 = vand.u32 %v2151, 4294901760
        %v2358 = vsub.f32 %v2151, %v2357
        %v2359 = vand.u32 %v2358, 4294901760
        %v2360 = vsub.f32 %v2358, %v2359
        %v2361 = vand.u32 %v2360, 4294901760
        %2362 = vmatpush1.msra.mxu0 %v2361
        %2363 = vmatprep.subr.mxu0 0.0
        %v2364 = vand.u32 %v2152, 4294901760
        %v2365 = vsub.f32 %v2152, %v2364
        %v2366 = vand.u32 %v2365, 4294901760
        %v2367 = vsub.f32 %v2365, %v2366
        %v2368 = vand.u32 %v2367, 4294901760
        %2369 = vmatpush1.msra.mxu0 %v2368
        %2370 = vmatprep.subr.mxu0 0.0
        %v2371 = vand.u32 %v2153, 4294901760
        %v2372 = vsub.f32 %v2153, %v2371
        %v2373 = vand.u32 %v2372, 4294901760
        %v2374 = vsub.f32 %v2372, %v2373
        %v2375 = vand.u32 %v2374, 4294901760
        %2376 = vmatpush1.msra.mxu0 %v2375
        %2377 = vmatprep.subr.mxu0 0.0
        %v2378 = vand.u32 %v2154, 4294901760
        %v2379 = vsub.f32 %v2154, %v2378
        %v2380 = vand.u32 %v2379, 4294901760
        %v2381 = vsub.f32 %v2379, %v2380
        %v2382 = vand.u32 %v2381, 4294901760
        %2383 = vmatpush1.msra.mxu0 %v2382
        %2384 = vmatprep.subr.mxu0 0.0
        %v2385 = vand.u32 %v2155, 4294901760
        %v2386 = vsub.f32 %v2155, %v2385
        %v2387 = vand.u32 %v2386, 4294901760
        %v2388 = vsub.f32 %v2386, %v2387
        %v2389 = vand.u32 %v2388, 4294901760
        %2390 = vmatpush1.msra.mxu0 %v2389
        %2391 = vmatprep.subr.mxu0 0.0
        %v2392 = vand.u32 %v2156, 4294901760
        %v2393 = vsub.f32 %v2156, %v2392
        %v2394 = vand.u32 %v2393, 4294901760
        %v2395 = vsub.f32 %v2393, %v2394
        %v2396 = vand.u32 %v2395, 4294901760
        %2397 = vmatpush1.msra.mxu0 %v2396
        %2398 = vmatprep.subr.mxu0 0.0
        %v2399 = vand.u32 %v2157, 4294901760
        %v2400 = vsub.f32 %v2157, %v2399
        %v2401 = vand.u32 %v2400, 4294901760
        %v2402 = vsub.f32 %v2400, %v2401
        %v2403 = vand.u32 %v2402, 4294901760
        %2404 = vmatpush1.msra.mxu0 %v2403
        %2405 = vmatprep.subr.mxu0 0.0
        %v2406 = vand.u32 %v2158, 4294901760
        %v2407 = vsub.f32 %v2158, %v2406
        %v2408 = vand.u32 %v2407, 4294901760
        %v2409 = vsub.f32 %v2407, %v2408
        %v2410 = vand.u32 %v2409, 4294901760
        %2411 = vmatpush1.msra.mxu0 %v2410
        %2412 = vmatprep.subr.mxu0 0.0
        %v2413 = vand.u32 %v2159, 4294901760
        %v2414 = vsub.f32 %v2159, %v2413
        %v2415 = vand.u32 %v2414, 4294901760
        %v2416 = vsub.f32 %v2414, %v2415
        %v2417 = vand.u32 %v2416, 4294901760
        %2418 = vmatpush1.msra.mxu0 %v2417
        %2419 = vmatprep.subr.mxu0 0.0
        %v2420 = vand.u32 %v2160, 4294901760
        %v2421 = vsub.f32 %v2160, %v2420
        %v2422 = vand.u32 %v2421, 4294901760
        %v2423 = vsub.f32 %v2421, %v2422
        %v2424 = vand.u32 %v2423, 4294901760
        %2425 = vmatpush1.msra.mxu0 %v2424
        %2426 = vmatprep.subr.mxu0 0.0
        %v2427 = vand.u32 %v2161, 4294901760
        %v2428 = vsub.f32 %v2161, %v2427
        %v2429 = vand.u32 %v2428, 4294901760
        %v2430 = vsub.f32 %v2428, %v2429
        %v2431 = vand.u32 %v2430, 4294901760
        %2432 = vmatpush1.msra.mxu0 %v2431
        %2433 = vmatprep.subr.mxu0 0.0
        %v2434 = vand.u32 %v2162, 4294901760
        %v2435 = vsub.f32 %v2162, %v2434
        %v2436 = vand.u32 %v2435, 4294901760
        %v2437 = vsub.f32 %v2435, %v2436
        %v2438 = vand.u32 %v2437, 4294901760
        %2439 = vmatpush1.msra.mxu0 %v2438
        %2440 = vmatprep.subr.mxu0 0.0
        %v2441 = vand.u32 %v2163, 4294901760
        %v2442 = vsub.f32 %v2163, %v2441
        %v2443 = vand.u32 %v2442, 4294901760
        %v2444 = vsub.f32 %v2442, %v2443
        %v2445 = vand.u32 %v2444, 4294901760
        %2446 = vmatpush1.msra.mxu0 %v2445
        %2447 = vmatprep.subr.mxu0 0.0
        %v2448 = vand.u32 %v2164, 4294901760
        %v2449 = vsub.f32 %v2164, %v2448
        %v2450 = vand.u32 %v2449, 4294901760
        %v2451 = vsub.f32 %v2449, %v2450
        %v2452 = vand.u32 %v2451, 4294901760
        %2453 = vmatpush1.msra.mxu0 %v2452
        %2454 = vmatprep.subr.mxu0 0.0
        %v2455 = vand.u32 %v2165, 4294901760
        %v2456 = vsub.f32 %v2165, %v2455
        %v2457 = vand.u32 %v2456, 4294901760
        %v2458 = vsub.f32 %v2456, %v2457
        %v2459 = vand.u32 %v2458, 4294901760
        %2460 = vmatpush1.msra.mxu0 %v2459
        %2461 = vmatprep.subr.mxu0 0.0
        %v2462 = vand.u32 %v2166, 4294901760
        %v2463 = vsub.f32 %v2166, %v2462
        %v2464 = vand.u32 %v2463, 4294901760
        %v2465 = vsub.f32 %v2463, %v2464
        %v2466 = vand.u32 %v2465, 4294901760
        %2467 = vmatpush1.msra.mxu0 %v2466
        %2468 = vmatprep.subr.mxu0 0.0
        %v2469 = vand.u32 %v2167, 4294901760
        %v2470 = vsub.f32 %v2167, %v2469
        %v2471 = vand.u32 %v2470, 4294901760
        %v2472 = vsub.f32 %v2470, %v2471
        %v2473 = vand.u32 %v2472, 4294901760
        %2474 = vmatpush1.msra.mxu0 %v2473
        %2475 = vmatprep.subr.mxu0 0.0
        %v2476 = vand.u32 %v2168, 4294901760
        %v2477 = vsub.f32 %v2168, %v2476
        %v2478 = vand.u32 %v2477, 4294901760
        %v2479 = vsub.f32 %v2477, %v2478
        %v2480 = vand.u32 %v2479, 4294901760
        %2481 = vmatpush1.msra.mxu0 %v2480
        %2482 = vmatprep.subr.mxu0 0.0
        %v2483 = vand.u32 %v2169, 4294901760
        %v2484 = vsub.f32 %v2169, %v2483
        %v2485 = vand.u32 %v2484, 4294901760
        %v2486 = vsub.f32 %v2484, %v2485
        %v2487 = vand.u32 %v2486, 4294901760
        %2488 = vmatpush1.msra.mxu0 %v2487
        %2489 = vmatprep.subr.mxu0 0.0
        %v2490 = vand.u32 %v2170, 4294901760
        %v2491 = vsub.f32 %v2170, %v2490
        %v2492 = vand.u32 %v2491, 4294901760
        %v2493 = vsub.f32 %v2491, %v2492
        %v2494 = vand.u32 %v2493, 4294901760
        %2495 = vmatpush1.msra.mxu0 %v2494
        %2496 = vmatprep.subr.mxu0 0.0
        %v2497 = vand.u32 %v2171, 4294901760
        %v2498 = vsub.f32 %v2171, %v2497
        %v2499 = vand.u32 %v2498, 4294901760
        %v2500 = vsub.f32 %v2498, %v2499
        %v2501 = vand.u32 %v2500, 4294901760
        %2502 = vmatpush1.msra.mxu0 %v2501
        %2503 = vmatprep.subr.mxu0 0.0
        %v2504 = vand.u32 %v2172, 4294901760
        %v2505 = vsub.f32 %v2172, %v2504
        %v2506 = vand.u32 %v2505, 4294901760
        %v2507 = vsub.f32 %v2505, %v2506
        %v2508 = vand.u32 %v2507, 4294901760
        %2509 = vmatpush1.msra.mxu0 %v2508
        %2510 = vmatprep.subr.mxu0 0.0
        %v2511 = vand.u32 %v2173, 4294901760
        %v2512 = vsub.f32 %v2173, %v2511
        %v2513 = vand.u32 %v2512, 4294901760
        %v2514 = vsub.f32 %v2512, %v2513
        %v2515 = vand.u32 %v2514, 4294901760
        %2516 = vmatpush1.msra.mxu0 %v2515
        %2517 = vmatprep.subr.mxu0 0.0
        %v2518 = vand.u32 %v2174, 4294901760
        %v2519 = vsub.f32 %v2174, %v2518
        %v2520 = vand.u32 %v2519, 4294901760
        %v2521 = vsub.f32 %v2519, %v2520
        %v2522 = vand.u32 %v2521, 4294901760
        %2523 = vmatpush1.msra.mxu0 %v2522
        %v2524 = vand.u32 %v2185, 4294901760
        %2525 = vmatprep.mubr.f32.mxu0 %v2524
        %v2526 = vand.u32 %v2182, 4294901760
        %2527 = vmatmul.mubr.f32.gmra.mrb[0].mxu0 %v2526
        %v2528 = vpop.f32.mrb[0].mxu0
        %v2529 = vadd.f32 %v2297, %v2528
        %v2530 = vpop.f32.mrb[0].mxu0
        %2531 = vdwg.mxu0
        %2532 = vmatprep.subr.mxu0 0.0
        %v2533 = vand.u32 %v2143, 4294901760
        %v2534 = vsub.f32 %v2143, %v2533
        %2535 = vmatpush1.msra.mxu0 %v2534
        %2536 = vmatprep.subr.mxu0 0.0
        %v2537 = vand.u32 %v2144, 4294901760
        %v2538 = vsub.f32 %v2144, %v2537
        %2539 = vmatpush1.msra.mxu0 %v2538
        %2540 = vmatprep.subr.mxu0 0.0
        %v2541 = vand.u32 %v2145, 4294901760
        %v2542 = vsub.f32 %v2145, %v2541
        %2543 = vmatpush1.msra.mxu0 %v2542
        %2544 = vmatprep.subr.mxu0 0.0
        %v2545 = vand.u32 %v2146, 4294901760
        %v2546 = vsub.f32 %v2146, %v2545
        %2547 = vmatpush1.msra.mxu0 %v2546
        %2548 = vmatprep.subr.mxu0 0.0
        %v2549 = vand.u32 %v2147, 4294901760
        %v2550 = vsub.f32 %v2147, %v2549
        %2551 = vmatpush1.msra.mxu0 %v2550
        %2552 = vmatprep.subr.mxu0 0.0
        %v2553 = vand.u32 %v2148, 4294901760
        %v2554 = vsub.f32 %v2148, %v2553
        %2555 = vmatpush1.msra.mxu0 %v2554
        %2556 = vmatprep.subr.mxu0 0.0
        %v2557 = vand.u32 %v2149, 4294901760
        %v2558 = vsub.f32 %v2149, %v2557
        %2559 = vmatpush1.msra.mxu0 %v2558
        %2560 = vmatprep.subr.mxu0 0.0
        %v2561 = vand.u32 %v2150, 4294901760
        %v2562 = vsub.f32 %v2150, %v2561
        %2563 = vmatpush1.msra.mxu0 %v2562
        %2564 = vmatprep.subr.mxu0 0.0
        %v2565 = vand.u32 %v2151, 4294901760
        %v2566 = vsub.f32 %v2151, %v2565
        %2567 = vmatpush1.msra.mxu0 %v2566
        %2568 = vmatprep.subr.mxu0 0.0
        %v2569 = vand.u32 %v2152, 4294901760
        %v2570 = vsub.f32 %v2152, %v2569
        %2571 = vmatpush1.msra.mxu0 %v2570
        %2572 = vmatprep.subr.mxu0 0.0
        %v2573 = vand.u32 %v2153, 4294901760
        %v2574 = vsub.f32 %v2153, %v2573
        %2575 = vmatpush1.msra.mxu0 %v2574
        %2576 = vmatprep.subr.mxu0 0.0
        %v2577 = vand.u32 %v2154, 4294901760
        %v2578 = vsub.f32 %v2154, %v2577
        %2579 = vmatpush1.msra.mxu0 %v2578
        %2580 = vmatprep.subr.mxu0 0.0
        %v2581 = vand.u32 %v2155, 4294901760
        %v2582 = vsub.f32 %v2155, %v2581
        %2583 = vmatpush1.msra.mxu0 %v2582
        %2584 = vmatprep.subr.mxu0 0.0
        %v2585 = vand.u32 %v2156, 4294901760
        %v2586 = vsub.f32 %v2156, %v2585
        %2587 = vmatpush1.msra.mxu0 %v2586
        %2588 = vmatprep.subr.mxu0 0.0
        %v2589 = vand.u32 %v2157, 4294901760
        %v2590 = vsub.f32 %v2157, %v2589
        %2591 = vmatpush1.msra.mxu0 %v2590
        %2592 = vmatprep.subr.mxu0 0.0
        %v2593 = vand.u32 %v2158, 4294901760
        %v2594 = vsub.f32 %v2158, %v2593
        %2595 = vmatpush1.msra.mxu0 %v2594
        %2596 = vmatprep.subr.mxu0 0.0
        %v2597 = vand.u32 %v2159, 4294901760
        %v2598 = vsub.f32 %v2159, %v2597
        %2599 = vmatpush1.msra.mxu0 %v2598
        %2600 = vmatprep.subr.mxu0 0.0
        %v2601 = vand.u32 %v2160, 4294901760
        %v2602 = vsub.f32 %v2160, %v2601
        %2603 = vmatpush1.msra.mxu0 %v2602
        %2604 = vmatprep.subr.mxu0 0.0
        %v2605 = vand.u32 %v2161, 4294901760
        %v2606 = vsub.f32 %v2161, %v2605
        %2607 = vmatpush1.msra.mxu0 %v2606
        %2608 = vmatprep.subr.mxu0 0.0
        %v2609 = vand.u32 %v2162, 4294901760
        %v2610 = vsub.f32 %v2162, %v2609
        %2611 = vmatpush1.msra.mxu0 %v2610
        %2612 = vmatprep.subr.mxu0 0.0
        %v2613 = vand.u32 %v2163, 4294901760
        %v2614 = vsub.f32 %v2163, %v2613
        %2615 = vmatpush1.msra.mxu0 %v2614
        %2616 = vmatprep.subr.mxu0 0.0
        %v2617 = vand.u32 %v2164, 4294901760
        %v2618 = vsub.f32 %v2164, %v2617
        %2619 = vmatpush1.msra.mxu0 %v2618
        %2620 = vmatprep.subr.mxu0 0.0
        %v2621 = vand.u32 %v2165, 4294901760
        %v2622 = vsub.f32 %v2165, %v2621
        %2623 = vmatpush1.msra.mxu0 %v2622
        %2624 = vmatprep.subr.mxu0 0.0
        %v2625 = vand.u32 %v2166, 4294901760
        %v2626 = vsub.f32 %v2166, %v2625
        %2627 = vmatpush1.msra.mxu0 %v2626
        %2628 = vmatprep.subr.mxu0 0.0
        %v2629 = vand.u32 %v2167, 4294901760
        %v2630 = vsub.f32 %v2167, %v2629
        %2631 = vmatpush1.msra.mxu0 %v2630
        %2632 = vmatprep.subr.mxu0 0.0
        %v2633 = vand.u32 %v2168, 4294901760
        %v2634 = vsub.f32 %v2168, %v2633
        %2635 = vmatpush1.msra.mxu0 %v2634
        %2636 = vmatprep.subr.mxu0 0.0
        %v2637 = vand.u32 %v2169, 4294901760
        %v2638 = vsub.f32 %v2169, %v2637
        %2639 = vmatpush1.msra.mxu0 %v2638
        %2640 = vmatprep.subr.mxu0 0.0
        %v2641 = vand.u32 %v2170, 4294901760
        %v2642 = vsub.f32 %v2170, %v2641
        %2643 = vmatpush1.msra.mxu0 %v2642
        %2644 = vmatprep.subr.mxu0 0.0
        %v2645 = vand.u32 %v2171, 4294901760
        %v2646 = vsub.f32 %v2171, %v2645
        %2647 = vmatpush1.msra.mxu0 %v2646
        %2648 = vmatprep.subr.mxu0 0.0
        %v2649 = vand.u32 %v2172, 4294901760
        %v2650 = vsub.f32 %v2172, %v2649
        %2651 = vmatpush1.msra.mxu0 %v2650
        %2652 = vmatprep.subr.mxu0 0.0
        %v2653 = vand.u32 %v2173, 4294901760
        %v2654 = vsub.f32 %v2173, %v2653
        %2655 = vmatpush1.msra.mxu0 %v2654
        %2656 = vmatprep.subr.mxu0 0.0
        %v2657 = vand.u32 %v2174, 4294901760
        %v2658 = vsub.f32 %v2174, %v2657
        %2659 = vmatpush1.msra.mxu0 %v2658
        %v2660 = vand.u32 %v2185, 4294901760
        %v2661 = vsub.f32 %v2185, %v2660
        %2662 = vmatprep.mubr.f32.mxu0 %v2661
        %v2663 = vand.u32 %v2182, 4294901760
        %v2664 = vsub.f32 %v2182, %v2663
        %2665 = vmatmul.mubr.f32.gmra.mrb[0].mxu0 %v2664
        %v2666 = vpop.f32.mrb[0].mxu0
        %v2667 = vadd.f32 %v2529, %v2666
        %v2668 = vpop.f32.mrb[0].mxu0
        %2669 = vdwg.mxu0
        %2670 = vmatprep.subr.mxu0 0.0
        %v2671 = vand.u32 %v2143, 4294901760
        %2672 = vmatpush1.msra.mxu0 %v2671
        %2673 = vmatprep.subr.mxu0 0.0
        %v2674 = vand.u32 %v2144, 4294901760
        %2675 = vmatpush1.msra.mxu0 %v2674
        %2676 = vmatprep.subr.mxu0 0.0
        %v2677 = vand.u32 %v2145, 4294901760
        %2678 = vmatpush1.msra.mxu0 %v2677
        %2679 = vmatprep.subr.mxu0 0.0
        %v2680 = vand.u32 %v2146, 4294901760
        %2681 = vmatpush1.msra.mxu0 %v2680
        %2682 = vmatprep.subr.mxu0 0.0
        %v2683 = vand.u32 %v2147, 4294901760
        %2684 = vmatpush1.msra.mxu0 %v2683
        %2685 = vmatprep.subr.mxu0 0.0
        %v2686 = vand.u32 %v2148, 4294901760
        %2687 = vmatpush1.msra.mxu0 %v2686
        %2688 = vmatprep.subr.mxu0 0.0
        %v2689 = vand.u32 %v2149, 4294901760
        %2690 = vmatpush1.msra.mxu0 %v2689
        %2691 = vmatprep.subr.mxu0 0.0
        %v2692 = vand.u32 %v2150, 4294901760
        %2693 = vmatpush1.msra.mxu0 %v2692
        %2694 = vmatprep.subr.mxu0 0.0
        %v2695 = vand.u32 %v2151, 4294901760
        %2696 = vmatpush1.msra.mxu0 %v2695
        %2697 = vmatprep.subr.mxu0 0.0
        %v2698 = vand.u32 %v2152, 4294901760
        %2699 = vmatpush1.msra.mxu0 %v2698
        %2700 = vmatprep.subr.mxu0 0.0
        %v2701 = vand.u32 %v2153, 4294901760
        %2702 = vmatpush1.msra.mxu0 %v2701
        %2703 = vmatprep.subr.mxu0 0.0
        %v2704 = vand.u32 %v2154, 4294901760
        %2705 = vmatpush1.msra.mxu0 %v2704
        %2706 = vmatprep.subr.mxu0 0.0
        %v2707 = vand.u32 %v2155, 4294901760
        %2708 = vmatpush1.msra.mxu0 %v2707
        %2709 = vmatprep.subr.mxu0 0.0
        %v2710 = vand.u32 %v2156, 4294901760
        %2711 = vmatpush1.msra.mxu0 %v2710
        %2712 = vmatprep.subr.mxu0 0.0
        %v2713 = vand.u32 %v2157, 4294901760
        %2714 = vmatpush1.msra.mxu0 %v2713
        %2715 = vmatprep.subr.mxu0 0.0
        %v2716 = vand.u32 %v2158, 4294901760
        %2717 = vmatpush1.msra.mxu0 %v2716
        %2718 = vmatprep.subr.mxu0 0.0
        %v2719 = vand.u32 %v2159, 4294901760
        %2720 = vmatpush1.msra.mxu0 %v2719
        %2721 = vmatprep.subr.mxu0 0.0
        %v2722 = vand.u32 %v2160, 4294901760
        %2723 = vmatpush1.msra.mxu0 %v2722
        %2724 = vmatprep.subr.mxu0 0.0
        %v2725 = vand.u32 %v2161, 4294901760
        %2726 = vmatpush1.msra.mxu0 %v2725
        %2727 = vmatprep.subr.mxu0 0.0
        %v2728 = vand.u32 %v2162, 4294901760
        %2729 = vmatpush1.msra.mxu0 %v2728
        %2730 = vmatprep.subr.mxu0 0.0
        %v2731 = vand.u32 %v2163, 4294901760
        %2732 = vmatpush1.msra.mxu0 %v2731
        %2733 = vmatprep.subr.mxu0 0.0
        %v2734 = vand.u32 %v2164, 4294901760
        %2735 = vmatpush1.msra.mxu0 %v2734
        %2736 = vmatprep.subr.mxu0 0.0
        %v2737 = vand.u32 %v2165, 4294901760
        %2738 = vmatpush1.msra.mxu0 %v2737
        %2739 = vmatprep.subr.mxu0 0.0
        %v2740 = vand.u32 %v2166, 4294901760
        %2741 = vmatpush1.msra.mxu0 %v2740
        %2742 = vmatprep.subr.mxu0 0.0
        %v2743 = vand.u32 %v2167, 4294901760
        %2744 = vmatpush1.msra.mxu0 %v2743
        %2745 = vmatprep.subr.mxu0 0.0
        %v2746 = vand.u32 %v2168, 4294901760
        %2747 = vmatpush1.msra.mxu0 %v2746
        %2748 = vmatprep.subr.mxu0 0.0
        %v2749 = vand.u32 %v2169, 4294901760
        %2750 = vmatpush1.msra.mxu0 %v2749
        %2751 = vmatprep.subr.mxu0 0.0
        %v2752 = vand.u32 %v2170, 4294901760
        %2753 = vmatpush1.msra.mxu0 %v2752
        %2754 = vmatprep.subr.mxu0 0.0
        %v2755 = vand.u32 %v2171, 4294901760
        %2756 = vmatpush1.msra.mxu0 %v2755
        %2757 = vmatprep.subr.mxu0 0.0
        %v2758 = vand.u32 %v2172, 4294901760
        %2759 = vmatpush1.msra.mxu0 %v2758
        %2760 = vmatprep.subr.mxu0 0.0
        %v2761 = vand.u32 %v2173, 4294901760
        %2762 = vmatpush1.msra.mxu0 %v2761
        %2763 = vmatprep.subr.mxu0 0.0
        %v2764 = vand.u32 %v2174, 4294901760
        %2765 = vmatpush1.msra.mxu0 %v2764
        %v2766 = vand.u32 %v2185, 4294901760
        %v2767 = vsub.f32 %v2185, %v2766
        %v2768 = vand.u32 %v2767, 4294901760
        %2769 = vmatprep.mubr.f32.mxu0 %v2768
        %v2770 = vand.u32 %v2182, 4294901760
        %v2771 = vsub.f32 %v2182, %v2770
        %v2772 = vand.u32 %v2771, 4294901760
        %2773 = vmatmul.mubr.f32.gmra.mrb[0].mxu0 %v2772
        %v2774 = vpop.f32.mrb[0].mxu0
        %v2775 = vadd.f32 %v2667, %v2774
        %v2776 = vpop.f32.mrb[0].mxu0
        %2777 = vdwg.mxu0
        %2778 = vmatprep.subr.mxu0 0.0
        %v2779 = vand.u32 %v2143, 4294901760
        %v2780 = vsub.f32 %v2143, %v2779
        %v2781 = vand.u32 %v2780, 4294901760
        %2782 = vmatpush1.msra.mxu0 %v2781
        %2783 = vmatprep.subr.mxu0 0.0
        %v2784 = vand.u32 %v2144, 4294901760
        %v2785 = vsub.f32 %v2144, %v2784
        %v2786 = vand.u32 %v2785, 4294901760
        %2787 = vmatpush1.msra.mxu0 %v2786
        %2788 = vmatprep.subr.mxu0 0.0
        %v2789 = vand.u32 %v2145, 4294901760
        %v2790 = vsub.f32 %v2145, %v2789
        %v2791 = vand.u32 %v2790, 4294901760
        %2792 = vmatpush1.msra.mxu0 %v2791
        %2793 = vmatprep.subr.mxu0 0.0
        %v2794 = vand.u32 %v2146, 4294901760
        %v2795 = vsub.f32 %v2146, %v2794
        %v2796 = vand.u32 %v2795, 4294901760
        %2797 = vmatpush1.msra.mxu0 %v2796
        %2798 = vmatprep.subr.mxu0 0.0
        %v2799 = vand.u32 %v2147, 4294901760
        %v2800 = vsub.f32 %v2147, %v2799
        %v2801 = vand.u32 %v2800, 4294901760
        %2802 = vmatpush1.msra.mxu0 %v2801
        %2803 = vmatprep.subr.mxu0 0.0
        %v2804 = vand.u32 %v2148, 4294901760
        %v2805 = vsub.f32 %v2148, %v2804
        %v2806 = vand.u32 %v2805, 4294901760
        %2807 = vmatpush1.msra.mxu0 %v2806
        %2808 = vmatprep.subr.mxu0 0.0
        %v2809 = vand.u32 %v2149, 4294901760
        %v2810 = vsub.f32 %v2149, %v2809
        %v2811 = vand.u32 %v2810, 4294901760
        %2812 = vmatpush1.msra.mxu0 %v2811
        %2813 = vmatprep.subr.mxu0 0.0
        %v2814 = vand.u32 %v2150, 4294901760
        %v2815 = vsub.f32 %v2150, %v2814
        %v2816 = vand.u32 %v2815, 4294901760
        %2817 = vmatpush1.msra.mxu0 %v2816
        %2818 = vmatprep.subr.mxu0 0.0
        %v2819 = vand.u32 %v2151, 4294901760
        %v2820 = vsub.f32 %v2151, %v2819
        %v2821 = vand.u32 %v2820, 4294901760
        %2822 = vmatpush1.msra.mxu0 %v2821
        %2823 = vmatprep.subr.mxu0 0.0
        %v2824 = vand.u32 %v2152, 4294901760
        %v2825 = vsub.f32 %v2152, %v2824
        %v2826 = vand.u32 %v2825, 4294901760
        %2827 = vmatpush1.msra.mxu0 %v2826
        %2828 = vmatprep.subr.mxu0 0.0
        %v2829 = vand.u32 %v2153, 4294901760
        %v2830 = vsub.f32 %v2153, %v2829
        %v2831 = vand.u32 %v2830, 4294901760
        %2832 = vmatpush1.msra.mxu0 %v2831
        %2833 = vmatprep.subr.mxu0 0.0
        %v2834 = vand.u32 %v2154, 4294901760
        %v2835 = vsub.f32 %v2154, %v2834
        %v2836 = vand.u32 %v2835, 4294901760
        %2837 = vmatpush1.msra.mxu0 %v2836
        %2838 = vmatprep.subr.mxu0 0.0
        %v2839 = vand.u32 %v2155, 4294901760
        %v2840 = vsub.f32 %v2155, %v2839
        %v2841 = vand.u32 %v2840, 4294901760
        %2842 = vmatpush1.msra.mxu0 %v2841
        %2843 = vmatprep.subr.mxu0 0.0
        %v2844 = vand.u32 %v2156, 4294901760
        %v2845 = vsub.f32 %v2156, %v2844
        %v2846 = vand.u32 %v2845, 4294901760
        %2847 = vmatpush1.msra.mxu0 %v2846
        %2848 = vmatprep.subr.mxu0 0.0
        %v2849 = vand.u32 %v2157, 4294901760
        %v2850 = vsub.f32 %v2157, %v2849
        %v2851 = vand.u32 %v2850, 4294901760
        %2852 = vmatpush1.msra.mxu0 %v2851
        %2853 = vmatprep.subr.mxu0 0.0
        %v2854 = vand.u32 %v2158, 4294901760
        %v2855 = vsub.f32 %v2158, %v2854
        %v2856 = vand.u32 %v2855, 4294901760
        %2857 = vmatpush1.msra.mxu0 %v2856
        %2858 = vmatprep.subr.mxu0 0.0
        %v2859 = vand.u32 %v2159, 4294901760
        %v2860 = vsub.f32 %v2159, %v2859
        %v2861 = vand.u32 %v2860, 4294901760
        %2862 = vmatpush1.msra.mxu0 %v2861
        %2863 = vmatprep.subr.mxu0 0.0
        %v2864 = vand.u32 %v2160, 4294901760
        %v2865 = vsub.f32 %v2160, %v2864
        %v2866 = vand.u32 %v2865, 4294901760
        %2867 = vmatpush1.msra.mxu0 %v2866
        %2868 = vmatprep.subr.mxu0 0.0
        %v2869 = vand.u32 %v2161, 4294901760
        %v2870 = vsub.f32 %v2161, %v2869
        %v2871 = vand.u32 %v2870, 4294901760
        %2872 = vmatpush1.msra.mxu0 %v2871
        %2873 = vmatprep.subr.mxu0 0.0
        %v2874 = vand.u32 %v2162, 4294901760
        %v2875 = vsub.f32 %v2162, %v2874
        %v2876 = vand.u32 %v2875, 4294901760
        %2877 = vmatpush1.msra.mxu0 %v2876
        %2878 = vmatprep.subr.mxu0 0.0
        %v2879 = vand.u32 %v2163, 4294901760
        %v2880 = vsub.f32 %v2163, %v2879
        %v2881 = vand.u32 %v2880, 4294901760
        %2882 = vmatpush1.msra.mxu0 %v2881
        %2883 = vmatprep.subr.mxu0 0.0
        %v2884 = vand.u32 %v2164, 4294901760
        %v2885 = vsub.f32 %v2164, %v2884
        %v2886 = vand.u32 %v2885, 4294901760
        %2887 = vmatpush1.msra.mxu0 %v2886
        %2888 = vmatprep.subr.mxu0 0.0
        %v2889 = vand.u32 %v2165, 4294901760
        %v2890 = vsub.f32 %v2165, %v2889
        %v2891 = vand.u32 %v2890, 4294901760
        %2892 = vmatpush1.msra.mxu0 %v2891
        %2893 = vmatprep.subr.mxu0 0.0
        %v2894 = vand.u32 %v2166, 4294901760
        %v2895 = vsub.f32 %v2166, %v2894
        %v2896 = vand.u32 %v2895, 4294901760
        %2897 = vmatpush1.msra.mxu0 %v2896
        %2898 = vmatprep.subr.mxu0 0.0
        %v2899 = vand.u32 %v2167, 4294901760
        %v2900 = vsub.f32 %v2167, %v2899
        %v2901 = vand.u32 %v2900, 4294901760
        %2902 = vmatpush1.msra.mxu0 %v2901
        %2903 = vmatprep.subr.mxu0 0.0
        %v2904 = vand.u32 %v2168, 4294901760
        %v2905 = vsub.f32 %v2168, %v2904
        %v2906 = vand.u32 %v2905, 4294901760
        %2907 = vmatpush1.msra.mxu0 %v2906
        %2908 = vmatprep.subr.mxu0 0.0
        %v2909 = vand.u32 %v2169, 4294901760
        %v2910 = vsub.f32 %v2169, %v2909
        %v2911 = vand.u32 %v2910, 4294901760
        %2912 = vmatpush1.msra.mxu0 %v2911
        %2913 = vmatprep.subr.mxu0 0.0
        %v2914 = vand.u32 %v2170, 4294901760
        %v2915 = vsub.f32 %v2170, %v2914
        %v2916 = vand.u32 %v2915, 4294901760
        %2917 = vmatpush1.msra.mxu0 %v2916
        %2918 = vmatprep.subr.mxu0 0.0
        %v2919 = vand.u32 %v2171, 4294901760
        %v2920 = vsub.f32 %v2171, %v2919
        %v2921 = vand.u32 %v2920, 4294901760
        %2922 = vmatpush1.msra.mxu0 %v2921
        %2923 = vmatprep.subr.mxu0 0.0
        %v2924 = vand.u32 %v2172, 4294901760
        %v2925 = vsub.f32 %v2172, %v2924
        %v2926 = vand.u32 %v2925, 4294901760
        %2927 = vmatpush1.msra.mxu0 %v2926
        %2928 = vmatprep.subr.mxu0 0.0
        %v2929 = vand.u32 %v2173, 4294901760
        %v2930 = vsub.f32 %v2173, %v2929
        %v2931 = vand.u32 %v2930, 4294901760
        %2932 = vmatpush1.msra.mxu0 %v2931
        %2933 = vmatprep.subr.mxu0 0.0
        %v2934 = vand.u32 %v2174, 4294901760
        %v2935 = vsub.f32 %v2174, %v2934
        %v2936 = vand.u32 %v2935, 4294901760
        %2937 = vmatpush1.msra.mxu0 %v2936
        %v2938 = vand.u32 %v2185, 4294901760
        %2939 = vmatprep.mubr.f32.mxu0 %v2938
        %v2940 = vand.u32 %v2182, 4294901760
        %2941 = vmatmul.mubr.f32.gmra.mrb[0].mxu0 %v2940
        %v2942 = vpop.f32.mrb[0].mxu0
        %v2943 = vadd.f32 %v2775, %v2942
        %v2944 = vpop.f32.mrb[0].mxu0
        %2945 = vdwg.mxu0
        %2946 = vmatprep.subr.mxu0 0.0
        %v2947 = vand.u32 %v2143, 4294901760
        %2948 = vmatpush1.msra.mxu0 %v2947
        %2949 = vmatprep.subr.mxu0 0.0
        %v2950 = vand.u32 %v2144, 4294901760
        %2951 = vmatpush1.msra.mxu0 %v2950
        %2952 = vmatprep.subr.mxu0 0.0
        %v2953 = vand.u32 %v2145, 4294901760
        %2954 = vmatpush1.msra.mxu0 %v2953
        %2955 = vmatprep.subr.mxu0 0.0
        %v2956 = vand.u32 %v2146, 4294901760
        %2957 = vmatpush1.msra.mxu0 %v2956
        %2958 = vmatprep.subr.mxu0 0.0
        %v2959 = vand.u32 %v2147, 4294901760
        %2960 = vmatpush1.msra.mxu0 %v2959
        %2961 = vmatprep.subr.mxu0 0.0
        %v2962 = vand.u32 %v2148, 4294901760
        %2963 = vmatpush1.msra.mxu0 %v2962
        %2964 = vmatprep.subr.mxu0 0.0
        %v2965 = vand.u32 %v2149, 4294901760
        %2966 = vmatpush1.msra.mxu0 %v2965
        %2967 = vmatprep.subr.mxu0 0.0
        %v2968 = vand.u32 %v2150, 4294901760
        %2969 = vmatpush1.msra.mxu0 %v2968
        %2970 = vmatprep.subr.mxu0 0.0
        %v2971 = vand.u32 %v2151, 4294901760
        %2972 = vmatpush1.msra.mxu0 %v2971
        %2973 = vmatprep.subr.mxu0 0.0
        %v2974 = vand.u32 %v2152, 4294901760
        %2975 = vmatpush1.msra.mxu0 %v2974
        %2976 = vmatprep.subr.mxu0 0.0
        %v2977 = vand.u32 %v2153, 4294901760
        %2978 = vmatpush1.msra.mxu0 %v2977
        %2979 = vmatprep.subr.mxu0 0.0
        %v2980 = vand.u32 %v2154, 4294901760
        %2981 = vmatpush1.msra.mxu0 %v2980
        %2982 = vmatprep.subr.mxu0 0.0
        %v2983 = vand.u32 %v2155, 4294901760
        %2984 = vmatpush1.msra.mxu0 %v2983
        %2985 = vmatprep.subr.mxu0 0.0
        %v2986 = vand.u32 %v2156, 4294901760
        %2987 = vmatpush1.msra.mxu0 %v2986
        %2988 = vmatprep.subr.mxu0 0.0
        %v2989 = vand.u32 %v2157, 4294901760
        %2990 = vmatpush1.msra.mxu0 %v2989
        %2991 = vmatprep.subr.mxu0 0.0
        %v2992 = vand.u32 %v2158, 4294901760
        %2993 = vmatpush1.msra.mxu0 %v2992
        %2994 = vmatprep.subr.mxu0 0.0
        %v2995 = vand.u32 %v2159, 4294901760
        %2996 = vmatpush1.msra.mxu0 %v2995
        %2997 = vmatprep.subr.mxu0 0.0
        %v2998 = vand.u32 %v2160, 4294901760
        %2999 = vmatpush1.msra.mxu0 %v2998
        %3000 = vmatprep.subr.mxu0 0.0
        %v3001 = vand.u32 %v2161, 4294901760
        %3002 = vmatpush1.msra.mxu0 %v3001
        %3003 = vmatprep.subr.mxu0 0.0
        %v3004 = vand.u32 %v2162, 4294901760
        %3005 = vmatpush1.msra.mxu0 %v3004
        %3006 = vmatprep.subr.mxu0 0.0
        %v3007 = vand.u32 %v2163, 4294901760
        %3008 = vmatpush1.msra.mxu0 %v3007
        %3009 = vmatprep.subr.mxu0 0.0
        %v3010 = vand.u32 %v2164, 4294901760
        %3011 = vmatpush1.msra.mxu0 %v3010
        %3012 = vmatprep.subr.mxu0 0.0
        %v3013 = vand.u32 %v2165, 4294901760
        %3014 = vmatpush1.msra.mxu0 %v3013
        %3015 = vmatprep.subr.mxu0 0.0
        %v3016 = vand.u32 %v2166, 4294901760
        %3017 = vmatpush1.msra.mxu0 %v3016
        %3018 = vmatprep.subr.mxu0 0.0
        %v3019 = vand.u32 %v2167, 4294901760
        %3020 = vmatpush1.msra.mxu0 %v3019
        %3021 = vmatprep.subr.mxu0 0.0
        %v3022 = vand.u32 %v2168, 4294901760
        %3023 = vmatpush1.msra.mxu0 %v3022
        %3024 = vmatprep.subr.mxu0 0.0
        %v3025 = vand.u32 %v2169, 4294901760
        %3026 = vmatpush1.msra.mxu0 %v3025
        %3027 = vmatprep.subr.mxu0 0.0
        %v3028 = vand.u32 %v2170, 4294901760
        %3029 = vmatpush1.msra.mxu0 %v3028
        %3030 = vmatprep.subr.mxu0 0.0
        %v3031 = vand.u32 %v2171, 4294901760
        %3032 = vmatpush1.msra.mxu0 %v3031
        %3033 = vmatprep.subr.mxu0 0.0
        %v3034 = vand.u32 %v2172, 4294901760
        %3035 = vmatpush1.msra.mxu0 %v3034
        %3036 = vmatprep.subr.mxu0 0.0
        %v3037 = vand.u32 %v2173, 4294901760
        %3038 = vmatpush1.msra.mxu0 %v3037
        %3039 = vmatprep.subr.mxu0 0.0
        %v3040 = vand.u32 %v2174, 4294901760
        %3041 = vmatpush1.msra.mxu0 %v3040
        %v3042 = vand.u32 %v2185, 4294901760
        %3043 = vmatprep.mubr.f32.mxu0 %v3042
        %v3044 = vand.u32 %v2182, 4294901760
        %3045 = vmatmul.mubr.f32.gmra.mrb[0].mxu0 %v3044
        %v3046 = vpop.f32.mrb[0].mxu0
        %v3047 = vadd.f32 %v2943, %v3046
        %v3048 = vpop.f32.mrb[0].mxu0
        %3049 = vdwg.mxu0
        %v3050 = vadd.f32 %v2135, %v3047
        %v3051 = vld [vmem:[%s321] sm:$0x1]
        %v3053 = vlaneseq
        %v3054 = vshrl.u32 %v3053, 7
        %v3055 = vsub.s32 0, %v3054
        %v3056 = vrot.slane %v3051, %v3055
        %v3058 = vadd.f32 %v3050, %v3056
        %3059 = vst [vmem:[%s317] sm:$0xff] %v3058
        %s3060 = sand.u32 %s165, 1
        %s3061 = scalar_lea.sflag [#allocation5], %s3060
        %s3062 = sand.u32 %s165, 1
        %s3063 = smul.addr %s3062, 8
        %s3064 = scalar_lea.vmem [#allocation9], %s3063
        // Predicated region
        $region49: #{tpu_custom_call.1} parent=35 // pred_check
          %p3065 = pneg %p175
        $region50: #{tpu_custom_call.1} parent=35 // pred_check_branch
          %3067 = sbr.rel (%p3065) target = $region52
        $region51: #{tpu_custom_call.1} parent=35 // pred_region
          %s3069 = ssub.s32 128, 128
          %3070 = vsyncadd %s3061, %s3069
          %s3071 = sadd.s32 %s31, %s30
          %s3072 = sadd.s32 %s3071, %s29
          %s3073 = smul.addr %s3072, 128
          %s3074 = scalar_lea.hbm %s4, %s3073
          %s3076 = sshll.u32 %s3064, 4
          %s3077 = int_to_ptr.vmem [resolvable:$true] %s3076
          %3079 = dma.vmem_to_hbm [thread:$0]  %s3077, 128, %s3074, %s3061
        $region52: #{tpu_custom_call.1} parent=35 // pred_fallthru
          _
      $region36: #{tpu_custom_call.1} parent=5 // pred_fallthru
        _
      %p3080 = scmp.le.s32.totalorder 2, %s19
      // Predicated region
      $region53: #{tpu_custom_call.1} parent=5 // pred_check
        %p3081 = pneg %p3080
      $region54: #{tpu_custom_call.1} parent=5 // pred_check_branch
        %3083 = sbr.rel (%p3081) target = $region56
      $region55: #{tpu_custom_call.1} parent=5 // pred_region
        %s3084 = ssub.s32 %s19, 2
        // Predicated region
        $region57: #{tpu_custom_call.1} parent=55 // pred_check
          %p3085 = pneg %p181
        $region58: #{tpu_custom_call.1} parent=55 // pred_check_branch
          %3087 = sbr.rel (%p3085) target = $region60
        $region59: #{tpu_custom_call.1} parent=55 // pred_region
          %s3088 = sand.u32 %s166, 1
          %s3089 = scalar_lea.sflag [#allocation5], %s3088
          %s3090 = sand.u32 %s166, 1
          %s3091 = smul.addr %s3090, 8
          %s3092 = scalar_lea.vmem [#allocation9], %s3091
          %3093 = dma.done %s3089, 128
        $region60: #{tpu_custom_call.1} parent=55 // pred_fallthru
          _
      $region56: #{tpu_custom_call.1} parent=5 // pred_fallthru
        _
    $region6: #{tpu_custom_call.1} parent=1 // loop_footer
      %s23 = sadd.s32 1, %s19
    $region7: #{tpu_custom_call.1} parent=1 // loop_footer_branch
      %18 = sbr.rel target = $region3
    $region8: #{tpu_custom_call.1} parent=1 // loop_exit
      _
    %3094 = vsyncpa [#allocation4], 1
    %s3095 = scalar_lea.sflag [#allocation4], 1
    %3096 = vsyncpa %s3095, 1
    %3097 = vsyncpa [#allocation7], 1
    %s3098 = scalar_lea.sflag [#allocation7], 1
    %3099 = vsyncpa %s3098, 1
    %3100 = vsyncpa [#allocation5], 1
    %s3101 = scalar_lea.sflag [#allocation5], 1
    %3102 = vsyncpa %s3101, 1

// kernel: tpu_custom_call.1
$region0: #{tpu_custom_call.1}
  #allocation0 [shape = 'u32[]', space=smem, size = 0x4, offset = 0x4, fixed_abs, tag = 'smem constant byte address 0x4 - core index']
  #allocation1 [shape = 'u32[144,128]{1,0:T(1,128)}', space=vmem, size = 0x12000, scoped, tag = 'internal scratch']
  #allocation2 [shape = 'f32[16,256]{1,0:T(8,128)}', space=vmem, size = 0x4000, scoped, tag = 'scratch operand']
  %s0 = inlined_call_operand.hbm [shape: f32[2,16,256], index: 0, kind: input, shape index: {}]
  %s1 = inlined_call_operand.hbm [shape: f32[2,16,256], index: 1, kind: input, shape index: {}]
  %s2 = inlined_call_operand.hbm [shape: f32[3,256,128], index: 2, kind: input, shape index: {}]
  %s3 = inlined_call_operand.vmem [shape: f32[1,128], index: 3, kind: input, shape index: {}]
  %s4 = inlined_call_operand.hbm [shape: f32[2,8,128], index: 4, kind: output, shape index: {}]
  %s5 = sld [smem:[#allocation0]]
  $region61: #{tpu_custom_call.1} parent=0
    _
  %s7 = ssub.s32 1, %s5
  %s8 = scalar_select 0, %s7, %s5
  $region1: #{tpu_custom_call.1} parent=0
    #allocation3 [shape = 'u8[16384]{0}', space=vmem, size = 0x4000, scoped, tag = 'input window, operand 0']
    #allocation4 [shape = 's32[2]{0}', space=sflag, size = 0x8, scoped, tag = 'scoped memory for tpu_custom_call.1']
    #allocation5 [shape = 's32[2]{0}', space=sflag, size = 0x8, scoped, tag = 'scoped memory for tpu_custom_call.1']
    #allocation6 [shape = 'u8[16384]{0}', space=vmem, size = 0x4000, scoped, tag = 'input window, operand 1']
    #allocation7 [shape = 's32[2]{0}', space=sflag, size = 0x8, scoped, tag = 'scoped memory for tpu_custom_call.1']
    #allocation8 [shape = 'u8[393216]{0}', space=vmem, size = 0x60000, scoped, tag = 'input window, operand 2, single buffered']
    #allocation9 [shape = 'u8[8192]{0}', space=vmem, size = 0x2000, scoped, tag = 'output window, operand 0']
    %9 = vsyncpa [#allocation4], 0
    %s10 = scalar_lea.sflag [#allocation4], 1
    %11 = vsyncpa %s10, 0
    %12 = vsyncpa [#allocation7], 0
    %s13 = scalar_lea.sflag [#allocation7], 1
    %14 = vsyncpa %s13, 0
    %15 = vsyncpa [#allocation5], 0
    %s16 = scalar_lea.sflag [#allocation5], 1
    %17 = vsyncpa %s16, 0
    loop: start=0, step=1, limit=4
    $region2: #{tpu_custom_call.1} parent=1 // loop_pre_header
      _
    $region3: #{tpu_custom_call.1} parent=1 // loop_header
      %s19 = sphi 0, %s23
      %p20 = scmp.ge.s32.totalorder %s19, 4
      %s26 = sphi 0, %s45
      %s27 = sphi 0, %s41
      %s28 = sphi 0, %s37
      %s29 = sphi 0, %s26
      %s30 = sphi 0, %s27
      %s31 = sphi 0, %s28
      %s32 = sphi 0, %s29
      %s33 = sphi 0, %s30
      %s34 = sphi 0, %s31
      %s50 = sphi 0, %s52
      %s53 = sphi 0, %s50
      %s54 = sphi 0, %s53
      %s70 = sphi 0, %s54
      %s80 = sphi 0, %s82
      %s83 = sphi 0, %s80
      %s84 = sphi 0, %s83
      %s100 = sphi 0, %s84
      %s106 = sphi 0, %s108
      %s109 = sphi 0, %s106
      %s110 = sphi 0, %s109
      %s126 = sphi 0, %s110
      %s132 = sphi 0, %s134
      %s135 = sphi 0, %s132
      %s136 = sphi 0, %s135
      %s152 = sphi 0, %s136
      %s162 = sphi 0, %s164
      %s165 = sphi 0, %s162
      %s166 = sphi 0, %s165
      %s182 = sphi 0, %s166
    $region4: #{tpu_custom_call.1} parent=1 // loop_header_branch
      %22 = sbr.rel (%p20) target = $region8
    $region5: #{tpu_custom_call.1} parent=1 // loop_body
      %s24 = ssub.s32 %s19, 1
      %s25 = ssub.s32 %s19, 2
      %s35 = sadd.s32 1, %s28
      %p36 = scmp.ge.s32.totalorder %s35, 1
      %s37 = scalar_select %p36, 0, %s35
      %s38 = sadd.s32 1, %s27
      %s39 = scalar_select %p36, %s38, %s27
      %p40 = scmp.ge.s32.totalorder %s39, 1
      %s41 = scalar_select %p40, 0, %s39
      %s42 = sadd.s32 1, %s26
      %s43 = scalar_select %p40, %s42, %s26
      %p44 = scmp.ge.s32.totalorder %s43, 2
      %s45 = scalar_select %p44, 0, %s43
      %s46 = ssub.s32 %s26, %s45
      %s47 = ssub.s32 %s27, %s41
      %s48 = sor.u32 %s46, %s47
      %p49 = scmp.eq.s32.totalorder %s48, 0
      %s51 = sadd.s32 %s50, 1
      %s52 = scalar_select %p49, %s50, %s51
      %p55 = pneg %p49
      %p56 = scmp.eq.s32.totalorder %s19, 1
      %p57 = por %p55, %p56
      %p58 = scmp.ne.s32.totalorder %s50, %s53
      %p59 = scmp.eq.s32.totalorder %s19, 0
      %p60 = por %p58, %p59
      %p61 = scmp.ne.s32.totalorder %s50, %s53
      %p62 = scmp.eq.s32.totalorder %s24, 1
      %p63 = por %p61, %p62
      %p64 = scmp.ne.s32.totalorder %s53, %s54
      %p65 = scmp.eq.s32.totalorder %s24, 0
      %p66 = por %p64, %p65
      %p67 = scmp.ne.s32.totalorder %s53, %s54
      %p68 = scmp.eq.s32.totalorder %s25, 1
      %p69 = por %p67, %p68
      %p71 = scmp.ne.s32.totalorder %s54, %s70
      %p72 = scmp.eq.s32.totalorder %s25, 0
      %p73 = por %p71, %p72
      %s74 = sadd.s32 %s27, 1
      %s75 = sadd.s32 %s41, 1
      %s76 = ssub.s32 %s26, %s45
      %s77 = ssub.s32 %s74, %s75
      %s78 = sor.u32 %s76, %s77
      %p79 = scmp.eq.s32.totalorder %s78, 0
      %s81 = sadd.s32 %s80, 1
      %s82 = scalar_select %p79, %s80, %s81
      %p85 = pneg %p79
      %p86 = scmp.eq.s32.totalorder %s19, 1
      %p87 = por %p85, %p86
      %p88 = scmp.ne.s32.totalorder %s80, %s83
      %p89 = scmp.eq.s32.totalorder %s19, 0
      %p90 = por %p88, %p89
      %p91 = scmp.ne.s32.totalorder %s80, %s83
      %p92 = scmp.eq.s32.totalorder %s24, 1
      %p93 = por %p91, %p92
      %p94 = scmp.ne.s32.totalorder %s83, %s84
      %p95 = scmp.eq.s32.totalorder %s24, 0
      %p96 = por %p94, %p95
      %p97 = scmp.ne.s32.totalorder %s83, %s84
      %p98 = scmp.eq.s32.totalorder %s25, 1
      %p99 = por %p97, %p98
      %p101 = scmp.ne.s32.totalorder %s84, %s100
      %p102 = scmp.eq.s32.totalorder %s25, 0
      %p103 = por %p101, %p102
      %s104 = ssub.s32 %s28, %s37
      %p105 = scmp.eq.s32.totalorder %s104, 0
      %s107 = sadd.s32 %s106, 1
      %s108 = scalar_select %p105, %s106, %s107
      %p111 = pneg %p105
      %p112 = scmp.eq.s32.totalorder %s19, 1
      %p113 = por %p111, %p112
      %p114 = scmp.ne.s32.totalorder %s106, %s109
      %p115 = scmp.eq.s32.totalorder %s19, 0
      %p116 = por %p114, %p115
      %p117 = scmp.ne.s32.totalorder %s106, %s109
      %p118 = scmp.eq.s32.totalorder %s24, 1
      %p119 = por %p117, %p118
      %p120 = scmp.ne.s32.totalorder %s109, %s110
      %p121 = scmp.eq.s32.totalorder %s24, 0
      %p122 = por %p120, %p121
      %p123 = scmp.ne.s32.totalorder %s109, %s110
      %p124 = scmp.eq.s32.totalorder %s25, 1
      %p125 = por %p123, %p124
      %p127 = scmp.ne.s32.totalorder %s110, %s126
      %p128 = scmp.eq.s32.totalorder %s25, 0
      %p129 = por %p127, %p128
      %s130 = ssub.s32 %s28, %s37
      %p131 = scmp.eq.s32.totalorder %s130, 0
      %s133 = sadd.s32 %s132, 1
      %s134 = scalar_select %p131, %s132, %s133
      %p137 = pneg %p131
      %p138 = scmp.eq.s32.totalorder %s19, 1
      %p139 = por %p137, %p138
      %p140 = scmp.ne.s32.totalorder %s132, %s135
      %p141 = scmp.eq.s32.totalorder %s19, 0
      %p142 = por %p140, %p141
      %p143 = scmp.ne.s32.totalorder %s132, %s135
      %p144 = scmp.eq.s32.totalorder %s24, 1
      %p145 = por %p143, %p144
      %p146 = scmp.ne.s32.totalorder %s135, %s136
      %p147 = scmp.eq.s32.totalorder %s24, 0
      %p148 = por %p146, %p147
      %p149 = scmp.ne.s32.totalorder %s135, %s136
      %p150 = scmp.eq.s32.totalorder %s25, 1
      %p151 = por %p149, %p150
      %p153 = scmp.ne.s32.totalorder %s136, %s152
      %p154 = scmp.eq.s32.totalorder %s25, 0
      %p155 = por %p153, %p154
      %s156 = ssub.s32 %s26, %s45
      %s157 = ssub.s32 %s27, %s41
      %s158 = sor.u32 %s156, %s157
      %s159 = ssub.s32 %s28, %s37
      %s160 = sor.u32 %s158, %s159
      %p161 = scmp.eq.s32.totalorder %s160, 0
      %s163 = sadd.s32 %s162, 1
      %s164 = scalar_select %p161, %s162, %s163
      %p167 = pneg %p161
      %p168 = scmp.eq.s32.totalorder %s19, 1
      %p169 = por %p167, %p168
      %p170 = scmp.ne.s32.totalorder %s162, %s165
      %p171 = scmp.eq.s32.totalorder %s19, 0
      %p172 = por %p170, %p171
      %p173 = scmp.ne.s32.totalorder %s162, %s165
      %p174 = scmp.eq.s32.totalorder %s24, 1
      %p175 = por %p173, %p174
      %p176 = scmp.ne.s32.totalorder %s165, %s166
      %p177 = scmp.eq.s32.totalorder %s24, 0
      %p178 = por %p176, %p177
      %p179 = scmp.ne.s32.totalorder %s165, %s166
      %p180 = scmp.eq.s32.totalorder %s25, 1
      %p181 = por %p179, %p180
      %p183 = scmp.ne.s32.totalorder %s166, %s182
      %p184 = scmp.eq.s32.totalorder %s25, 0
      %p185 = por %p183, %p184
      %p186 = scmp.le.s32.totalorder 1, %s19
      %p187 = scmp.lt.s32.totalorder %s19, 3
      %p188 = pnand %p186, %p187
      %p189 = pneg %p188
      // Predicated region
      $region9: #{tpu_custom_call.1} parent=5 // pred_check
        _
      $region10: #{tpu_custom_call.1} parent=5 // pred_check_branch
        %191 = sbr.rel (%p188) target = $region12
      $region11: #{tpu_custom_call.1} parent=5 // pred_region
        %s192 = ssub.s32 %s19, 1
        // Predicated region
        $region13: #{tpu_custom_call.1} parent=11 // pred_check
          %p193 = pneg %p122
        $region14: #{tpu_custom_call.1} parent=11 // pred_check_branch
          %195 = sbr.rel (%p193) target = $region16
        $region15: #{tpu_custom_call.1} parent=11 // pred_region
          %s197 = ssub.s32 12288, 12288
          %198 = vsyncadd [#allocation7], %s197
          %s199 = smul.addr %s31, 128
          %s200 = scalar_lea.hbm %s2, %s199
          %s201 = sshll.u32 [#allocation8], 4
          %s202 = int_to_ptr.vmem [resolvable:$true] %s201
          %207 = dma.hbm_to_vmem [thread:$0]  %s200, 12288, %s202, [#allocation7], 128, 128, 8
        $region16: #{tpu_custom_call.1} parent=11 // pred_fallthru
          _
        // Predicated region
        $region17: #{tpu_custom_call.1} parent=11 // pred_check
          %p208 = pneg %p148
        $region18: #{tpu_custom_call.1} parent=11 // pred_check_branch
          %210 = sbr.rel (%p208) target = $region20
        $region19: #{tpu_custom_call.1} parent=11 // pred_region
          %p211 = scmp.lt.s32.totalorder %s31, 0
          %s212 = scalar_select %p211, %s31, 0
          %s213 = scalar_lea.vmem %s3, %s212
        $region20: #{tpu_custom_call.1} parent=11 // pred_fallthru
          _
      $region12: #{tpu_custom_call.1} parent=5 // pred_fallthru
        _
      %p214 = scmp.lt.s32.totalorder %s19, 2
      // Predicated region
      $region21: #{tpu_custom_call.1} parent=5 // pred_check
        %p215 = pneg %p214
      $region22: #{tpu_custom_call.1} parent=5 // pred_check_branch
        %217 = sbr.rel (%p215) target = $region24
      $region23: #{tpu_custom_call.1} parent=5 // pred_region
        // Predicated region
        $region25: #{tpu_custom_call.1} parent=23 // pred_check
          %p218 = pneg %p60
        $region26: #{tpu_custom_call.1} parent=23 // pred_check_branch
          %220 = sbr.rel (%p218) target = $region28
        $region27: #{tpu_custom_call.1} parent=23 // pred_region
          %s221 = sand.u32 %s50, 1
          %s222 = scalar_lea.sflag [#allocation4], %s221
          %s223 = sand.u32 %s50, 1
          %s224 = smul.addr %s223, 16
          %s225 = scalar_lea.vmem [#allocation3], %s224
          %s227 = ssub.s32 256, 256
          %228 = vsyncadd %s222, %s227
          %s229 = smul.addr %s27, 2
          %s230 = smul.addr %s26, 4
          %s231 = sadd.s32 %s229, %s230
          %s232 = smul.addr %s231, 128
          %s233 = scalar_lea.hbm %s0, %s232
          %s235 = sshll.u32 %s225, 4
          %s236 = int_to_ptr.vmem [resolvable:$true] %s235
          %238 = dma.hbm_to_vmem [thread:$0]  %s233, 256, %s236, %s222
        $region28: #{tpu_custom_call.1} parent=23 // pred_fallthru
          _
        // Predicated region
        $region29: #{tpu_custom_call.1} parent=23 // pred_check
          %p239 = pneg %p90
        $region30: #{tpu_custom_call.1} parent=23 // pred_check_branch
          %241 = sbr.rel (%p239) target = $region32
        $region31: #{tpu_custom_call.1} parent=23 // pred_region
          %s242 = sand.u32 %s19, 1
          %s243 = scalar_lea.sflag [#allocation7], %s242
          %s244 = sand.u32 %s80, 1
          %s245 = smul.addr %s244, 16
          %s246 = scalar_lea.vmem [#allocation6], %s245
          %s247 = sadd.s32 %s27, 1
          %s249 = ssub.s32 256, 256
          %250 = vsyncadd %s243, %s249
          %s251 = smul.addr %s247, 2
          %s252 = smul.addr %s26, 4
          %s253 = sadd.s32 %s251, %s252
          %s254 = smul.addr %s253, 128
          %s255 = scalar_lea.hbm %s1, %s254
          %s257 = sshll.u32 %s246, 4
          %s258 = int_to_ptr.vmem [resolvable:$true] %s257
          %260 = dma.hbm_to_vmem [thread:$0]  %s255, 256, %s258, %s243
        $region32: #{tpu_custom_call.1} parent=23 // pred_fallthru
          _
      $region24: #{tpu_custom_call.1} parent=5 // pred_fallthru
        _
      %p261 = scmp.le.s32.totalorder 1, %s19
      %p262 = scmp.lt.s32.totalorder %s19, 3
      %p263 = pnand %p261, %p262
      %p264 = pneg %p263
      // Predicated region
      $region33: #{tpu_custom_call.1} parent=5 // pred_check
        _
      $region34: #{tpu_custom_call.1} parent=5 // pred_check_branch
        %266 = sbr.rel (%p263) target = $region36
      $region35: #{tpu_custom_call.1} parent=5 // pred_region
        %s267 = ssub.s32 %s19, 1
        %s268 = sand.u32 %s53, 1
        %s269 = scalar_lea.sflag [#allocation4], %s268
        %s270 = sand.u32 %s53, 1
        %s271 = smul.addr %s270, 16
        %s272 = scalar_lea.vmem [#allocation3], %s271
        // Predicated region
        $region37: #{tpu_custom_call.1} parent=35 // pred_check
          %p273 = pneg %p66
        $region38: #{tpu_custom_call.1} parent=35 // pred_check_branch
          %275 = sbr.rel (%p273) target = $region40
        $region39: #{tpu_custom_call.1} parent=35 // pred_region
          %276 = dma.done %s269, 256
        $region40: #{tpu_custom_call.1} parent=35 // pred_fallthru
          _
        %s277 = sand.u32 %s24, 1
        %s278 = scalar_lea.sflag [#allocation7], %s277
        %s279 = sand.u32 %s83, 1
        %s280 = smul.addr %s279, 16
        %s281 = scalar_lea.vmem [#allocation6], %s280
        // Predicated region
        $region41: #{tpu_custom_call.1} parent=35 // pred_check
          %p282 = pneg %p96
        $region42: #{tpu_custom_call.1} parent=35 // pred_check_branch
          %284 = sbr.rel (%p282) target = $region44
        $region43: #{tpu_custom_call.1} parent=35 // pred_region
          %285 = dma.done %s278, 256
        $region44: #{tpu_custom_call.1} parent=35 // pred_fallthru
          _
        // Predicated region
        $region45: #{tpu_custom_call.1} parent=35 // pred_check
          %p286 = pneg %p122
        $region46: #{tpu_custom_call.1} parent=35 // pred_check_branch
          %288 = sbr.rel (%p286) target = $region48
        $region47: #{tpu_custom_call.1} parent=35 // pred_region
          %289 = dma.done [#allocation7], 12288
        $region48: #{tpu_custom_call.1} parent=35 // pred_fallthru
          _
        %s290 = sand.u32 %s53, 1
        %s291 = scalar_lea.sflag [#allocation4], %s290
        %s292 = sand.u32 %s53, 1
        %s293 = smul.addr %s292, 16
        %s294 = scalar_lea.vmem [#allocation3], %s293
        %p295 = pneg %p66
        %p296 = pneg %p63
        %s297 = sand.u32 %s24, 1
        %s298 = scalar_lea.sflag [#allocation7], %s297
        %s299 = sand.u32 %s83, 1
        %s300 = smul.addr %s299, 16
        %s301 = scalar_lea.vmem [#allocation6], %s300
        %p302 = pneg %p96
        %p303 = pneg %p93
        %p304 = pneg %p122
        %p305 = pneg %p119
        %p306 = scmp.lt.s32.totalorder %s31, 0
        %s307 = scalar_select %p306, %s31, 0
        %s308 = scalar_lea.vmem %s3, %s307
        %p309 = pneg %p148
        %p310 = pneg %p145
        %p311 = pneg %p178
        %p312 = pneg %p175
        %s313 = sand.u32 %s165, 1
        %s314 = scalar_lea.sflag [#allocation5], %s313
        %s315 = sand.u32 %s165, 1
        %s316 = smul.addr %s315, 8
        %s317 = scalar_lea.vmem [#allocation9], %s316
        %s318 = sadd.s32 %s30, 1
        %p319 = scmp.lt.s32.totalorder %s31, 0
        %s320 = scalar_select %p319, %s31, 0
        %s321 = scalar_lea.vmem %s3, %s320
        %v322 = vld [vmem:[%s272] sm:$0xff]
        %v323 = vld [vmem:[%s272 + $0x8] sm:$0xff]
        %324 = vst [vmem:[#allocation2] sm:$0xff] %v322
        %325 = vst [vmem:[#allocation2 + $0x8] sm:$0xff] %v323
        %v326 = vld [vmem:[%s281] sm:$0xff]
        %v327 = vld [vmem:[%s281 + $0x8] sm:$0xff]
        %328 = vst [vmem:[#allocation2 + $0x10] sm:$0xff] %v326
        %329 = vst [vmem:[#allocation2 + $0x18] sm:$0xff] %v327
        %v330 = vld [vmem:[%s272] sm:$0xff]
        %v331 = vld [vmem:[%s272 + $0x8] sm:$0xff]
        %v332 = vld [vmem:[#allocation8] sm:$0xff]
        %v333 = vld [vmem:[#allocation8 + $0x8] sm:$0xff]
        %v334 = vld [vmem:[#allocation8 + $0x10] sm:$0xff]
        %v335 = vld [vmem:[#allocation8 + $0x18] sm:$0xff]
        %v336 = vld [vmem:[#allocation8 + $0x20] sm:$0xff]
        %v337 = vld [vmem:[#allocation8 + $0x28] sm:$0xff]
        %v338 = vld [vmem:[#allocation8 + $0x30] sm:$0xff]
        %v339 = vld [vmem:[#allocation8 + $0x38] sm:$0xff]
        %v340 = vld [vmem:[#allocation8 + $0x40] sm:$0xff]
        %v341 = vld [vmem:[#allocation8 + $0x48] sm:$0xff]
        %v342 = vld [vmem:[#allocation8 + $0x50] sm:$0xff]
        %v343 = vld [vmem:[#allocation8 + $0x58] sm:$0xff]
        %v344 = vld [vmem:[#allocation8 + $0x60] sm:$0xff]
        %v345 = vld [vmem:[#allocation8 + $0x68] sm:$0xff]
        %v346 = vld [vmem:[#allocation8 + $0x70] sm:$0xff]
        %v347 = vld [vmem:[#allocation8 + $0x78] sm:$0xff]
        %v348 = vld [vmem:[#allocation8 + $0x80] sm:$0xff]
        %v349 = vld [vmem:[#allocation8 + $0x88] sm:$0xff]
        %v350 = vld [vmem:[#allocation8 + $0x90] sm:$0xff]
        %v351 = vld [vmem:[#allocation8 + $0x98] sm:$0xff]
        %v352 = vld [vmem:[#allocation8 + $0xa0] sm:$0xff]
        %v353 = vld [vmem:[#allocation8 + $0xa8] sm:$0xff]
        %v354 = vld [vmem:[#allocation8 + $0xb0] sm:$0xff]
        %v355 = vld [vmem:[#allocation8 + $0xb8] sm:$0xff]
        %v356 = vld [vmem:[#allocation8 + $0xc0] sm:$0xff]
        %v357 = vld [vmem:[#allocation8 + $0xc8] sm:$0xff]
        %v358 = vld [vmem:[#allocation8 + $0xd0] sm:$0xff]
        %v359 = vld [vmem:[#allocation8 + $0xd8] sm:$0xff]
        %v360 = vld [vmem:[#allocation8 + $0xe0] sm:$0xff]
        %v361 = vld [vmem:[#allocation8 + $0xe8] sm:$0xff]
        %v362 = vld [vmem:[#allocation8 + $0xf0] sm:$0xff]
        %v363 = vld [vmem:[#allocation8 + $0xf8] sm:$0xff]
        %v364 = vld [vmem:[#allocation2] sm:$0xfe]
        %v365 = vld [vmem:[#allocation2 + $0x8] sm:$0xfe]
        %v366 = vld [vmem:[#allocation2 + $0x10] sm:$0x1]
        %v367 = vld [vmem:[#allocation2 + $0x18] sm:$0x1]
        %s368 = scalar_lea.vmem [#allocation8], 256
        %v369 = vld [vmem:[%s368] sm:$0xff]
        %v370 = vld [vmem:[%s368 + $0x8] sm:$0xff]
        %v371 = vld [vmem:[%s368 + $0x10] sm:$0xff]
        %v372 = vld [vmem:[%s368 + $0x18] sm:$0xff]
        %v373 = vld [vmem:[%s368 + $0x20] sm:$0xff]
        %v374 = vld [vmem:[%s368 + $0x28] sm:$0xff]
        %v375 = vld [vmem:[%s368 + $0x30] sm:$0xff]
        %v376 = vld [vmem:[%s368 + $0x38] sm:$0xff]
        %v377 = vld [vmem:[%s368 + $0x40] sm:$0xff]
        %v378 = vld [vmem:[%s368 + $0x48] sm:$0xff]
        %v379 = vld [vmem:[%s368 + $0x50] sm:$0xff]
        %v380 = vld [vmem:[%s368 + $0x58] sm:$0xff]
        %v381 = vld [vmem:[%s368 + $0x60] sm:$0xff]
        %v382 = vld [vmem:[%s368 + $0x68] sm:$0xff]
        %v383 = vld [vmem:[%s368 + $0x70] sm:$0xff]
        %v384 = vld [vmem:[%s368 + $0x78] sm:$0xff]
        %v385 = vld [vmem:[%s368 + $0x80] sm:$0xff]
        %v386 = vld [vmem:[%s368 + $0x88] sm:$0xff]
        %v387 = vld [vmem:[%s368 + $0x90] sm:$0xff]
        %v388 = vld [vmem:[%s368 + $0x98] sm:$0xff]
        %v389 = vld [vmem:[%s368 + $0xa0] sm:$0xff]
        %v390 = vld [vmem:[%s368 + $0xa8] sm:$0xff]
        %v391 = vld [vmem:[%s368 + $0xb0] sm:$0xff]
        %v392 = vld [vmem:[%s368 + $0xb8] sm:$0xff]
        %v393 = vld [vmem:[%s368 + $0xc0] sm:$0xff]
        %v394 = vld [vmem:[%s368 + $0xc8] sm:$0xff]
        %v395 = vld [vmem:[%s368 + $0xd0] sm:$0xff]
        %v396 = vld [vmem:[%s368 + $0xd8] sm:$0xff]
        %v397 = vld [vmem:[%s368 + $0xe0] sm:$0xff]
        %v398 = vld [vmem:[%s368 + $0xe8] sm:$0xff]
        %v399 = vld [vmem:[%s368 + $0xf0] sm:$0xff]
        %v400 = vld [vmem:[%s368 + $0xf8] sm:$0xff]
        %vm405 = vcmask 1046528
        %v406 = vrot.slane %v364, 1
        %v407 = vrot.slane %v366, 1
        %v408 = vsel %vm405, %v406, %v407
        %v409 = vrot.slane %v365, 1
        %v410 = vrot.slane %v367, 1
        %v411 = vsel %vm405, %v409, %v410
        %414 = vmatprep.subr.mxu0 0.0
        %v415 = vand.u32 %v369, 4294901760
        %416 = vmatpush1.msra.mxu0 %v415
        %417 = vmatprep.subr.mxu0 0.0
        %v418 = vand.u32 %v370, 4294901760
        %419 = vmatpush1.msra.mxu0 %v418
        %420 = vmatprep.subr.mxu0 0.0
        %v421 = vand.u32 %v371, 4294901760
        %422 = vmatpush1.msra.mxu0 %v421
        %423 = vmatprep.subr.mxu0 0.0
        %v424 = vand.u32 %v372, 4294901760
        %425 = vmatpush1.msra.mxu0 %v424
        %426 = vmatprep.subr.mxu0 0.0
        %v427 = vand.u32 %v373, 4294901760
        %428 = vmatpush1.msra.mxu0 %v427
        %429 = vmatprep.subr.mxu0 0.0
        %v430 = vand.u32 %v374, 4294901760
        %431 = vmatpush1.msra.mxu0 %v430
        %432 = vmatprep.subr.mxu0 0.0
        %v433 = vand.u32 %v375, 4294901760
        %434 = vmatpush1.msra.mxu0 %v433
        %435 = vmatprep.subr.mxu0 0.0
        %v436 = vand.u32 %v376, 4294901760
        %437 = vmatpush1.msra.mxu0 %v436
        %438 = vmatprep.subr.mxu0 0.0
        %v439 = vand.u32 %v377, 4294901760
        %440 = vmatpush1.msra.mxu0 %v439
        %441 = vmatprep.subr.mxu0 0.0
        %v442 = vand.u32 %v378, 4294901760
        %443 = vmatpush1.msra.mxu0 %v442
        %444 = vmatprep.subr.mxu0 0.0
        %v445 = vand.u32 %v379, 4294901760
        %446 = vmatpush1.msra.mxu0 %v445
        %447 = vmatprep.subr.mxu0 0.0
        %v448 = vand.u32 %v380, 4294901760
        %449 = vmatpush1.msra.mxu0 %v448
        %450 = vmatprep.subr.mxu0 0.0
        %v451 = vand.u32 %v381, 4294901760
        %452 = vmatpush1.msra.mxu0 %v451
        %453 = vmatprep.subr.mxu0 0.0
        %v454 = vand.u32 %v382, 4294901760
        %455 = vmatpush1.msra.mxu0 %v454
        %456 = vmatprep.subr.mxu0 0.0
        %v457 = vand.u32 %v383, 4294901760
        %458 = vmatpush1.msra.mxu0 %v457
        %459 = vmatprep.subr.mxu0 0.0
        %v460 = vand.u32 %v384, 4294901760
        %461 = vmatpush1.msra.mxu0 %v460
        %462 = vmatprep.subr.mxu0 0.0
        %v463 = vand.u32 %v385, 4294901760
        %464 = vmatpush1.msra.mxu0 %v463
        %465 = vmatprep.subr.mxu0 0.0
        %v466 = vand.u32 %v386, 4294901760
        %467 = vmatpush1.msra.mxu0 %v466
        %468 = vmatprep.subr.mxu0 0.0
        %v469 = vand.u32 %v387, 4294901760
        %470 = vmatpush1.msra.mxu0 %v469
        %471 = vmatprep.subr.mxu0 0.0
        %v472 = vand.u32 %v388, 4294901760
        %473 = vmatpush1.msra.mxu0 %v472
        %474 = vmatprep.subr.mxu0 0.0
        %v475 = vand.u32 %v389, 4294901760
        %476 = vmatpush1.msra.mxu0 %v475
        %477 = vmatprep.subr.mxu0 0.0
        %v478 = vand.u32 %v390, 4294901760
        %479 = vmatpush1.msra.mxu0 %v478
        %480 = vmatprep.subr.mxu0 0.0
        %v481 = vand.u32 %v391, 4294901760
        %482 = vmatpush1.msra.mxu0 %v481
        %483 = vmatprep.subr.mxu0 0.0
        %v484 = vand.u32 %v392, 4294901760
        %485 = vmatpush1.msra.mxu0 %v484
        %486 = vmatprep.subr.mxu0 0.0
        %v487 = vand.u32 %v393, 4294901760
        %488 = vmatpush1.msra.mxu0 %v487
        %489 = vmatprep.subr.mxu0 0.0
        %v490 = vand.u32 %v394, 4294901760
        %491 = vmatpush1.msra.mxu0 %v490
        %492 = vmatprep.subr.mxu0 0.0
        %v493 = vand.u32 %v395, 4294901760
        %494 = vmatpush1.msra.mxu0 %v493
        %495 = vmatprep.subr.mxu0 0.0
        %v496 = vand.u32 %v396, 4294901760
        %497 = vmatpush1.msra.mxu0 %v496
        %498 = vmatprep.subr.mxu0 0.0
        %v499 = vand.u32 %v397, 4294901760
        %500 = vmatpush1.msra.mxu0 %v499
        %501 = vmatprep.subr.mxu0 0.0
        %v502 = vand.u32 %v398, 4294901760
        %503 = vmatpush1.msra.mxu0 %v502
        %504 = vmatprep.subr.mxu0 0.0
        %v505 = vand.u32 %v399, 4294901760
        %506 = vmatpush1.msra.mxu0 %v505
        %507 = vmatprep.subr.mxu0 0.0
        %v508 = vand.u32 %v400, 4294901760
        %509 = vmatpush1.msra.mxu0 %v508
        %v510 = vand.u32 %v411, 4294901760
        %v511 = vsub.f32 %v411, %v510
        %v512 = vand.u32 %v511, 4294901760
        %v513 = vsub.f32 %v511, %v512
        %v514 = vand.u32 %v513, 4294901760
        %515 = vmatprep.mubr.f32.mxu0 %v514
        %v516 = vand.u32 %v408, 4294901760
        %v517 = vsub.f32 %v408, %v516
        %v518 = vand.u32 %v517, 4294901760
        %v519 = vsub.f32 %v517, %v518
        %v520 = vand.u32 %v519, 4294901760
        %521 = vmatmul.mubr.f32.gmra.mrb[0].mxu0 %v520
        %v522 = vpop.f32.mrb[0].mxu0
        %v523 = vadd.f32 0.0, %v522
        %v524 = vpop.f32.mrb[0].mxu0
        %525 = vdwg.mxu0
        %526 = vmatprep.subr.mxu0 0.0
        %v527 = vand.u32 %v369, 4294901760
        %v528 = vsub.f32 %v369, %v527
        %v529 = vand.u32 %v528, 4294901760
        %v530 = vsub.f32 %v528, %v529
        %v531 = vand.u32 %v530, 4294901760
        %532 = vmatpush1.msra.mxu0 %v531
        %533 = vmatprep.subr.mxu0 0.0
        %v534 = vand.u32 %v370, 4294901760
        %v535 = vsub.f32 %v370, %v534
        %v536 = vand.u32 %v535, 4294901760
        %v537 = vsub.f32 %v535, %v536
        %v538 = vand.u32 %v537, 4294901760
        %539 = vmatpush1.msra.mxu0 %v538
        %540 = vmatprep.subr.mxu0 0.0
        %v541 = vand.u32 %v371, 4294901760
        %v542 = vsub.f32 %v371, %v541
        %v543 = vand.u32 %v542, 4294901760
        %v544 = vsub.f32 %v542, %v543
        %v545 = vand.u32 %v544, 4294901760
        %546 = vmatpush1.msra.mxu0 %v545
        %547 = vmatprep.subr.mxu0 0.0
        %v548 = vand.u32 %v372, 4294901760
        %v549 = vsub.f32 %v372, %v548
        %v550 = vand.u32 %v549, 4294901760
        %v551 = vsub.f32 %v549, %v550
        %v552 = vand.u32 %v551, 4294901760
        %553 = vmatpush1.msra.mxu0 %v552
        %554 = vmatprep.subr.mxu0 0.0
        %v555 = vand.u32 %v373, 4294901760
        %v556 = vsub.f32 %v373, %v555
        %v557 = vand.u32 %v556, 4294901760
        %v558 = vsub.f32 %v556, %v557
        %v559 = vand.u32 %v558, 4294901760
        %560 = vmatpush1.msra.mxu0 %v559
        %561 = vmatprep.subr.mxu0 0.0
        %v562 = vand.u32 %v374, 4294901760
        %v563 = vsub.f32 %v374, %v562
        %v564 = vand.u32 %v563, 4294901760
        %v565 = vsub.f32 %v563, %v564
        %v566 = vand.u32 %v565, 4294901760
        %567 = vmatpush1.msra.mxu0 %v566
        %568 = vmatprep.subr.mxu0 0.0
        %v569 = vand.u32 %v375, 4294901760
        %v570 = vsub.f32 %v375, %v569
        %v571 = vand.u32 %v570, 4294901760
        %v572 = vsub.f32 %v570, %v571
        %v573 = vand.u32 %v572, 4294901760
        %574 = vmatpush1.msra.mxu0 %v573
        %575 = vmatprep.subr.mxu0 0.0
        %v576 = vand.u32 %v376, 4294901760
        %v577 = vsub.f32 %v376, %v576
        %v578 = vand.u32 %v577, 4294901760
        %v579 = vsub.f32 %v577, %v578
        %v580 = vand.u32 %v579, 4294901760
        %581 = vmatpush1.msra.mxu0 %v580
        %582 = vmatprep.subr.mxu0 0.0
        %v583 = vand.u32 %v377, 4294901760
        %v584 = vsub.f32 %v377, %v583
        %v585 = vand.u32 %v584, 4294901760
        %v586 = vsub.f32 %v584, %v585
        %v587 = vand.u32 %v586, 4294901760
        %588 = vmatpush1.msra.mxu0 %v587
        %589 = vmatprep.subr.mxu0 0.0
        %v590 = vand.u32 %v378, 4294901760
        %v591 = vsub.f32 %v378, %v590
        %v592 = vand.u32 %v591, 4294901760
        %v593 = vsub.f32 %v591, %v592
        %v594 = vand.u32 %v593, 4294901760
        %595 = vmatpush1.msra.mxu0 %v594
        %596 = vmatprep.subr.mxu0 0.0
        %v597 = vand.u32 %v379, 4294901760
        %v598 = vsub.f32 %v379, %v597
        %v599 = vand.u32 %v598, 4294901760
        %v600 = vsub.f32 %v598, %v599
        %v601 = vand.u32 %v600, 4294901760
        %602 = vmatpush1.msra.mxu0 %v601
        %603 = vmatprep.subr.mxu0 0.0
        %v604 = vand.u32 %v380, 4294901760
        %v605 = vsub.f32 %v380, %v604
        %v606 = vand.u32 %v605, 4294901760
        %v607 = vsub.f32 %v605, %v606
        %v608 = vand.u32 %v607, 4294901760
        %609 = vmatpush1.msra.mxu0 %v608
        %610 = vmatprep.subr.mxu0 0.0
        %v611 = vand.u32 %v381, 4294901760
        %v612 = vsub.f32 %v381, %v611
        %v613 = vand.u32 %v612, 4294901760
        %v614 = vsub.f32 %v612, %v613
        %v615 = vand.u32 %v614, 4294901760
        %616 = vmatpush1.msra.mxu0 %v615
        %617 = vmatprep.subr.mxu0 0.0
        %v618 = vand.u32 %v382, 4294901760
        %v619 = vsub.f32 %v382, %v618
        %v620 = vand.u32 %v619, 4294901760
        %v621 = vsub.f32 %v619, %v620
        %v622 = vand.u32 %v621, 4294901760
        %623 = vmatpush1.msra.mxu0 %v622
        %624 = vmatprep.subr.mxu0 0.0
        %v625 = vand.u32 %v383, 4294901760
        %v626 = vsub.f32 %v383, %v625
        %v627 = vand.u32 %v626, 4294901760
        %v628 = vsub.f32 %v626, %v627
        %v629 = vand.u32 %v628, 4294901760
        %630 = vmatpush1.msra.mxu0 %v629
        %631 = vmatprep.subr.mxu0 0.0
        %v632 = vand.u32 %v384, 4294901760
        %v633 = vsub.f32 %v384, %v632
        %v634 = vand.u32 %v633, 4294901760
        %v635 = vsub.f32 %v633, %v634
        %v636 = vand.u32 %v635, 4294901760
        %637 = vmatpush1.msra.mxu0 %v636
        %638 = vmatprep.subr.mxu0 0.0
        %v639 = vand.u32 %v385, 4294901760
        %v640 = vsub.f32 %v385, %v639
        %v641 = vand.u32 %v640, 4294901760
        %v642 = vsub.f32 %v640, %v641
        %v643 = vand.u32 %v642, 4294901760
        %644 = vmatpush1.msra.mxu0 %v643
        %645 = vmatprep.subr.mxu0 0.0
        %v646 = vand.u32 %v386, 4294901760
        %v647 = vsub.f32 %v386, %v646
        %v648 = vand.u32 %v647, 4294901760
        %v649 = vsub.f32 %v647, %v648
        %v650 = vand.u32 %v649, 4294901760
        %651 = vmatpush1.msra.mxu0 %v650
        %652 = vmatprep.subr.mxu0 0.0
        %v653 = vand.u32 %v387, 4294901760
        %v654 = vsub.f32 %v387, %v653
        %v655 = vand.u32 %v654, 4294901760
        %v656 = vsub.f32 %v654, %v655
        %v657 = vand.u32 %v656, 4294901760
        %658 = vmatpush1.msra.mxu0 %v657
        %659 = vmatprep.subr.mxu0 0.0
        %v660 = vand.u32 %v388, 4294901760
        %v661 = vsub.f32 %v388, %v660
        %v662 = vand.u32 %v661, 4294901760
        %v663 = vsub.f32 %v661, %v662
        %v664 = vand.u32 %v663, 4294901760
        %665 = vmatpush1.msra.mxu0 %v664
        %666 = vmatprep.subr.mxu0 0.0
        %v667 = vand.u32 %v389, 4294901760
        %v668 = vsub.f32 %v389, %v667
        %v669 = vand.u32 %v668, 4294901760
        %v670 = vsub.f32 %v668, %v669
        %v671 = vand.u32 %v670, 4294901760
        %672 = vmatpush1.msra.mxu0 %v671
        %673 = vmatprep.subr.mxu0 0.0
        %v674 = vand.u32 %v390, 4294901760
        %v675 = vsub.f32 %v390, %v674
        %v676 = vand.u32 %v675, 4294901760
        %v677 = vsub.f32 %v675, %v676
        %v678 = vand.u32 %v677, 4294901760
        %679 = vmatpush1.msra.mxu0 %v678
        %680 = vmatprep.subr.mxu0 0.0
        %v681 = vand.u32 %v391, 4294901760
        %v682 = vsub.f32 %v391, %v681
        %v683 = vand.u32 %v682, 4294901760
        %v684 = vsub.f32 %v682, %v683
        %v685 = vand.u32 %v684, 4294901760
        %686 = vmatpush1.msra.mxu0 %v685
        %687 = vmatprep.subr.mxu0 0.0
        %v688 = vand.u32 %v392, 4294901760
        %v689 = vsub.f32 %v392, %v688
        %v690 = vand.u32 %v689, 4294901760
        %v691 = vsub.f32 %v689, %v690
        %v692 = vand.u32 %v691, 4294901760
        %693 = vmatpush1.msra.mxu0 %v692
        %694 = vmatprep.subr.mxu0 0.0
        %v695 = vand.u32 %v393, 4294901760
        %v696 = vsub.f32 %v393, %v695
        %v697 = vand.u32 %v696, 4294901760
        %v698 = vsub.f32 %v696, %v697
        %v699 = vand.u32 %v698, 4294901760
        %700 = vmatpush1.msra.mxu0 %v699
        %701 = vmatprep.subr.mxu0 0.0
        %v702 = vand.u32 %v394, 4294901760
        %v703 = vsub.f32 %v394, %v702
        %v704 = vand.u32 %v703, 4294901760
        %v705 = vsub.f32 %v703, %v704
        %v706 = vand.u32 %v705, 4294901760
        %707 = vmatpush1.msra.mxu0 %v706
        %708 = vmatprep.subr.mxu0 0.0
        %v709 = vand.u32 %v395, 4294901760
        %v710 = vsub.f32 %v395, %v709
        %v711 = vand.u32 %v710, 4294901760
        %v712 = vsub.f32 %v710, %v711
        %v713 = vand.u32 %v712, 4294901760
        %714 = vmatpush1.msra.mxu0 %v713
        %715 = vmatprep.subr.mxu0 0.0
        %v716 = vand.u32 %v396, 4294901760
        %v717 = vsub.f32 %v396, %v716
        %v718 = vand.u32 %v717, 4294901760
        %v719 = vsub.f32 %v717, %v718
        %v720 = vand.u32 %v719, 4294901760
        %721 = vmatpush1.msra.mxu0 %v720
        %722 = vmatprep.subr.mxu0 0.0
        %v723 = vand.u32 %v397, 4294901760
        %v724 = vsub.f32 %v397, %v723
        %v725 = vand.u32 %v724, 4294901760
        %v726 = vsub.f32 %v724, %v725
        %v727 = vand.u32 %v726, 4294901760
        %728 = vmatpush1.msra.mxu0 %v727
        %729 = vmatprep.subr.mxu0 0.0
        %v730 = vand.u32 %v398, 4294901760
        %v731 = vsub.f32 %v398, %v730
        %v732 = vand.u32 %v731, 4294901760
        %v733 = vsub.f32 %v731, %v732
        %v734 = vand.u32 %v733, 4294901760
        %735 = vmatpush1.msra.mxu0 %v734
        %736 = vmatprep.subr.mxu0 0.0
        %v737 = vand.u32 %v399, 4294901760
        %v738 = vsub.f32 %v399, %v737
        %v739 = vand.u32 %v738, 4294901760
        %v740 = vsub.f32 %v738, %v739
        %v741 = vand.u32 %v740, 4294901760
        %742 = vmatpush1.msra.mxu0 %v741
        %743 = vmatprep.subr.mxu0 0.0
        %v744 = vand.u32 %v400, 4294901760
        %v745 = vsub.f32 %v400, %v744
        %v746 = vand.u32 %v745, 4294901760
        %v747 = vsub.f32 %v745, %v746
        %v748 = vand.u32 %v747, 4294901760
        %749 = vmatpush1.msra.mxu0 %v748
        %v750 = vand.u32 %v411, 4294901760
        %751 = vmatprep.mubr.f32.mxu0 %v750
        %v752 = vand.u32 %v408, 4294901760
        %753 = vmatmul.mubr.f32.gmra.mrb[0].mxu0 %v752
        %v754 = vpop.f32.mrb[0].mxu0
        %v755 = vadd.f32 %v523, %v754
        %v756 = vpop.f32.mrb[0].mxu0
        %757 = vdwg.mxu0
        %758 = vmatprep.subr.mxu0 0.0
        %v759 = vand.u32 %v369, 4294901760
        %v760 = vsub.f32 %v369, %v759
        %761 = vmatpush1.msra.mxu0 %v760
        %762 = vmatprep.subr.mxu0 0.0
        %v763 = vand.u32 %v370, 4294901760
        %v764 = vsub.f32 %v370, %v763
        %765 = vmatpush1.msra.mxu0 %v764
        %766 = vmatprep.subr.mxu0 0.0
        %v767 = vand.u32 %v371, 4294901760
        %v768 = vsub.f32 %v371, %v767
        %769 = vmatpush1.msra.mxu0 %v768
        %770 = vmatprep.subr.mxu0 0.0
        %v771 = vand.u32 %v372, 4294901760
        %v772 = vsub.f32 %v372, %v771
        %773 = vmatpush1.msra.mxu0 %v772
        %774 = vmatprep.subr.mxu0 0.0
        %v775 = vand.u32 %v373, 4294901760
        %v776 = vsub.f32 %v373, %v775
        %777 = vmatpush1.msra.mxu0 %v776
        %778 = vmatprep.subr.mxu0 0.0
        %v779 = vand.u32 %v374, 4294901760
        %v780 = vsub.f32 %v374, %v779
        %781 = vmatpush1.msra.mxu0 %v780
        %782 = vmatprep.subr.mxu0 0.0
        %v783 = vand.u32 %v375, 4294901760
        %v784 = vsub.f32 %v375, %v783
        %785 = vmatpush1.msra.mxu0 %v784
        %786 = vmatprep.subr.mxu0 0.0
        %v787 = vand.u32 %v376, 4294901760
        %v788 = vsub.f32 %v376, %v787
        %789 = vmatpush1.msra.mxu0 %v788
        %790 = vmatprep.subr.mxu0 0.0
        %v791 = vand.u32 %v377, 4294901760
        %v792 = vsub.f32 %v377, %v791
        %793 = vmatpush1.msra.mxu0 %v792
        %794 = vmatprep.subr.mxu0 0.0
        %v795 = vand.u32 %v378, 4294901760
        %v796 = vsub.f32 %v378, %v795
        %797 = vmatpush1.msra.mxu0 %v796
        %798 = vmatprep.subr.mxu0 0.0
        %v799 = vand.u32 %v379, 4294901760
        %v800 = vsub.f32 %v379, %v799
        %801 = vmatpush1.msra.mxu0 %v800
        %802 = vmatprep.subr.mxu0 0.0
        %v803 = vand.u32 %v380, 4294901760
        %v804 = vsub.f32 %v380, %v803
        %805 = vmatpush1.msra.mxu0 %v804
        %806 = vmatprep.subr.mxu0 0.0
        %v807 = vand.u32 %v381, 4294901760
        %v808 = vsub.f32 %v381, %v807
        %809 = vmatpush1.msra.mxu0 %v808
        %810 = vmatprep.subr.mxu0 0.0
        %v811 = vand.u32 %v382, 4294901760
        %v812 = vsub.f32 %v382, %v811
        %813 = vmatpush1.msra.mxu0 %v812
        %814 = vmatprep.subr.mxu0 0.0
        %v815 = vand.u32 %v383, 4294901760
        %v816 = vsub.f32 %v383, %v815
        %817 = vmatpush1.msra.mxu0 %v816
        %818 = vmatprep.subr.mxu0 0.0
        %v819 = vand.u32 %v384, 4294901760
        %v820 = vsub.f32 %v384, %v819
        %821 = vmatpush1.msra.mxu0 %v820
        %822 = vmatprep.subr.mxu0 0.0
        %v823 = vand.u32 %v385, 4294901760
        %v824 = vsub.f32 %v385, %v823
        %825 = vmatpush1.msra.mxu0 %v824
        %826 = vmatprep.subr.mxu0 0.0
        %v827 = vand.u32 %v386, 4294901760
        %v828 = vsub.f32 %v386, %v827
        %829 = vmatpush1.msra.mxu0 %v828
        %830 = vmatprep.subr.mxu0 0.0
        %v831 = vand.u32 %v387, 4294901760
        %v832 = vsub.f32 %v387, %v831
        %833 = vmatpush1.msra.mxu0 %v832
        %834 = vmatprep.subr.mxu0 0.0
        %v835 = vand.u32 %v388, 4294901760
        %v836 = vsub.f32 %v388, %v835
        %837 = vmatpush1.msra.mxu0 %v836
        %838 = vmatprep.subr.mxu0 0.0
        %v839 = vand.u32 %v389, 4294901760
        %v840 = vsub.f32 %v389, %v839
        %841 = vmatpush1.msra.mxu0 %v840
        %842 = vmatprep.subr.mxu0 0.0
        %v843 = vand.u32 %v390, 4294901760
        %v844 = vsub.f32 %v390, %v843
        %845 = vmatpush1.msra.mxu0 %v844
        %846 = vmatprep.subr.mxu0 0.0
        %v847 = vand.u32 %v391, 4294901760
        %v848 = vsub.f32 %v391, %v847
        %849 = vmatpush1.msra.mxu0 %v848
        %850 = vmatprep.subr.mxu0 0.0
        %v851 = vand.u32 %v392, 4294901760
        %v852 = vsub.f32 %v392, %v851
        %853 = vmatpush1.msra.mxu0 %v852
        %854 = vmatprep.subr.mxu0 0.0
        %v855 = vand.u32 %v393, 4294901760
        %v856 = vsub.f32 %v393, %v855
        %857 = vmatpush1.msra.mxu0 %v856
        %858 = vmatprep.subr.mxu0 0.0
        %v859 = vand.u32 %v394, 4294901760
        %v860 = vsub.f32 %v394, %v859
        %861 = vmatpush1.msra.mxu0 %v860
        %862 = vmatprep.subr.mxu0 0.0
        %v863 = vand.u32 %v395, 4294901760
        %v864 = vsub.f32 %v395, %v863
        %865 = vmatpush1.msra.mxu0 %v864
        %866 = vmatprep.subr.mxu0 0.0
        %v867 = vand.u32 %v396, 4294901760
        %v868 = vsub.f32 %v396, %v867
        %869 = vmatpush1.msra.mxu0 %v868
        %870 = vmatprep.subr.mxu0 0.0
        %v871 = vand.u32 %v397, 4294901760
        %v872 = vsub.f32 %v397, %v871
        %873 = vmatpush1.msra.mxu0 %v872
        %874 = vmatprep.subr.mxu0 0.0
        %v875 = vand.u32 %v398, 4294901760
        %v876 = vsub.f32 %v398, %v875
        %877 = vmatpush1.msra.mxu0 %v876
        %878 = vmatprep.subr.mxu0 0.0
        %v879 = vand.u32 %v399, 4294901760
        %v880 = vsub.f32 %v399, %v879
        %881 = vmatpush1.msra.mxu0 %v880
        %882 = vmatprep.subr.mxu0 0.0
        %v883 = vand.u32 %v400, 4294901760
        %v884 = vsub.f32 %v400, %v883
        %885 = vmatpush1.msra.mxu0 %v884
        %v886 = vand.u32 %v411, 4294901760
        %v887 = vsub.f32 %v411, %v886
        %888 = vmatprep.mubr.f32.mxu0 %v887
        %v889 = vand.u32 %v408, 4294901760
        %v890 = vsub.f32 %v408, %v889
        %891 = vmatmul.mubr.f32.gmra.mrb[0].mxu0 %v890
        %v892 = vpop.f32.mrb[0].mxu0
        %v893 = vadd.f32 %v755, %v892
        %v894 = vpop.f32.mrb[0].mxu0
        %895 = vdwg.mxu0
        %896 = vmatprep.subr.mxu0 0.0
        %v897 = vand.u32 %v369, 4294901760
        %898 = vmatpush1.msra.mxu0 %v897
        %899 = vmatprep.subr.mxu0 0.0
        %v900 = vand.u32 %v370, 4294901760
        %901 = vmatpush1.msra.mxu0 %v900
        %902 = vmatprep.subr.mxu0 0.0
        %v903 = vand.u32 %v371, 4294901760
        %904 = vmatpush1.msra.mxu0 %v903
        %905 = vmatprep.subr.mxu0 0.0
        %v906 = vand.u32 %v372, 4294901760
        %907 = vmatpush1.msra.mxu0 %v906
        %908 = vmatprep.subr.mxu0 0.0
        %v909 = vand.u32 %v373, 4294901760
        %910 = vmatpush1.msra.mxu0 %v909
        %911 = vmatprep.subr.mxu0 0.0
        %v912 = vand.u32 %v374, 4294901760
        %913 = vmatpush1.msra.mxu0 %v912
        %914 = vmatprep.subr.mxu0 0.0
        %v915 = vand.u32 %v375, 4294901760
        %916 = vmatpush1.msra.mxu0 %v915
        %917 = vmatprep.subr.mxu0 0.0
        %v918 = vand.u32 %v376, 4294901760
        %919 = vmatpush1.msra.mxu0 %v918
        %920 = vmatprep.subr.mxu0 0.0
        %v921 = vand.u32 %v377, 4294901760
        %922 = vmatpush1.msra.mxu0 %v921
        %923 = vmatprep.subr.mxu0 0.0
        %v924 = vand.u32 %v378, 4294901760
        %925 = vmatpush1.msra.mxu0 %v924
        %926 = vmatprep.subr.mxu0 0.0
        %v927 = vand.u32 %v379, 4294901760
        %928 = vmatpush1.msra.mxu0 %v927
        %929 = vmatprep.subr.mxu0 0.0
        %v930 = vand.u32 %v380, 4294901760
        %931 = vmatpush1.msra.mxu0 %v930
        %932 = vmatprep.subr.mxu0 0.0
        %v933 = vand.u32 %v381, 4294901760
        %934 = vmatpush1.msra.mxu0 %v933
        %935 = vmatprep.subr.mxu0 0.0
        %v936 = vand.u32 %v382, 4294901760
        %937 = vmatpush1.msra.mxu0 %v936
        %938 = vmatprep.subr.mxu0 0.0
        %v939 = vand.u32 %v383, 4294901760
        %940 = vmatpush1.msra.mxu0 %v939
        %941 = vmatprep.subr.mxu0 0.0
        %v942 = vand.u32 %v384, 4294901760
        %943 = vmatpush1.msra.mxu0 %v942
        %944 = vmatprep.subr.mxu0 0.0
        %v945 = vand.u32 %v385, 4294901760
        %946 = vmatpush1.msra.mxu0 %v945
        %947 = vmatprep.subr.mxu0 0.0
        %v948 = vand.u32 %v386, 4294901760
        %949 = vmatpush1.msra.mxu0 %v948
        %950 = vmatprep.subr.mxu0 0.0
        %v951 = vand.u32 %v387, 4294901760
        %952 = vmatpush1.msra.mxu0 %v951
        %953 = vmatprep.subr.mxu0 0.0
        %v954 = vand.u32 %v388, 4294901760
        %955 = vmatpush1.msra.mxu0 %v954
        %956 = vmatprep.subr.mxu0 0.0
        %v957 = vand.u32 %v389, 4294901760
        %958 = vmatpush1.msra.mxu0 %v957
        %959 = vmatprep.subr.mxu0 0.0
        %v960 = vand.u32 %v390, 4294901760
        %961 = vmatpush1.msra.mxu0 %v960
        %962 = vmatprep.subr.mxu0 0.0
        %v963 = vand.u32 %v391, 4294901760
        %964 = vmatpush1.msra.mxu0 %v963
        %965 = vmatprep.subr.mxu0 0.0
        %v966 = vand.u32 %v392, 4294901760
        %967 = vmatpush1.msra.mxu0 %v966
        %968 = vmatprep.subr.mxu0 0.0
        %v969 = vand.u32 %v393, 4294901760
        %970 = vmatpush1.msra.mxu0 %v969
        %971 = vmatprep.subr.mxu0 0.0
        %v972 = vand.u32 %v394, 4294901760
        %973 = vmatpush1.msra.mxu0 %v972
        %974 = vmatprep.subr.mxu0 0.0
        %v975 = vand.u32 %v395, 4294901760
        %976 = vmatpush1.msra.mxu0 %v975
        %977 = vmatprep.subr.mxu0 0.0
        %v978 = vand.u32 %v396, 4294901760
        %979 = vmatpush1.msra.mxu0 %v978
        %980 = vmatprep.subr.mxu0 0.0
        %v981 = vand.u32 %v397, 4294901760
        %982 = vmatpush1.msra.mxu0 %v981
        %983 = vmatprep.subr.mxu0 0.0
        %v984 = vand.u32 %v398, 4294901760
        %985 = vmatpush1.msra.mxu0 %v984
        %986 = vmatprep.subr.mxu0 0.0
        %v987 = vand.u32 %v399, 4294901760
        %988 = vmatpush1.msra.mxu0 %v987
        %989 = vmatprep.subr.mxu0 0.0
        %v990 = vand.u32 %v400, 4294901760
        %991 = vmatpush1.msra.mxu0 %v990
        %v992 = vand.u32 %v411, 4294901760
        %v993 = vsub.f32 %v411, %v992
        %v994 = vand.u32 %v993, 4294901760
        %995 = vmatprep.mubr.f32.mxu0 %v994
        %v996 = vand.u32 %v408, 4294901760
        %v997 = vsub.f32 %v408, %v996
        %v998 = vand.u32 %v997, 4294901760
        %999 = vmatmul.mubr.f32.gmra.mrb[0].mxu0 %v998
        %v1000 = vpop.f32.mrb[0].mxu0
        %v1001 = vadd.f32 %v893, %v1000
        %v1002 = vpop.f32.mrb[0].mxu0
        %1003 = vdwg.mxu0
        %1004 = vmatprep.subr.mxu0 0.0
        %v1005 = vand.u32 %v369, 4294901760
        %v1006 = vsub.f32 %v369, %v1005
        %v1007 = vand.u32 %v1006, 4294901760
        %1008 = vmatpush1.msra.mxu0 %v1007
        %1009 = vmatprep.subr.mxu0 0.0
        %v1010 = vand.u32 %v370, 4294901760
        %v1011 = vsub.f32 %v370, %v1010
        %v1012 = vand.u32 %v1011, 4294901760
        %1013 = vmatpush1.msra.mxu0 %v1012
        %1014 = vmatprep.subr.mxu0 0.0
        %v1015 = vand.u32 %v371, 4294901760
        %v1016 = vsub.f32 %v371, %v1015
        %v1017 = vand.u32 %v1016, 4294901760
        %1018 = vmatpush1.msra.mxu0 %v1017
        %1019 = vmatprep.subr.mxu0 0.0
        %v1020 = vand.u32 %v372, 4294901760
        %v1021 = vsub.f32 %v372, %v1020
        %v1022 = vand.u32 %v1021, 4294901760
        %1023 = vmatpush1.msra.mxu0 %v1022
        %1024 = vmatprep.subr.mxu0 0.0
        %v1025 = vand.u32 %v373, 4294901760
        %v1026 = vsub.f32 %v373, %v1025
        %v1027 = vand.u32 %v1026, 4294901760
        %1028 = vmatpush1.msra.mxu0 %v1027
        %1029 = vmatprep.subr.mxu0 0.0
        %v1030 = vand.u32 %v374, 4294901760
        %v1031 = vsub.f32 %v374, %v1030
        %v1032 = vand.u32 %v1031, 4294901760
        %1033 = vmatpush1.msra.mxu0 %v1032
        %1034 = vmatprep.subr.mxu0 0.0
        %v1035 = vand.u32 %v375, 4294901760
        %v1036 = vsub.f32 %v375, %v1035
        %v1037 = vand.u32 %v1036, 4294901760
        %1038 = vmatpush1.msra.mxu0 %v1037
        %1039 = vmatprep.subr.mxu0 0.0
        %v1040 = vand.u32 %v376, 4294901760
        %v1041 = vsub.f32 %v376, %v1040
        %v1042 = vand.u32 %v1041, 4294901760
        %1043 = vmatpush1.msra.mxu0 %v1042
        %1044 = vmatprep.subr.mxu0 0.0
        %v1045 = vand.u32 %v377, 4294901760
        %v1046 = vsub.f32 %v377, %v1045
        %v1047 = vand.u32 %v1046, 4294901760
        %1048 = vmatpush1.msra.mxu0 %v1047
        %1049 = vmatprep.subr.mxu0 0.0
        %v1050 = vand.u32 %v378, 4294901760
        %v1051 = vsub.f32 %v378, %v1050
        %v1052 = vand.u32 %v1051, 4294901760
        %1053 = vmatpush1.msra.mxu0 %v1052
        %1054 = vmatprep.subr.mxu0 0.0
        %v1055 = vand.u32 %v379, 4294901760
        %v1056 = vsub.f32 %v379, %v1055
        %v1057 = vand.u32 %v1056, 4294901760
        %1058 = vmatpush1.msra.mxu0 %v1057
        %1059 = vmatprep.subr.mxu0 0.0
        %v1060 = vand.u32 %v380, 4294901760
        %v1061 = vsub.f32 %v380, %v1060
        %v1062 = vand.u32 %v1061, 4294901760
        %1063 = vmatpush1.msra.mxu0 %v1062
        %1064 = vmatprep.subr.mxu0 0.0
        %v1065 = vand.u32 %v381, 4294901760
        %v1066 = vsub.f32 %v381, %v1065
        %v1067 = vand.u32 %v1066, 4294901760
        %1068 = vmatpush1.msra.mxu0 %v1067
        %1069 = vmatprep.subr.mxu0 0.0
        %v1070 = vand.u32 %v382, 4294901760
        %v1071 = vsub.f32 %v382, %v1070
        %v1072 = vand.u32 %v1071, 4294901760
        %1073 = vmatpush1.msra.mxu0 %v1072
        %1074 = vmatprep.subr.mxu0 0.0
        %v1075 = vand.u32 %v383, 4294901760
        %v1076 = vsub.f32 %v383, %v1075
        %v1077 = vand.u32 %v1076, 4294901760
        %1078 = vmatpush1.msra.mxu0 %v1077
        %1079 = vmatprep.subr.mxu0 0.0
        %v1080 = vand.u32 %v384, 4294901760
        %v1081 = vsub.f32 %v384, %v1080
        %v1082 = vand.u32 %v1081, 4294901760
        %1083 = vmatpush1.msra.mxu0 %v1082
        %1084 = vmatprep.subr.mxu0 0.0
        %v1085 = vand.u32 %v385, 4294901760
        %v1086 = vsub.f32 %v385, %v1085
        %v1087 = vand.u32 %v1086, 4294901760
        %1088 = vmatpush1.msra.mxu0 %v1087
        %1089 = vmatprep.subr.mxu0 0.0
        %v1090 = vand.u32 %v386, 4294901760
        %v1091 = vsub.f32 %v386, %v1090
        %v1092 = vand.u32 %v1091, 4294901760
        %1093 = vmatpush1.msra.mxu0 %v1092
        %1094 = vmatprep.subr.mxu0 0.0
        %v1095 = vand.u32 %v387, 4294901760
        %v1096 = vsub.f32 %v387, %v1095
        %v1097 = vand.u32 %v1096, 4294901760
        %1098 = vmatpush1.msra.mxu0 %v1097
        %1099 = vmatprep.subr.mxu0 0.0
        %v1100 = vand.u32 %v388, 4294901760
        %v1101 = vsub.f32 %v388, %v1100
        %v1102 = vand.u32 %v1101, 4294901760
        %1103 = vmatpush1.msra.mxu0 %v1102
        %1104 = vmatprep.subr.mxu0 0.0
        %v1105 = vand.u32 %v389, 4294901760
        %v1106 = vsub.f32 %v389, %v1105
        %v1107 = vand.u32 %v1106, 4294901760
        %1108 = vmatpush1.msra.mxu0 %v1107
        %1109 = vmatprep.subr.mxu0 0.0
        %v1110 = vand.u32 %v390, 4294901760
        %v1111 = vsub.f32 %v390, %v1110
        %v1112 = vand.u32 %v1111, 4294901760
        %1113 = vmatpush1.msra.mxu0 %v1112
        %1114 = vmatprep.subr.mxu0 0.0
        %v1115 = vand.u32 %v391, 4294901760
        %v1116 = vsub.f32 %v391, %v1115
        %v1117 = vand.u32 %v1116, 4294901760
        %1118 = vmatpush1.msra.mxu0 %v1117
        %1119 = vmatprep.subr.mxu0 0.0
        %v1120 = vand.u32 %v392, 4294901760
        %v1121 = vsub.f32 %v392, %v1120
        %v1122 = vand.u32 %v1121, 4294901760
        %1123 = vmatpush1.msra.mxu0 %v1122
        %1124 = vmatprep.subr.mxu0 0.0
        %v1125 = vand.u32 %v393, 4294901760
        %v1126 = vsub.f32 %v393, %v1125
        %v1127 = vand.u32 %v1126, 4294901760
        %1128 = vmatpush1.msra.mxu0 %v1127
        %1129 = vmatprep.subr.mxu0 0.0
        %v1130 = vand.u32 %v394, 4294901760
        %v1131 = vsub.f32 %v394, %v1130
        %v1132 = vand.u32 %v1131, 4294901760
        %1133 = vmatpush1.msra.mxu0 %v1132
        %1134 = vmatprep.subr.mxu0 0.0
        %v1135 = vand.u32 %v395, 4294901760
        %v1136 = vsub.f32 %v395, %v1135
        %v1137 = vand.u32 %v1136, 4294901760
        %1138 = vmatpush1.msra.mxu0 %v1137
        %1139 = vmatprep.subr.mxu0 0.0
        %v1140 = vand.u32 %v396, 4294901760
        %v1141 = vsub.f32 %v396, %v1140
        %v1142 = vand.u32 %v1141, 4294901760
        %1143 = vmatpush1.msra.mxu0 %v1142
        %1144 = vmatprep.subr.mxu0 0.0
        %v1145 = vand.u32 %v397, 4294901760
        %v1146 = vsub.f32 %v397, %v1145
        %v1147 = vand.u32 %v1146, 4294901760
        %1148 = vmatpush1.msra.mxu0 %v1147
        %1149 = vmatprep.subr.mxu0 0.0
        %v1150 = vand.u32 %v398, 4294901760
        %v1151 = vsub.f32 %v398, %v1150
        %v1152 = vand.u32 %v1151, 4294901760
        %1153 = vmatpush1.msra.mxu0 %v1152
        %1154 = vmatprep.subr.mxu0 0.0
        %v1155 = vand.u32 %v399, 4294901760
        %v1156 = vsub.f32 %v399, %v1155
        %v1157 = vand.u32 %v1156, 4294901760
        %1158 = vmatpush1.msra.mxu0 %v1157
        %1159 = vmatprep.subr.mxu0 0.0
        %v1160 = vand.u32 %v400, 4294901760
        %v1161 = vsub.f32 %v400, %v1160
        %v1162 = vand.u32 %v1161, 4294901760
        %1163 = vmatpush1.msra.mxu0 %v1162
        %v1164 = vand.u32 %v411, 4294901760
        %1165 = vmatprep.mubr.f32.mxu0 %v1164
        %v1166 = vand.u32 %v408, 4294901760
        %1167 = vmatmul.mubr.f32.gmra.mrb[0].mxu0 %v1166
        %v1168 = vpop.f32.mrb[0].mxu0
        %v1169 = vadd.f32 %v1001, %v1168
        %v1170 = vpop.f32.mrb[0].mxu0
        %1171 = vdwg.mxu0
        %1172 = vmatprep.subr.mxu0 0.0
        %v1173 = vand.u32 %v369, 4294901760
        %1174 = vmatpush1.msra.mxu0 %v1173
        %1175 = vmatprep.subr.mxu0 0.0
        %v1176 = vand.u32 %v370, 4294901760
        %1177 = vmatpush1.msra.mxu0 %v1176
        %1178 = vmatprep.subr.mxu0 0.0
        %v1179 = vand.u32 %v371, 4294901760
        %1180 = vmatpush1.msra.mxu0 %v1179
        %1181 = vmatprep.subr.mxu0 0.0
        %v1182 = vand.u32 %v372, 4294901760
        %1183 = vmatpush1.msra.mxu0 %v1182
        %1184 = vmatprep.subr.mxu0 0.0
        %v1185 = vand.u32 %v373, 4294901760
        %1186 = vmatpush1.msra.mxu0 %v1185
        %1187 = vmatprep.subr.mxu0 0.0
        %v1188 = vand.u32 %v374, 4294901760
        %1189 = vmatpush1.msra.mxu0 %v1188
        %1190 = vmatprep.subr.mxu0 0.0
        %v1191 = vand.u32 %v375, 4294901760
        %1192 = vmatpush1.msra.mxu0 %v1191
        %1193 = vmatprep.subr.mxu0 0.0
        %v1194 = vand.u32 %v376, 4294901760
        %1195 = vmatpush1.msra.mxu0 %v1194
        %1196 = vmatprep.subr.mxu0 0.0
        %v1197 = vand.u32 %v377, 4294901760
        %1198 = vmatpush1.msra.mxu0 %v1197
        %1199 = vmatprep.subr.mxu0 0.0
        %v1200 = vand.u32 %v378, 4294901760
        %1201 = vmatpush1.msra.mxu0 %v1200
        %1202 = vmatprep.subr.mxu0 0.0
        %v1203 = vand.u32 %v379, 4294901760
        %1204 = vmatpush1.msra.mxu0 %v1203
        %1205 = vmatprep.subr.mxu0 0.0
        %v1206 = vand.u32 %v380, 4294901760
        %1207 = vmatpush1.msra.mxu0 %v1206
        %1208 = vmatprep.subr.mxu0 0.0
        %v1209 = vand.u32 %v381, 4294901760
        %1210 = vmatpush1.msra.mxu0 %v1209
        %1211 = vmatprep.subr.mxu0 0.0
        %v1212 = vand.u32 %v382, 4294901760
        %1213 = vmatpush1.msra.mxu0 %v1212
        %1214 = vmatprep.subr.mxu0 0.0
        %v1215 = vand.u32 %v383, 4294901760
        %1216 = vmatpush1.msra.mxu0 %v1215
        %1217 = vmatprep.subr.mxu0 0.0
        %v1218 = vand.u32 %v384, 4294901760
        %1219 = vmatpush1.msra.mxu0 %v1218
        %1220 = vmatprep.subr.mxu0 0.0
        %v1221 = vand.u32 %v385, 4294901760
        %1222 = vmatpush1.msra.mxu0 %v1221
        %1223 = vmatprep.subr.mxu0 0.0
        %v1224 = vand.u32 %v386, 4294901760
        %1225 = vmatpush1.msra.mxu0 %v1224
        %1226 = vmatprep.subr.mxu0 0.0
        %v1227 = vand.u32 %v387, 4294901760
        %1228 = vmatpush1.msra.mxu0 %v1227
        %1229 = vmatprep.subr.mxu0 0.0
        %v1230 = vand.u32 %v388, 4294901760
        %1231 = vmatpush1.msra.mxu0 %v1230
        %1232 = vmatprep.subr.mxu0 0.0
        %v1233 = vand.u32 %v389, 4294901760
        %1234 = vmatpush1.msra.mxu0 %v1233
        %1235 = vmatprep.subr.mxu0 0.0
        %v1236 = vand.u32 %v390, 4294901760
        %1237 = vmatpush1.msra.mxu0 %v1236
        %1238 = vmatprep.subr.mxu0 0.0
        %v1239 = vand.u32 %v391, 4294901760
        %1240 = vmatpush1.msra.mxu0 %v1239
        %1241 = vmatprep.subr.mxu0 0.0
        %v1242 = vand.u32 %v392, 4294901760
        %1243 = vmatpush1.msra.mxu0 %v1242
        %1244 = vmatprep.subr.mxu0 0.0
        %v1245 = vand.u32 %v393, 4294901760
        %1246 = vmatpush1.msra.mxu0 %v1245
        %1247 = vmatprep.subr.mxu0 0.0
        %v1248 = vand.u32 %v394, 4294901760
        %1249 = vmatpush1.msra.mxu0 %v1248
        %1250 = vmatprep.subr.mxu0 0.0
        %v1251 = vand.u32 %v395, 4294901760
        %1252 = vmatpush1.msra.mxu0 %v1251
        %1253 = vmatprep.subr.mxu0 0.0
        %v1254 = vand.u32 %v396, 4294901760
        %1255 = vmatpush1.msra.mxu0 %v1254
        %1256 = vmatprep.subr.mxu0 0.0
        %v1257 = vand.u32 %v397, 4294901760
        %1258 = vmatpush1.msra.mxu0 %v1257
        %1259 = vmatprep.subr.mxu0 0.0
        %v1260 = vand.u32 %v398, 4294901760
        %1261 = vmatpush1.msra.mxu0 %v1260
        %1262 = vmatprep.subr.mxu0 0.0
        %v1263 = vand.u32 %v399, 4294901760
        %1264 = vmatpush1.msra.mxu0 %v1263
        %1265 = vmatprep.subr.mxu0 0.0
        %v1266 = vand.u32 %v400, 4294901760
        %1267 = vmatpush1.msra.mxu0 %v1266
        %v1268 = vand.u32 %v411, 4294901760
        %1269 = vmatprep.mubr.f32.mxu0 %v1268
        %v1270 = vand.u32 %v408, 4294901760
        %1271 = vmatmul.mubr.f32.gmra.mrb[0].mxu0 %v1270
        %v1272 = vpop.f32.mrb[0].mxu0
        %v1273 = vadd.f32 %v1169, %v1272
        %v1274 = vpop.f32.mrb[0].mxu0
        %1275 = vdwg.mxu0
        %1276 = vmatprep.subr.mxu0 0.0
        %v1277 = vand.u32 %v332, 4294901760
        %1278 = vmatpush1.msra.mxu0 %v1277
        %1279 = vmatprep.subr.mxu0 0.0
        %v1280 = vand.u32 %v333, 4294901760
        %1281 = vmatpush1.msra.mxu0 %v1280
        %1282 = vmatprep.subr.mxu0 0.0
        %v1283 = vand.u32 %v334, 4294901760
        %1284 = vmatpush1.msra.mxu0 %v1283
        %1285 = vmatprep.subr.mxu0 0.0
        %v1286 = vand.u32 %v335, 4294901760
        %1287 = vmatpush1.msra.mxu0 %v1286
        %1288 = vmatprep.subr.mxu0 0.0
        %v1289 = vand.u32 %v336, 4294901760
        %1290 = vmatpush1.msra.mxu0 %v1289
        %1291 = vmatprep.subr.mxu0 0.0
        %v1292 = vand.u32 %v337, 4294901760
        %1293 = vmatpush1.msra.mxu0 %v1292
        %1294 = vmatprep.subr.mxu0 0.0
        %v1295 = vand.u32 %v338, 4294901760
        %1296 = vmatpush1.msra.mxu0 %v1295
        %1297 = vmatprep.subr.mxu0 0.0
        %v1298 = vand.u32 %v339, 4294901760
        %1299 = vmatpush1.msra.mxu0 %v1298
        %1300 = vmatprep.subr.mxu0 0.0
        %v1301 = vand.u32 %v340, 4294901760
        %1302 = vmatpush1.msra.mxu0 %v1301
        %1303 = vmatprep.subr.mxu0 0.0
        %v1304 = vand.u32 %v341, 4294901760
        %1305 = vmatpush1.msra.mxu0 %v1304
        %1306 = vmatprep.subr.mxu0 0.0
        %v1307 = vand.u32 %v342, 4294901760
        %1308 = vmatpush1.msra.mxu0 %v1307
        %1309 = vmatprep.subr.mxu0 0.0
        %v1310 = vand.u32 %v343, 4294901760
        %1311 = vmatpush1.msra.mxu0 %v1310
        %1312 = vmatprep.subr.mxu0 0.0
        %v1313 = vand.u32 %v344, 4294901760
        %1314 = vmatpush1.msra.mxu0 %v1313
        %1315 = vmatprep.subr.mxu0 0.0
        %v1316 = vand.u32 %v345, 4294901760
        %1317 = vmatpush1.msra.mxu0 %v1316
        %1318 = vmatprep.subr.mxu0 0.0
        %v1319 = vand.u32 %v346, 4294901760
        %1320 = vmatpush1.msra.mxu0 %v1319
        %1321 = vmatprep.subr.mxu0 0.0
        %v1322 = vand.u32 %v347, 4294901760
        %1323 = vmatpush1.msra.mxu0 %v1322
        %1324 = vmatprep.subr.mxu0 0.0
        %v1325 = vand.u32 %v348, 4294901760
        %1326 = vmatpush1.msra.mxu0 %v1325
        %1327 = vmatprep.subr.mxu0 0.0
        %v1328 = vand.u32 %v349, 4294901760
        %1329 = vmatpush1.msra.mxu0 %v1328
        %1330 = vmatprep.subr.mxu0 0.0
        %v1331 = vand.u32 %v350, 4294901760
        %1332 = vmatpush1.msra.mxu0 %v1331
        %1333 = vmatprep.subr.mxu0 0.0
        %v1334 = vand.u32 %v351, 4294901760
        %1335 = vmatpush1.msra.mxu0 %v1334
        %1336 = vmatprep.subr.mxu0 0.0
        %v1337 = vand.u32 %v352, 4294901760
        %1338 = vmatpush1.msra.mxu0 %v1337
        %1339 = vmatprep.subr.mxu0 0.0
        %v1340 = vand.u32 %v353, 4294901760
        %1341 = vmatpush1.msra.mxu0 %v1340
        %1342 = vmatprep.subr.mxu0 0.0
        %v1343 = vand.u32 %v354, 4294901760
        %1344 = vmatpush1.msra.mxu0 %v1343
        %1345 = vmatprep.subr.mxu0 0.0
        %v1346 = vand.u32 %v355, 4294901760
        %1347 = vmatpush1.msra.mxu0 %v1346
        %1348 = vmatprep.subr.mxu0 0.0
        %v1349 = vand.u32 %v356, 4294901760
        %1350 = vmatpush1.msra.mxu0 %v1349
        %1351 = vmatprep.subr.mxu0 0.0
        %v1352 = vand.u32 %v357, 4294901760
        %1353 = vmatpush1.msra.mxu0 %v1352
        %1354 = vmatprep.subr.mxu0 0.0
        %v1355 = vand.u32 %v358, 4294901760
        %1356 = vmatpush1.msra.mxu0 %v1355
        %1357 = vmatprep.subr.mxu0 0.0
        %v1358 = vand.u32 %v359, 4294901760
        %1359 = vmatpush1.msra.mxu0 %v1358
        %1360 = vmatprep.subr.mxu0 0.0
        %v1361 = vand.u32 %v360, 4294901760
        %1362 = vmatpush1.msra.mxu0 %v1361
        %1363 = vmatprep.subr.mxu0 0.0
        %v1364 = vand.u32 %v361, 4294901760
        %1365 = vmatpush1.msra.mxu0 %v1364
        %1366 = vmatprep.subr.mxu0 0.0
        %v1367 = vand.u32 %v362, 4294901760
        %1368 = vmatpush1.msra.mxu0 %v1367
        %1369 = vmatprep.subr.mxu0 0.0
        %v1370 = vand.u32 %v363, 4294901760
        %1371 = vmatpush1.msra.mxu0 %v1370
        %v1372 = vand.u32 %v331, 4294901760
        %v1373 = vsub.f32 %v331, %v1372
        %v1374 = vand.u32 %v1373, 4294901760
        %v1375 = vsub.f32 %v1373, %v1374
        %v1376 = vand.u32 %v1375, 4294901760
        %1377 = vmatprep.mubr.f32.mxu0 %v1376
        %v1378 = vand.u32 %v330, 4294901760
        %v1379 = vsub.f32 %v330, %v1378
        %v1380 = vand.u32 %v1379, 4294901760
        %v1381 = vsub.f32 %v1379, %v1380
        %v1382 = vand.u32 %v1381, 4294901760
        %1383 = vmatmul.mubr.f32.gmra.mrb[0].mxu0 %v1382
        %v1384 = vpop.f32.mrb[0].mxu0
        %v1385 = vadd.f32 %v1273, %v1384
        %v1386 = vpop.f32.mrb[0].mxu0
        %1387 = vdwg.mxu0
        %1388 = vmatprep.subr.mxu0 0.0
        %v1389 = vand.u32 %v332, 4294901760
        %v1390 = vsub.f32 %v332, %v1389
        %v1391 = vand.u32 %v1390, 4294901760
        %v1392 = vsub.f32 %v1390, %v1391
        %v1393 = vand.u32 %v1392, 4294901760
        %1394 = vmatpush1.msra.mxu0 %v1393
        %1395 = vmatprep.subr.mxu0 0.0
        %v1396 = vand.u32 %v333, 4294901760
        %v1397 = vsub.f32 %v333, %v1396
        %v1398 = vand.u32 %v1397, 4294901760
        %v1399 = vsub.f32 %v1397, %v1398
        %v1400 = vand.u32 %v1399, 4294901760
        %1401 = vmatpush1.msra.mxu0 %v1400
        %1402 = vmatprep.subr.mxu0 0.0
        %v1403 = vand.u32 %v334, 4294901760
        %v1404 = vsub.f32 %v334, %v1403
        %v1405 = vand.u32 %v1404, 4294901760
        %v1406 = vsub.f32 %v1404, %v1405
        %v1407 = vand.u32 %v1406, 4294901760
        %1408 = vmatpush1.msra.mxu0 %v1407
        %1409 = vmatprep.subr.mxu0 0.0
        %v1410 = vand.u32 %v335, 4294901760
        %v1411 = vsub.f32 %v335, %v1410
        %v1412 = vand.u32 %v1411, 4294901760
        %v1413 = vsub.f32 %v1411, %v1412
        %v1414 = vand.u32 %v1413, 4294901760
        %1415 = vmatpush1.msra.mxu0 %v1414
        %1416 = vmatprep.subr.mxu0 0.0
        %v1417 = vand.u32 %v336, 4294901760
        %v1418 = vsub.f32 %v336, %v1417
        %v1419 = vand.u32 %v1418, 4294901760
        %v1420 = vsub.f32 %v1418, %v1419
        %v1421 = vand.u32 %v1420, 4294901760
        %1422 = vmatpush1.msra.mxu0 %v1421
        %1423 = vmatprep.subr.mxu0 0.0
        %v1424 = vand.u32 %v337, 4294901760
        %v1425 = vsub.f32 %v337, %v1424
        %v1426 = vand.u32 %v1425, 4294901760
        %v1427 = vsub.f32 %v1425, %v1426
        %v1428 = vand.u32 %v1427, 4294901760
        %1429 = vmatpush1.msra.mxu0 %v1428
        %1430 = vmatprep.subr.mxu0 0.0
        %v1431 = vand.u32 %v338, 4294901760
        %v1432 = vsub.f32 %v338, %v1431
        %v1433 = vand.u32 %v1432, 4294901760
        %v1434 = vsub.f32 %v1432, %v1433
        %v1435 = vand.u32 %v1434, 4294901760
        %1436 = vmatpush1.msra.mxu0 %v1435
        %1437 = vmatprep.subr.mxu0 0.0
        %v1438 = vand.u32 %v339, 4294901760
        %v1439 = vsub.f32 %v339, %v1438
        %v1440 = vand.u32 %v1439, 4294901760
        %v1441 = vsub.f32 %v1439, %v1440
        %v1442 = vand.u32 %v1441, 4294901760
        %1443 = vmatpush1.msra.mxu0 %v1442
        %1444 = vmatprep.subr.mxu0 0.0
        %v1445 = vand.u32 %v340, 4294901760
        %v1446 = vsub.f32 %v340, %v1445
        %v1447 = vand.u32 %v1446, 4294901760
        %v1448 = vsub.f32 %v1446, %v1447
        %v1449 = vand.u32 %v1448, 4294901760
        %1450 = vmatpush1.msra.mxu0 %v1449
        %1451 = vmatprep.subr.mxu0 0.0
        %v1452 = vand.u32 %v341, 4294901760
        %v1453 = vsub.f32 %v341, %v1452
        %v1454 = vand.u32 %v1453, 4294901760
        %v1455 = vsub.f32 %v1453, %v1454
        %v1456 = vand.u32 %v1455, 4294901760
        %1457 = vmatpush1.msra.mxu0 %v1456
        %1458 = vmatprep.subr.mxu0 0.0
        %v1459 = vand.u32 %v342, 4294901760
        %v1460 = vsub.f32 %v342, %v1459
        %v1461 = vand.u32 %v1460, 4294901760
        %v1462 = vsub.f32 %v1460, %v1461
        %v1463 = vand.u32 %v1462, 4294901760
        %1464 = vmatpush1.msra.mxu0 %v1463
        %1465 = vmatprep.subr.mxu0 0.0
        %v1466 = vand.u32 %v343, 4294901760
        %v1467 = vsub.f32 %v343, %v1466
        %v1468 = vand.u32 %v1467, 4294901760
        %v1469 = vsub.f32 %v1467, %v1468
        %v1470 = vand.u32 %v1469, 4294901760
        %1471 = vmatpush1.msra.mxu0 %v1470
        %1472 = vmatprep.subr.mxu0 0.0
        %v1473 = vand.u32 %v344, 4294901760
        %v1474 = vsub.f32 %v344, %v1473
        %v1475 = vand.u32 %v1474, 4294901760
        %v1476 = vsub.f32 %v1474, %v1475
        %v1477 = vand.u32 %v1476, 4294901760
        %1478 = vmatpush1.msra.mxu0 %v1477
        %1479 = vmatprep.subr.mxu0 0.0
        %v1480 = vand.u32 %v345, 4294901760
        %v1481 = vsub.f32 %v345, %v1480
        %v1482 = vand.u32 %v1481, 4294901760
        %v1483 = vsub.f32 %v1481, %v1482
        %v1484 = vand.u32 %v1483, 4294901760
        %1485 = vmatpush1.msra.mxu0 %v1484
        %1486 = vmatprep.subr.mxu0 0.0
        %v1487 = vand.u32 %v346, 4294901760
        %v1488 = vsub.f32 %v346, %v1487
        %v1489 = vand.u32 %v1488, 4294901760
        %v1490 = vsub.f32 %v1488, %v1489
        %v1491 = vand.u32 %v1490, 4294901760
        %1492 = vmatpush1.msra.mxu0 %v1491
        %1493 = vmatprep.subr.mxu0 0.0
        %v1494 = vand.u32 %v347, 4294901760
        %v1495 = vsub.f32 %v347, %v1494
        %v1496 = vand.u32 %v1495, 4294901760
        %v1497 = vsub.f32 %v1495, %v1496
        %v1498 = vand.u32 %v1497, 4294901760
        %1499 = vmatpush1.msra.mxu0 %v1498
        %1500 = vmatprep.subr.mxu0 0.0
        %v1501 = vand.u32 %v348, 4294901760
        %v1502 = vsub.f32 %v348, %v1501
        %v1503 = vand.u32 %v1502, 4294901760
        %v1504 = vsub.f32 %v1502, %v1503
        %v1505 = vand.u32 %v1504, 4294901760
        %1506 = vmatpush1.msra.mxu0 %v1505
        %1507 = vmatprep.subr.mxu0 0.0
        %v1508 = vand.u32 %v349, 4294901760
        %v1509 = vsub.f32 %v349, %v1508
        %v1510 = vand.u32 %v1509, 4294901760
        %v1511 = vsub.f32 %v1509, %v1510
        %v1512 = vand.u32 %v1511, 4294901760
        %1513 = vmatpush1.msra.mxu0 %v1512
        %1514 = vmatprep.subr.mxu0 0.0
        %v1515 = vand.u32 %v350, 4294901760
        %v1516 = vsub.f32 %v350, %v1515
        %v1517 = vand.u32 %v1516, 4294901760
        %v1518 = vsub.f32 %v1516, %v1517
        %v1519 = vand.u32 %v1518, 4294901760
        %1520 = vmatpush1.msra.mxu0 %v1519
        %1521 = vmatprep.subr.mxu0 0.0
        %v1522 = vand.u32 %v351, 4294901760
        %v1523 = vsub.f32 %v351, %v1522
        %v1524 = vand.u32 %v1523, 4294901760
        %v1525 = vsub.f32 %v1523, %v1524
        %v1526 = vand.u32 %v1525, 4294901760
        %1527 = vmatpush1.msra.mxu0 %v1526
        %1528 = vmatprep.subr.mxu0 0.0
        %v1529 = vand.u32 %v352, 4294901760
        %v1530 = vsub.f32 %v352, %v1529
        %v1531 = vand.u32 %v1530, 4294901760
        %v1532 = vsub.f32 %v1530, %v1531
        %v1533 = vand.u32 %v1532, 4294901760
        %1534 = vmatpush1.msra.mxu0 %v1533
        %1535 = vmatprep.subr.mxu0 0.0
        %v1536 = vand.u32 %v353, 4294901760
        %v1537 = vsub.f32 %v353, %v1536
        %v1538 = vand.u32 %v1537, 4294901760
        %v1539 = vsub.f32 %v1537, %v1538
        %v1540 = vand.u32 %v1539, 4294901760
        %1541 = vmatpush1.msra.mxu0 %v1540
        %1542 = vmatprep.subr.mxu0 0.0
        %v1543 = vand.u32 %v354, 4294901760
        %v1544 = vsub.f32 %v354, %v1543
        %v1545 = vand.u32 %v1544, 4294901760
        %v1546 = vsub.f32 %v1544, %v1545
        %v1547 = vand.u32 %v1546, 4294901760
        %1548 = vmatpush1.msra.mxu0 %v1547
        %1549 = vmatprep.subr.mxu0 0.0
        %v1550 = vand.u32 %v355, 4294901760
        %v1551 = vsub.f32 %v355, %v1550
        %v1552 = vand.u32 %v1551, 4294901760
        %v1553 = vsub.f32 %v1551, %v1552
        %v1554 = vand.u32 %v1553, 4294901760
        %1555 = vmatpush1.msra.mxu0 %v1554
        %1556 = vmatprep.subr.mxu0 0.0
        %v1557 = vand.u32 %v356, 4294901760
        %v1558 = vsub.f32 %v356, %v1557
        %v1559 = vand.u32 %v1558, 4294901760
        %v1560 = vsub.f32 %v1558, %v1559
        %v1561 = vand.u32 %v1560, 4294901760
        %1562 = vmatpush1.msra.mxu0 %v1561
        %1563 = vmatprep.subr.mxu0 0.0
        %v1564 = vand.u32 %v357, 4294901760
        %v1565 = vsub.f32 %v357, %v1564
        %v1566 = vand.u32 %v1565, 4294901760
        %v1567 = vsub.f32 %v1565, %v1566
        %v1568 = vand.u32 %v1567, 4294901760
        %1569 = vmatpush1.msra.mxu0 %v1568
        %1570 = vmatprep.subr.mxu0 0.0
        %v1571 = vand.u32 %v358, 4294901760
        %v1572 = vsub.f32 %v358, %v1571
        %v1573 = vand.u32 %v1572, 4294901760
        %v1574 = vsub.f32 %v1572, %v1573
        %v1575 = vand.u32 %v1574, 4294901760
        %1576 = vmatpush1.msra.mxu0 %v1575
        %1577 = vmatprep.subr.mxu0 0.0
        %v1578 = vand.u32 %v359, 4294901760
        %v1579 = vsub.f32 %v359, %v1578
        %v1580 = vand.u32 %v1579, 4294901760
        %v1581 = vsub.f32 %v1579, %v1580
        %v1582 = vand.u32 %v1581, 4294901760
        %1583 = vmatpush1.msra.mxu0 %v1582
        %1584 = vmatprep.subr.mxu0 0.0
        %v1585 = vand.u32 %v360, 4294901760
        %v1586 = vsub.f32 %v360, %v1585
        %v1587 = vand.u32 %v1586, 4294901760
        %v1588 = vsub.f32 %v1586, %v1587
        %v1589 = vand.u32 %v1588, 4294901760
        %1590 = vmatpush1.msra.mxu0 %v1589
        %1591 = vmatprep.subr.mxu0 0.0
        %v1592 = vand.u32 %v361, 4294901760
        %v1593 = vsub.f32 %v361, %v1592
        %v1594 = vand.u32 %v1593, 4294901760
        %v1595 = vsub.f32 %v1593, %v1594
        %v1596 = vand.u32 %v1595, 4294901760
        %1597 = vmatpush1.msra.mxu0 %v1596
        %1598 = vmatprep.subr.mxu0 0.0
        %v1599 = vand.u32 %v362, 4294901760
        %v1600 = vsub.f32 %v362, %v1599
        %v1601 = vand.u32 %v1600, 4294901760
        %v1602 = vsub.f32 %v1600, %v1601
        %v1603 = vand.u32 %v1602, 4294901760
        %1604 = vmatpush1.msra.mxu0 %v1603
        %1605 = vmatprep.subr.mxu0 0.0
        %v1606 = vand.u32 %v363, 4294901760
        %v1607 = vsub.f32 %v363, %v1606
        %v1608 = vand.u32 %v1607, 4294901760
        %v1609 = vsub.f32 %v1607, %v1608
        %v1610 = vand.u32 %v1609, 4294901760
        %1611 = vmatpush1.msra.mxu0 %v1610
        %v1612 = vand.u32 %v331, 4294901760
        %1613 = vmatprep.mubr.f32.mxu0 %v1612
        %v1614 = vand.u32 %v330, 4294901760
        %1615 = vmatmul.mubr.f32.gmra.mrb[0].mxu0 %v1614
        %v1616 = vpop.f32.mrb[0].mxu0
        %v1617 = vadd.f32 %v1385, %v1616
        %v1618 = vpop.f32.mrb[0].mxu0
        %1619 = vdwg.mxu0
        %1620 = vmatprep.subr.mxu0 0.0
        %v1621 = vand.u32 %v332, 4294901760
        %v1622 = vsub.f32 %v332, %v1621
        %1623 = vmatpush1.msra.mxu0 %v1622
        %1624 = vmatprep.subr.mxu0 0.0
        %v1625 = vand.u32 %v333, 4294901760
        %v1626 = vsub.f32 %v333, %v1625
        %1627 = vmatpush1.msra.mxu0 %v1626
        %1628 = vmatprep.subr.mxu0 0.0
        %v1629 = vand.u32 %v334, 4294901760
        %v1630 = vsub.f32 %v334, %v1629
        %1631 = vmatpush1.msra.mxu0 %v1630
        %1632 = vmatprep.subr.mxu0 0.0
        %v1633 = vand.u32 %v335, 4294901760
        %v1634 = vsub.f32 %v335, %v1633
        %1635 = vmatpush1.msra.mxu0 %v1634
        %1636 = vmatprep.subr.mxu0 0.0
        %v1637 = vand.u32 %v336, 4294901760
        %v1638 = vsub.f32 %v336, %v1637
        %1639 = vmatpush1.msra.mxu0 %v1638
        %1640 = vmatprep.subr.mxu0 0.0
        %v1641 = vand.u32 %v337, 4294901760
        %v1642 = vsub.f32 %v337, %v1641
        %1643 = vmatpush1.msra.mxu0 %v1642
        %1644 = vmatprep.subr.mxu0 0.0
        %v1645 = vand.u32 %v338, 4294901760
        %v1646 = vsub.f32 %v338, %v1645
        %1647 = vmatpush1.msra.mxu0 %v1646
        %1648 = vmatprep.subr.mxu0 0.0
        %v1649 = vand.u32 %v339, 4294901760
        %v1650 = vsub.f32 %v339, %v1649
        %1651 = vmatpush1.msra.mxu0 %v1650
        %1652 = vmatprep.subr.mxu0 0.0
        %v1653 = vand.u32 %v340, 4294901760
        %v1654 = vsub.f32 %v340, %v1653
        %1655 = vmatpush1.msra.mxu0 %v1654
        %1656 = vmatprep.subr.mxu0 0.0
        %v1657 = vand.u32 %v341, 4294901760
        %v1658 = vsub.f32 %v341, %v1657
        %1659 = vmatpush1.msra.mxu0 %v1658
        %1660 = vmatprep.subr.mxu0 0.0
        %v1661 = vand.u32 %v342, 4294901760
        %v1662 = vsub.f32 %v342, %v1661
        %1663 = vmatpush1.msra.mxu0 %v1662
        %1664 = vmatprep.subr.mxu0 0.0
        %v1665 = vand.u32 %v343, 4294901760
        %v1666 = vsub.f32 %v343, %v1665
        %1667 = vmatpush1.msra.mxu0 %v1666
        %1668 = vmatprep.subr.mxu0 0.0
        %v1669 = vand.u32 %v344, 4294901760
        %v1670 = vsub.f32 %v344, %v1669
        %1671 = vmatpush1.msra.mxu0 %v1670
        %1672 = vmatprep.subr.mxu0 0.0
        %v1673 = vand.u32 %v345, 4294901760
        %v1674 = vsub.f32 %v345, %v1673
        %1675 = vmatpush1.msra.mxu0 %v1674
        %1676 = vmatprep.subr.mxu0 0.0
        %v1677 = vand.u32 %v346, 4294901760
        %v1678 = vsub.f32 %v346, %v1677
        %1679 = vmatpush1.msra.mxu0 %v1678
        %1680 = vmatprep.subr.mxu0 0.0
        %v1681 = vand.u32 %v347, 4294901760
        %v1682 = vsub.f32 %v347, %v1681
        %1683 = vmatpush1.msra.mxu0 %v1682
        %1684 = vmatprep.subr.mxu0 0.0
        %v1685 = vand.u32 %v348, 4294901760
        %v1686 = vsub.f32 %v348, %v1685
        %1687 = vmatpush1.msra.mxu0 %v1686
        %1688 = vmatprep.subr.mxu0 0.0
        %v1689 = vand.u32 %v349, 4294901760
        %v1690 = vsub.f32 %v349, %v1689
        %1691 = vmatpush1.msra.mxu0 %v1690
        %1692 = vmatprep.subr.mxu0 0.0
        %v1693 = vand.u32 %v350, 4294901760
        %v1694 = vsub.f32 %v350, %v1693
        %1695 = vmatpush1.msra.mxu0 %v1694
        %1696 = vmatprep.subr.mxu0 0.0
        %v1697 = vand.u32 %v351, 4294901760
        %v1698 = vsub.f32 %v351, %v1697
        %1699 = vmatpush1.msra.mxu0 %v1698
        %1700 = vmatprep.subr.mxu0 0.0
        %v1701 = vand.u32 %v352, 4294901760
        %v1702 = vsub.f32 %v352, %v1701
        %1703 = vmatpush1.msra.mxu0 %v1702
        %1704 = vmatprep.subr.mxu0 0.0
        %v1705 = vand.u32 %v353, 4294901760
        %v1706 = vsub.f32 %v353, %v1705
        %1707 = vmatpush1.msra.mxu0 %v1706
        %1708 = vmatprep.subr.mxu0 0.0
        %v1709 = vand.u32 %v354, 4294901760
        %v1710 = vsub.f32 %v354, %v1709
        %1711 = vmatpush1.msra.mxu0 %v1710
        %1712 = vmatprep.subr.mxu0 0.0
        %v1713 = vand.u32 %v355, 4294901760
        %v1714 = vsub.f32 %v355, %v1713
        %1715 = vmatpush1.msra.mxu0 %v1714
        %1716 = vmatprep.subr.mxu0 0.0
        %v1717 = vand.u32 %v356, 4294901760
        %v1718 = vsub.f32 %v356, %v1717
        %1719 = vmatpush1.msra.mxu0 %v1718
        %1720 = vmatprep.subr.mxu0 0.0
        %v1721 = vand.u32 %v357, 4294901760
        %v1722 = vsub.f32 %v357, %v1721
        %1723 = vmatpush1.msra.mxu0 %v1722
        %1724 = vmatprep.subr.mxu0 0.0
        %v1725 = vand.u32 %v358, 4294901760
        %v1726 = vsub.f32 %v358, %v1725
        %1727 = vmatpush1.msra.mxu0 %v1726
        %1728 = vmatprep.subr.mxu0 0.0
        %v1729 = vand.u32 %v359, 4294901760
        %v1730 = vsub.f32 %v359, %v1729
        %1731 = vmatpush1.msra.mxu0 %v1730
        %1732 = vmatprep.subr.mxu0 0.0
        %v1733 = vand.u32 %v360, 4294901760
        %v1734 = vsub.f32 %v360, %v1733
        %1735 = vmatpush1.msra.mxu0 %v1734
        %1736 = vmatprep.subr.mxu0 0.0
        %v1737 = vand.u32 %v361, 4294901760
        %v1738 = vsub.f32 %v361, %v1737
        %1739 = vmatpush1.msra.mxu0 %v1738
        %1740 = vmatprep.subr.mxu0 0.0
        %v1741 = vand.u32 %v362, 4294901760
        %v1742 = vsub.f32 %v362, %v1741
        %1743 = vmatpush1.msra.mxu0 %v1742
        %1744 = vmatprep.subr.mxu0 0.0
        %v1745 = vand.u32 %v363, 4294901760
        %v1746 = vsub.f32 %v363, %v1745
        %1747 = vmatpush1.msra.mxu0 %v1746
        %v1748 = vand.u32 %v331, 4294901760
        %v1749 = vsub.f32 %v331, %v1748
        %1750 = vmatprep.mubr.f32.mxu0 %v1749
        %v1751 = vand.u32 %v330, 4294901760
        %v1752 = vsub.f32 %v330, %v1751
        %1753 = vmatmul.mubr.f32.gmra.mrb[0].mxu0 %v1752
        %v1754 = vpop.f32.mrb[0].mxu0
        %v1755 = vadd.f32 %v1617, %v1754
        %v1756 = vpop.f32.mrb[0].mxu0
        %1757 = vdwg.mxu0
        %1758 = vmatprep.subr.mxu0 0.0
        %v1759 = vand.u32 %v332, 4294901760
        %1760 = vmatpush1.msra.mxu0 %v1759
        %1761 = vmatprep.subr.mxu0 0.0
        %v1762 = vand.u32 %v333, 4294901760
        %1763 = vmatpush1.msra.mxu0 %v1762
        %1764 = vmatprep.subr.mxu0 0.0
        %v1765 = vand.u32 %v334, 4294901760
        %1766 = vmatpush1.msra.mxu0 %v1765
        %1767 = vmatprep.subr.mxu0 0.0
        %v1768 = vand.u32 %v335, 4294901760
        %1769 = vmatpush1.msra.mxu0 %v1768
        %1770 = vmatprep.subr.mxu0 0.0
        %v1771 = vand.u32 %v336, 4294901760
        %1772 = vmatpush1.msra.mxu0 %v1771
        %1773 = vmatprep.subr.mxu0 0.0
        %v1774 = vand.u32 %v337, 4294901760
        %1775 = vmatpush1.msra.mxu0 %v1774
        %1776 = vmatprep.subr.mxu0 0.0
        %v1777 = vand.u32 %v338, 4294901760
        %1778 = vmatpush1.msra.mxu0 %v1777
        %1779 = vmatprep.subr.mxu0 0.0
        %v1780 = vand.u32 %v339, 4294901760
        %1781 = vmatpush1.msra.mxu0 %v1780
        %1782 = vmatprep.subr.mxu0 0.0
        %v1783 = vand.u32 %v340, 4294901760
        %1784 = vmatpush1.msra.mxu0 %v1783
        %1785 = vmatprep.subr.mxu0 0.0
        %v1786 = vand.u32 %v341, 4294901760
        %1787 = vmatpush1.msra.mxu0 %v1786
        %1788 = vmatprep.subr.mxu0 0.0
        %v1789 = vand.u32 %v342, 4294901760
        %1790 = vmatpush1.msra.mxu0 %v1789
        %1791 = vmatprep.subr.mxu0 0.0
        %v1792 = vand.u32 %v343, 4294901760
        %1793 = vmatpush1.msra.mxu0 %v1792
        %1794 = vmatprep.subr.mxu0 0.0
        %v1795 = vand.u32 %v344, 4294901760
        %1796 = vmatpush1.msra.mxu0 %v1795
        %1797 = vmatprep.subr.mxu0 0.0
        %v1798 = vand.u32 %v345, 4294901760
        %1799 = vmatpush1.msra.mxu0 %v1798
        %1800 = vmatprep.subr.mxu0 0.0
        %v1801 = vand.u32 %v346, 4294901760
        %1802 = vmatpush1.msra.mxu0 %v1801
        %1803 = vmatprep.subr.mxu0 0.0
        %v1804 = vand.u32 %v347, 4294901760
        %1805 = vmatpush1.msra.mxu0 %v1804
        %1806 = vmatprep.subr.mxu0 0.0
        %v1807 = vand.u32 %v348, 4294901760
        %1808 = vmatpush1.msra.mxu0 %v1807
        %1809 = vmatprep.subr.mxu0 0.0
        %v1810 = vand.u32 %v349, 4294901760
        %1811 = vmatpush1.msra.mxu0 %v1810
        %1812 = vmatprep.subr.mxu0 0.0
        %v1813 = vand.u32 %v350, 4294901760
        %1814 = vmatpush1.msra.mxu0 %v1813
        %1815 = vmatprep.subr.mxu0 0.0
        %v1816 = vand.u32 %v351, 4294901760
        %1817 = vmatpush1.msra.mxu0 %v1816
        %1818 = vmatprep.subr.mxu0 0.0
        %v1819 = vand.u32 %v352, 4294901760
        %1820 = vmatpush1.msra.mxu0 %v1819
        %1821 = vmatprep.subr.mxu0 0.0
        %v1822 = vand.u32 %v353, 4294901760
        %1823 = vmatpush1.msra.mxu0 %v1822
        %1824 = vmatprep.subr.mxu0 0.0
        %v1825 = vand.u32 %v354, 4294901760
        %1826 = vmatpush1.msra.mxu0 %v1825
        %1827 = vmatprep.subr.mxu0 0.0
        %v1828 = vand.u32 %v355, 4294901760
        %1829 = vmatpush1.msra.mxu0 %v1828
        %1830 = vmatprep.subr.mxu0 0.0
        %v1831 = vand.u32 %v356, 4294901760
        %1832 = vmatpush1.msra.mxu0 %v1831
        %1833 = vmatprep.subr.mxu0 0.0
        %v1834 = vand.u32 %v357, 4294901760
        %1835 = vmatpush1.msra.mxu0 %v1834
        %1836 = vmatprep.subr.mxu0 0.0
        %v1837 = vand.u32 %v358, 4294901760
        %1838 = vmatpush1.msra.mxu0 %v1837
        %1839 = vmatprep.subr.mxu0 0.0
        %v1840 = vand.u32 %v359, 4294901760
        %1841 = vmatpush1.msra.mxu0 %v1840
        %1842 = vmatprep.subr.mxu0 0.0
        %v1843 = vand.u32 %v360, 4294901760
        %1844 = vmatpush1.msra.mxu0 %v1843
        %1845 = vmatprep.subr.mxu0 0.0
        %v1846 = vand.u32 %v361, 4294901760
        %1847 = vmatpush1.msra.mxu0 %v1846
        %1848 = vmatprep.subr.mxu0 0.0
        %v1849 = vand.u32 %v362, 4294901760
        %1850 = vmatpush1.msra.mxu0 %v1849
        %1851 = vmatprep.subr.mxu0 0.0
        %v1852 = vand.u32 %v363, 4294901760
        %1853 = vmatpush1.msra.mxu0 %v1852
        %v1854 = vand.u32 %v331, 4294901760
        %v1855 = vsub.f32 %v331, %v1854
        %v1856 = vand.u32 %v1855, 4294901760
        %1857 = vmatprep.mubr.f32.mxu0 %v1856
        %v1858 = vand.u32 %v330, 4294901760
        %v1859 = vsub.f32 %v330, %v1858
        %v1860 = vand.u32 %v1859, 4294901760
        %1861 = vmatmul.mubr.f32.gmra.mrb[0].mxu0 %v1860
        %v1862 = vpop.f32.mrb[0].mxu0
        %v1863 = vadd.f32 %v1755, %v1862
        %v1864 = vpop.f32.mrb[0].mxu0
        %1865 = vdwg.mxu0
        %1866 = vmatprep.subr.mxu0 0.0
        %v1867 = vand.u32 %v332, 4294901760
        %v1868 = vsub.f32 %v332, %v1867
        %v1869 = vand.u32 %v1868, 4294901760
        %1870 = vmatpush1.msra.mxu0 %v1869
        %1871 = vmatprep.subr.mxu0 0.0
        %v1872 = vand.u32 %v333, 4294901760
        %v1873 = vsub.f32 %v333, %v1872
        %v1874 = vand.u32 %v1873, 4294901760
        %1875 = vmatpush1.msra.mxu0 %v1874
        %1876 = vmatprep.subr.mxu0 0.0
        %v1877 = vand.u32 %v334, 4294901760
        %v1878 = vsub.f32 %v334, %v1877
        %v1879 = vand.u32 %v1878, 4294901760
        %1880 = vmatpush1.msra.mxu0 %v1879
        %1881 = vmatprep.subr.mxu0 0.0
        %v1882 = vand.u32 %v335, 4294901760
        %v1883 = vsub.f32 %v335, %v1882
        %v1884 = vand.u32 %v1883, 4294901760
        %1885 = vmatpush1.msra.mxu0 %v1884
        %1886 = vmatprep.subr.mxu0 0.0
        %v1887 = vand.u32 %v336, 4294901760
        %v1888 = vsub.f32 %v336, %v1887
        %v1889 = vand.u32 %v1888, 4294901760
        %1890 = vmatpush1.msra.mxu0 %v1889
        %1891 = vmatprep.subr.mxu0 0.0
        %v1892 = vand.u32 %v337, 4294901760
        %v1893 = vsub.f32 %v337, %v1892
        %v1894 = vand.u32 %v1893, 4294901760
        %1895 = vmatpush1.msra.mxu0 %v1894
        %1896 = vmatprep.subr.mxu0 0.0
        %v1897 = vand.u32 %v338, 4294901760
        %v1898 = vsub.f32 %v338, %v1897
        %v1899 = vand.u32 %v1898, 4294901760
        %1900 = vmatpush1.msra.mxu0 %v1899
        %1901 = vmatprep.subr.mxu0 0.0
        %v1902 = vand.u32 %v339, 4294901760
        %v1903 = vsub.f32 %v339, %v1902
        %v1904 = vand.u32 %v1903, 4294901760
        %1905 = vmatpush1.msra.mxu0 %v1904
        %1906 = vmatprep.subr.mxu0 0.0
        %v1907 = vand.u32 %v340, 4294901760
        %v1908 = vsub.f32 %v340, %v1907
        %v1909 = vand.u32 %v1908, 4294901760
        %1910 = vmatpush1.msra.mxu0 %v1909
        %1911 = vmatprep.subr.mxu0 0.0
        %v1912 = vand.u32 %v341, 4294901760
        %v1913 = vsub.f32 %v341, %v1912
        %v1914 = vand.u32 %v1913, 4294901760
        %1915 = vmatpush1.msra.mxu0 %v1914
        %1916 = vmatprep.subr.mxu0 0.0
        %v1917 = vand.u32 %v342, 4294901760
        %v1918 = vsub.f32 %v342, %v1917
        %v1919 = vand.u32 %v1918, 4294901760
        %1920 = vmatpush1.msra.mxu0 %v1919
        %1921 = vmatprep.subr.mxu0 0.0
        %v1922 = vand.u32 %v343, 4294901760
        %v1923 = vsub.f32 %v343, %v1922
        %v1924 = vand.u32 %v1923, 4294901760
        %1925 = vmatpush1.msra.mxu0 %v1924
        %1926 = vmatprep.subr.mxu0 0.0
        %v1927 = vand.u32 %v344, 4294901760
        %v1928 = vsub.f32 %v344, %v1927
        %v1929 = vand.u32 %v1928, 4294901760
        %1930 = vmatpush1.msra.mxu0 %v1929
        %1931 = vmatprep.subr.mxu0 0.0
        %v1932 = vand.u32 %v345, 4294901760
        %v1933 = vsub.f32 %v345, %v1932
        %v1934 = vand.u32 %v1933, 4294901760
        %1935 = vmatpush1.msra.mxu0 %v1934
        %1936 = vmatprep.subr.mxu0 0.0
        %v1937 = vand.u32 %v346, 4294901760
        %v1938 = vsub.f32 %v346, %v1937
        %v1939 = vand.u32 %v1938, 4294901760
        %1940 = vmatpush1.msra.mxu0 %v1939
        %1941 = vmatprep.subr.mxu0 0.0
        %v1942 = vand.u32 %v347, 4294901760
        %v1943 = vsub.f32 %v347, %v1942
        %v1944 = vand.u32 %v1943, 4294901760
        %1945 = vmatpush1.msra.mxu0 %v1944
        %1946 = vmatprep.subr.mxu0 0.0
        %v1947 = vand.u32 %v348, 4294901760
        %v1948 = vsub.f32 %v348, %v1947
        %v1949 = vand.u32 %v1948, 4294901760
        %1950 = vmatpush1.msra.mxu0 %v1949
        %1951 = vmatprep.subr.mxu0 0.0
        %v1952 = vand.u32 %v349, 4294901760
        %v1953 = vsub.f32 %v349, %v1952
        %v1954 = vand.u32 %v1953, 4294901760
        %1955 = vmatpush1.msra.mxu0 %v1954
        %1956 = vmatprep.subr.mxu0 0.0
        %v1957 = vand.u32 %v350, 4294901760
        %v1958 = vsub.f32 %v350, %v1957
        %v1959 = vand.u32 %v1958, 4294901760
        %1960 = vmatpush1.msra.mxu0 %v1959
        %1961 = vmatprep.subr.mxu0 0.0
        %v1962 = vand.u32 %v351, 4294901760
        %v1963 = vsub.f32 %v351, %v1962
        %v1964 = vand.u32 %v1963, 4294901760
        %1965 = vmatpush1.msra.mxu0 %v1964
        %1966 = vmatprep.subr.mxu0 0.0
        %v1967 = vand.u32 %v352, 4294901760
        %v1968 = vsub.f32 %v352, %v1967
        %v1969 = vand.u32 %v1968, 4294901760
        %1970 = vmatpush1.msra.mxu0 %v1969
        %1971 = vmatprep.subr.mxu0 0.0
        %v1972 = vand.u32 %v353, 4294901760
        %v1973 = vsub.f32 %v353, %v1972
        %v1974 = vand.u32 %v1973, 4294901760
        %1975 = vmatpush1.msra.mxu0 %v1974
        %1976 = vmatprep.subr.mxu0 0.0
        %v1977 = vand.u32 %v354, 4294901760
        %v1978 = vsub.f32 %v354, %v1977
        %v1979 = vand.u32 %v1978, 4294901760
        %1980 = vmatpush1.msra.mxu0 %v1979
        %1981 = vmatprep.subr.mxu0 0.0
        %v1982 = vand.u32 %v355, 4294901760
        %v1983 = vsub.f32 %v355, %v1982
        %v1984 = vand.u32 %v1983, 4294901760
        %1985 = vmatpush1.msra.mxu0 %v1984
        %1986 = vmatprep.subr.mxu0 0.0
        %v1987 = vand.u32 %v356, 4294901760
        %v1988 = vsub.f32 %v356, %v1987
        %v1989 = vand.u32 %v1988, 4294901760
        %1990 = vmatpush1.msra.mxu0 %v1989
        %1991 = vmatprep.subr.mxu0 0.0
        %v1992 = vand.u32 %v357, 4294901760
        %v1993 = vsub.f32 %v357, %v1992
        %v1994 = vand.u32 %v1993, 4294901760
        %1995 = vmatpush1.msra.mxu0 %v1994
        %1996 = vmatprep.subr.mxu0 0.0
        %v1997 = vand.u32 %v358, 4294901760
        %v1998 = vsub.f32 %v358, %v1997
        %v1999 = vand.u32 %v1998, 4294901760
        %2000 = vmatpush1.msra.mxu0 %v1999
        %2001 = vmatprep.subr.mxu0 0.0
        %v2002 = vand.u32 %v359, 4294901760
        %v2003 = vsub.f32 %v359, %v2002
        %v2004 = vand.u32 %v2003, 4294901760
        %2005 = vmatpush1.msra.mxu0 %v2004
        %2006 = vmatprep.subr.mxu0 0.0
        %v2007 = vand.u32 %v360, 4294901760
        %v2008 = vsub.f32 %v360, %v2007
        %v2009 = vand.u32 %v2008, 4294901760
        %2010 = vmatpush1.msra.mxu0 %v2009
        %2011 = vmatprep.subr.mxu0 0.0
        %v2012 = vand.u32 %v361, 4294901760
        %v2013 = vsub.f32 %v361, %v2012
        %v2014 = vand.u32 %v2013, 4294901760
        %2015 = vmatpush1.msra.mxu0 %v2014
        %2016 = vmatprep.subr.mxu0 0.0
        %v2017 = vand.u32 %v362, 4294901760
        %v2018 = vsub.f32 %v362, %v2017
        %v2019 = vand.u32 %v2018, 4294901760
        %2020 = vmatpush1.msra.mxu0 %v2019
        %2021 = vmatprep.subr.mxu0 0.0
        %v2022 = vand.u32 %v363, 4294901760
        %v2023 = vsub.f32 %v363, %v2022
        %v2024 = vand.u32 %v2023, 4294901760
        %2025 = vmatpush1.msra.mxu0 %v2024
        %v2026 = vand.u32 %v331, 4294901760
        %2027 = vmatprep.mubr.f32.mxu0 %v2026
        %v2028 = vand.u32 %v330, 4294901760
        %2029 = vmatmul.mubr.f32.gmra.mrb[0].mxu0 %v2028
        %v2030 = vpop.f32.mrb[0].mxu0
        %v2031 = vadd.f32 %v1863, %v2030
        %v2032 = vpop.f32.mrb[0].mxu0
        %2033 = vdwg.mxu0
        %2034 = vmatprep.subr.mxu0 0.0
        %v2035 = vand.u32 %v332, 4294901760
        %2036 = vmatpush1.msra.mxu0 %v2035
        %2037 = vmatprep.subr.mxu0 0.0
        %v2038 = vand.u32 %v333, 4294901760
        %2039 = vmatpush1.msra.mxu0 %v2038
        %2040 = vmatprep.subr.mxu0 0.0
        %v2041 = vand.u32 %v334, 4294901760
        %2042 = vmatpush1.msra.mxu0 %v2041
        %2043 = vmatprep.subr.mxu0 0.0
        %v2044 = vand.u32 %v335, 4294901760
        %2045 = vmatpush1.msra.mxu0 %v2044
        %2046 = vmatprep.subr.mxu0 0.0
        %v2047 = vand.u32 %v336, 4294901760
        %2048 = vmatpush1.msra.mxu0 %v2047
        %2049 = vmatprep.subr.mxu0 0.0
        %v2050 = vand.u32 %v337, 4294901760
        %2051 = vmatpush1.msra.mxu0 %v2050
        %2052 = vmatprep.subr.mxu0 0.0
        %v2053 = vand.u32 %v338, 4294901760
        %2054 = vmatpush1.msra.mxu0 %v2053
        %2055 = vmatprep.subr.mxu0 0.0
        %v2056 = vand.u32 %v339, 4294901760
        %2057 = vmatpush1.msra.mxu0 %v2056
        %2058 = vmatprep.subr.mxu0 0.0
        %v2059 = vand.u32 %v340, 4294901760
        %2060 = vmatpush1.msra.mxu0 %v2059
        %2061 = vmatprep.subr.mxu0 0.0
        %v2062 = vand.u32 %v341, 4294901760
        %2063 = vmatpush1.msra.mxu0 %v2062
        %2064 = vmatprep.subr.mxu0 0.0
        %v2065 = vand.u32 %v342, 4294901760
        %2066 = vmatpush1.msra.mxu0 %v2065
        %2067 = vmatprep.subr.mxu0 0.0
        %v2068 = vand.u32 %v343, 4294901760
        %2069 = vmatpush1.msra.mxu0 %v2068
        %2070 = vmatprep.subr.mxu0 0.0
        %v2071 = vand.u32 %v344, 4294901760
        %2072 = vmatpush1.msra.mxu0 %v2071
        %2073 = vmatprep.subr.mxu0 0.0
        %v2074 = vand.u32 %v345, 4294901760
        %2075 = vmatpush1.msra.mxu0 %v2074
        %2076 = vmatprep.subr.mxu0 0.0
        %v2077 = vand.u32 %v346, 4294901760
        %2078 = vmatpush1.msra.mxu0 %v2077
        %2079 = vmatprep.subr.mxu0 0.0
        %v2080 = vand.u32 %v347, 4294901760
        %2081 = vmatpush1.msra.mxu0 %v2080
        %2082 = vmatprep.subr.mxu0 0.0
        %v2083 = vand.u32 %v348, 4294901760
        %2084 = vmatpush1.msra.mxu0 %v2083
        %2085 = vmatprep.subr.mxu0 0.0
        %v2086 = vand.u32 %v349, 4294901760
        %2087 = vmatpush1.msra.mxu0 %v2086
        %2088 = vmatprep.subr.mxu0 0.0
        %v2089 = vand.u32 %v350, 4294901760
        %2090 = vmatpush1.msra.mxu0 %v2089
        %2091 = vmatprep.subr.mxu0 0.0
        %v2092 = vand.u32 %v351, 4294901760
        %2093 = vmatpush1.msra.mxu0 %v2092
        %2094 = vmatprep.subr.mxu0 0.0
        %v2095 = vand.u32 %v352, 4294901760
        %2096 = vmatpush1.msra.mxu0 %v2095
        %2097 = vmatprep.subr.mxu0 0.0
        %v2098 = vand.u32 %v353, 4294901760
        %2099 = vmatpush1.msra.mxu0 %v2098
        %2100 = vmatprep.subr.mxu0 0.0
        %v2101 = vand.u32 %v354, 4294901760
        %2102 = vmatpush1.msra.mxu0 %v2101
        %2103 = vmatprep.subr.mxu0 0.0
        %v2104 = vand.u32 %v355, 4294901760
        %2105 = vmatpush1.msra.mxu0 %v2104
        %2106 = vmatprep.subr.mxu0 0.0
        %v2107 = vand.u32 %v356, 4294901760
        %2108 = vmatpush1.msra.mxu0 %v2107
        %2109 = vmatprep.subr.mxu0 0.0
        %v2110 = vand.u32 %v357, 4294901760
        %2111 = vmatpush1.msra.mxu0 %v2110
        %2112 = vmatprep.subr.mxu0 0.0
        %v2113 = vand.u32 %v358, 4294901760
        %2114 = vmatpush1.msra.mxu0 %v2113
        %2115 = vmatprep.subr.mxu0 0.0
        %v2116 = vand.u32 %v359, 4294901760
        %2117 = vmatpush1.msra.mxu0 %v2116
        %2118 = vmatprep.subr.mxu0 0.0
        %v2119 = vand.u32 %v360, 4294901760
        %2120 = vmatpush1.msra.mxu0 %v2119
        %2121 = vmatprep.subr.mxu0 0.0
        %v2122 = vand.u32 %v361, 4294901760
        %2123 = vmatpush1.msra.mxu0 %v2122
        %2124 = vmatprep.subr.mxu0 0.0
        %v2125 = vand.u32 %v362, 4294901760
        %2126 = vmatpush1.msra.mxu0 %v2125
        %2127 = vmatprep.subr.mxu0 0.0
        %v2128 = vand.u32 %v363, 4294901760
        %2129 = vmatpush1.msra.mxu0 %v2128
        %v2130 = vand.u32 %v331, 4294901760
        %2131 = vmatprep.mubr.f32.mxu0 %v2130
        %v2132 = vand.u32 %v330, 4294901760
        %2133 = vmatmul.mubr.f32.gmra.mrb[0].mxu0 %v2132
        %v2134 = vpop.f32.mrb[0].mxu0
        %v2135 = vadd.f32 %v2031, %v2134
        %v2136 = vpop.f32.mrb[0].mxu0
        %2137 = vdwg.mxu0
        %v2138 = vld [vmem:[#allocation2] sm:$0xfc]
        %v2139 = vld [vmem:[#allocation2 + $0x8] sm:$0xfc]
        %v2140 = vld [vmem:[#allocation2 + $0x10] sm:$0x3]
        %v2141 = vld [vmem:[#allocation2 + $0x18] sm:$0x3]
        %s2142 = scalar_lea.vmem [#allocation8], 512
        %v2143 = vld [vmem:[%s2142] sm:$0xff]
        %v2144 = vld [vmem:[%s2142 + $0x8] sm:$0xff]
        %v2145 = vld [vmem:[%s2142 + $0x10] sm:$0xff]
        %v2146 = vld [vmem:[%s2142 + $0x18] sm:$0xff]
        %v2147 = vld [vmem:[%s2142 + $0x20] sm:$0xff]
        %v2148 = vld [vmem:[%s2142 + $0x28] sm:$0xff]
        %v2149 = vld [vmem:[%s2142 + $0x30] sm:$0xff]
        %v2150 = vld [vmem:[%s2142 + $0x38] sm:$0xff]
        %v2151 = vld [vmem:[%s2142 + $0x40] sm:$0xff]
        %v2152 = vld [vmem:[%s2142 + $0x48] sm:$0xff]
        %v2153 = vld [vmem:[%s2142 + $0x50] sm:$0xff]
        %v2154 = vld [vmem:[%s2142 + $0x58] sm:$0xff]
        %v2155 = vld [vmem:[%s2142 + $0x60] sm:$0xff]
        %v2156 = vld [vmem:[%s2142 + $0x68] sm:$0xff]
        %v2157 = vld [vmem:[%s2142 + $0x70] sm:$0xff]
        %v2158 = vld [vmem:[%s2142 + $0x78] sm:$0xff]
        %v2159 = vld [vmem:[%s2142 + $0x80] sm:$0xff]
        %v2160 = vld [vmem:[%s2142 + $0x88] sm:$0xff]
        %v2161 = vld [vmem:[%s2142 + $0x90] sm:$0xff]
        %v2162 = vld [vmem:[%s2142 + $0x98] sm:$0xff]
        %v2163 = vld [vmem:[%s2142 + $0xa0] sm:$0xff]
        %v2164 = vld [vmem:[%s2142 + $0xa8] sm:$0xff]
        %v2165 = vld [vmem:[%s2142 + $0xb0] sm:$0xff]
        %v2166 = vld [vmem:[%s2142 + $0xb8] sm:$0xff]
        %v2167 = vld [vmem:[%s2142 + $0xc0] sm:$0xff]
        %v2168 = vld [vmem:[%s2142 + $0xc8] sm:$0xff]
        %v2169 = vld [vmem:[%s2142 + $0xd0] sm:$0xff]
        %v2170 = vld [vmem:[%s2142 + $0xd8] sm:$0xff]
        %v2171 = vld [vmem:[%s2142 + $0xe0] sm:$0xff]
        %v2172 = vld [vmem:[%s2142 + $0xe8] sm:$0xff]
        %v2173 = vld [vmem:[%s2142 + $0xf0] sm:$0xff]
        %v2174 = vld [vmem:[%s2142 + $0xf8] sm:$0xff]
        %vm2179 = vcmask 1045504
        %v2180 = vrot.slane %v2138, 2
        %v2181 = vrot.slane %v2140, 2
        %v2182 = vsel %vm2179, %v2180, %v2181
        %v2183 = vrot.slane %v2139, 2
        %v2184 = vrot.slane %v2141, 2
        %v2185 = vsel %vm2179, %v2183, %v2184
        %2188 = vmatprep.subr.mxu0 0.0
        %v2189 = vand.u32 %v2143, 4294901760
        %2190 = vmatpush1.msra.mxu0 %v2189
        %2191 = vmatprep.subr.mxu0 0.0
        %v2192 = vand.u32 %v2144, 4294901760
        %2193 = vmatpush1.msra.mxu0 %v2192
        %2194 = vmatprep.subr.mxu0 0.0
        %v2195 = vand.u32 %v2145, 4294901760
        %2196 = vmatpush1.msra.mxu0 %v2195
        %2197 = vmatprep.subr.mxu0 0.0
        %v2198 = vand.u32 %v2146, 4294901760
        %2199 = vmatpush1.msra.mxu0 %v2198
        %2200 = vmatprep.subr.mxu0 0.0
        %v2201 = vand.u32 %v2147, 4294901760
        %2202 = vmatpush1.msra.mxu0 %v2201
        %2203 = vmatprep.subr.mxu0 0.0
        %v2204 = vand.u32 %v2148, 4294901760
        %2205 = vmatpush1.msra.mxu0 %v2204
        %2206 = vmatprep.subr.mxu0 0.0
        %v2207 = vand.u32 %v2149, 4294901760
        %2208 = vmatpush1.msra.mxu0 %v2207
        %2209 = vmatprep.subr.mxu0 0.0
        %v2210 = vand.u32 %v2150, 4294901760
        %2211 = vmatpush1.msra.mxu0 %v2210
        %2212 = vmatprep.subr.mxu0 0.0
        %v2213 = vand.u32 %v2151, 4294901760
        %2214 = vmatpush1.msra.mxu0 %v2213
        %2215 = vmatprep.subr.mxu0 0.0
        %v2216 = vand.u32 %v2152, 4294901760
        %2217 = vmatpush1.msra.mxu0 %v2216
        %2218 = vmatprep.subr.mxu0 0.0
        %v2219 = vand.u32 %v2153, 4294901760
        %2220 = vmatpush1.msra.mxu0 %v2219
        %2221 = vmatprep.subr.mxu0 0.0
        %v2222 = vand.u32 %v2154, 4294901760
        %2223 = vmatpush1.msra.mxu0 %v2222
        %2224 = vmatprep.subr.mxu0 0.0
        %v2225 = vand.u32 %v2155, 4294901760
        %2226 = vmatpush1.msra.mxu0 %v2225
        %2227 = vmatprep.subr.mxu0 0.0
        %v2228 = vand.u32 %v2156, 4294901760
        %2229 = vmatpush1.msra.mxu0 %v2228
        %2230 = vmatprep.subr.mxu0 0.0
        %v2231 = vand.u32 %v2157, 4294901760
        %2232 = vmatpush1.msra.mxu0 %v2231
        %2233 = vmatprep.subr.mxu0 0.0
        %v2234 = vand.u32 %v2158, 4294901760
        %2235 = vmatpush1.msra.mxu0 %v2234
        %2236 = vmatprep.subr.mxu0 0.0
        %v2237 = vand.u32 %v2159, 4294901760
        %2238 = vmatpush1.msra.mxu0 %v2237
        %2239 = vmatprep.subr.mxu0 0.0
        %v2240 = vand.u32 %v2160, 4294901760
        %2241 = vmatpush1.msra.mxu0 %v2240
        %2242 = vmatprep.subr.mxu0 0.0
        %v2243 = vand.u32 %v2161, 4294901760
        %2244 = vmatpush1.msra.mxu0 %v2243
        %2245 = vmatprep.subr.mxu0 0.0
        %v2246 = vand.u32 %v2162, 4294901760
        %2247 = vmatpush1.msra.mxu0 %v2246
        %2248 = vmatprep.subr.mxu0 0.0
        %v2249 = vand.u32 %v2163, 4294901760
        %2250 = vmatpush1.msra.mxu0 %v2249
        %2251 = vmatprep.subr.mxu0 0.0
        %v2252 = vand.u32 %v2164, 4294901760
        %2253 = vmatpush1.msra.mxu0 %v2252
        %2254 = vmatprep.subr.mxu0 0.0
        %v2255 = vand.u32 %v2165, 4294901760
        %2256 = vmatpush1.msra.mxu0 %v2255
        %2257 = vmatprep.subr.mxu0 0.0
        %v2258 = vand.u32 %v2166, 4294901760
        %2259 = vmatpush1.msra.mxu0 %v2258
        %2260 = vmatprep.subr.mxu0 0.0
        %v2261 = vand.u32 %v2167, 4294901760
        %2262 = vmatpush1.msra.mxu0 %v2261
        %2263 = vmatprep.subr.mxu0 0.0
        %v2264 = vand.u32 %v2168, 4294901760
        %2265 = vmatpush1.msra.mxu0 %v2264
        %2266 = vmatprep.subr.mxu0 0.0
        %v2267 = vand.u32 %v2169, 4294901760
        %2268 = vmatpush1.msra.mxu0 %v2267
        %2269 = vmatprep.subr.mxu0 0.0
        %v2270 = vand.u32 %v2170, 4294901760
        %2271 = vmatpush1.msra.mxu0 %v2270
        %2272 = vmatprep.subr.mxu0 0.0
        %v2273 = vand.u32 %v2171, 4294901760
        %2274 = vmatpush1.msra.mxu0 %v2273
        %2275 = vmatprep.subr.mxu0 0.0
        %v2276 = vand.u32 %v2172, 4294901760
        %2277 = vmatpush1.msra.mxu0 %v2276
        %2278 = vmatprep.subr.mxu0 0.0
        %v2279 = vand.u32 %v2173, 4294901760
        %2280 = vmatpush1.msra.mxu0 %v2279
        %2281 = vmatprep.subr.mxu0 0.0
        %v2282 = vand.u32 %v2174, 4294901760
        %2283 = vmatpush1.msra.mxu0 %v2282
        %v2284 = vand.u32 %v2185, 4294901760
        %v2285 = vsub.f32 %v2185, %v2284
        %v2286 = vand.u32 %v2285, 4294901760
        %v2287 = vsub.f32 %v2285, %v2286
        %v2288 = vand.u32 %v2287, 4294901760
        %2289 = vmatprep.mubr.f32.mxu0 %v2288
        %v2290 = vand.u32 %v2182, 4294901760
        %v2291 = vsub.f32 %v2182, %v2290
        %v2292 = vand.u32 %v2291, 4294901760
        %v2293 = vsub.f32 %v2291, %v2292
        %v2294 = vand.u32 %v2293, 4294901760
        %2295 = vmatmul.mubr.f32.gmra.mrb[0].mxu0 %v2294
        %v2296 = vpop.f32.mrb[0].mxu0
        %v2297 = vadd.f32 0.0, %v2296
        %v2298 = vpop.f32.mrb[0].mxu0
        %2299 = vdwg.mxu0
        %2300 = vmatprep.subr.mxu0 0.0
        %v2301 = vand.u32 %v2143, 4294901760
        %v2302 = vsub.f32 %v2143, %v2301
        %v2303 = vand.u32 %v2302, 4294901760
        %v2304 = vsub.f32 %v2302, %v2303
        %v2305 = vand.u32 %v2304, 4294901760
        %2306 = vmatpush1.msra.mxu0 %v2305
        %2307 = vmatprep.subr.mxu0 0.0
        %v2308 = vand.u32 %v2144, 4294901760
        %v2309 = vsub.f32 %v2144, %v2308
        %v2310 = vand.u32 %v2309, 4294901760
        %v2311 = vsub.f32 %v2309, %v2310
        %v2312 = vand.u32 %v2311, 4294901760
        %2313 = vmatpush1.msra.mxu0 %v2312
        %2314 = vmatprep.subr.mxu0 0.0
        %v2315 = vand.u32 %v2145, 4294901760
        %v2316 = vsub.f32 %v2145, %v2315
        %v2317 = vand.u32 %v2316, 4294901760
        %v2318 = vsub.f32 %v2316, %v2317
        %v2319 = vand.u32 %v2318, 4294901760
        %2320 = vmatpush1.msra.mxu0 %v2319
        %2321 = vmatprep.subr.mxu0 0.0
        %v2322 = vand.u32 %v2146, 4294901760
        %v2323 = vsub.f32 %v2146, %v2322
        %v2324 = vand.u32 %v2323, 4294901760
        %v2325 = vsub.f32 %v2323, %v2324
        %v2326 = vand.u32 %v2325, 4294901760
        %2327 = vmatpush1.msra.mxu0 %v2326
        %2328 = vmatprep.subr.mxu0 0.0
        %v2329 = vand.u32 %v2147, 4294901760
        %v2330 = vsub.f32 %v2147, %v2329
        %v2331 = vand.u32 %v2330, 4294901760
        %v2332 = vsub.f32 %v2330, %v2331
        %v2333 = vand.u32 %v2332, 4294901760
        %2334 = vmatpush1.msra.mxu0 %v2333
        %2335 = vmatprep.subr.mxu0 0.0
        %v2336 = vand.u32 %v2148, 4294901760
        %v2337 = vsub.f32 %v2148, %v2336
        %v2338 = vand.u32 %v2337, 4294901760
        %v2339 = vsub.f32 %v2337, %v2338
        %v2340 = vand.u32 %v2339, 4294901760
        %2341 = vmatpush1.msra.mxu0 %v2340
        %2342 = vmatprep.subr.mxu0 0.0
        %v2343 = vand.u32 %v2149, 4294901760
        %v2344 = vsub.f32 %v2149, %v2343
        %v2345 = vand.u32 %v2344, 4294901760
        %v2346 = vsub.f32 %v2344, %v2345
        %v2347 = vand.u32 %v2346, 4294901760
        %2348 = vmatpush1.msra.mxu0 %v2347
        %2349 = vmatprep.subr.mxu0 0.0
        %v2350 = vand.u32 %v2150, 4294901760
        %v2351 = vsub.f32 %v2150, %v2350
        %v2352 = vand.u32 %v2351, 4294901760
        %v2353 = vsub.f32 %v2351, %v2352
        %v2354 = vand.u32 %v2353, 4294901760
        %2355 = vmatpush1.msra.mxu0 %v2354
        %2356 = vmatprep.subr.mxu0 0.0
        %v2357 = vand.u32 %v2151, 4294901760
        %v2358 = vsub.f32 %v2151, %v2357
        %v2359 = vand.u32 %v2358, 4294901760
        %v2360 = vsub.f32 %v2358, %v2359
        %v2361 = vand.u32 %v2360, 4294901760
        %2362 = vmatpush1.msra.mxu0 %v2361
        %2363 = vmatprep.subr.mxu0 0.0
        %v2364 = vand.u32 %v2152, 4294901760
        %v2365 = vsub.f32 %v2152, %v2364
        %v2366 = vand.u32 %v2365, 4294901760
        %v2367 = vsub.f32 %v2365, %v2366
        %v2368 = vand.u32 %v2367, 4294901760
        %2369 = vmatpush1.msra.mxu0 %v2368
        %2370 = vmatprep.subr.mxu0 0.0
        %v2371 = vand.u32 %v2153, 4294901760
        %v2372 = vsub.f32 %v2153, %v2371
        %v2373 = vand.u32 %v2372, 4294901760
        %v2374 = vsub.f32 %v2372, %v2373
        %v2375 = vand.u32 %v2374, 4294901760
        %2376 = vmatpush1.msra.mxu0 %v2375
        %2377 = vmatprep.subr.mxu0 0.0
        %v2378 = vand.u32 %v2154, 4294901760
        %v2379 = vsub.f32 %v2154, %v2378
        %v2380 = vand.u32 %v2379, 4294901760
        %v2381 = vsub.f32 %v2379, %v2380
        %v2382 = vand.u32 %v2381, 4294901760
        %2383 = vmatpush1.msra.mxu0 %v2382
        %2384 = vmatprep.subr.mxu0 0.0
        %v2385 = vand.u32 %v2155, 4294901760
        %v2386 = vsub.f32 %v2155, %v2385
        %v2387 = vand.u32 %v2386, 4294901760
        %v2388 = vsub.f32 %v2386, %v2387
        %v2389 = vand.u32 %v2388, 4294901760
        %2390 = vmatpush1.msra.mxu0 %v2389
        %2391 = vmatprep.subr.mxu0 0.0
        %v2392 = vand.u32 %v2156, 4294901760
        %v2393 = vsub.f32 %v2156, %v2392
        %v2394 = vand.u32 %v2393, 4294901760
        %v2395 = vsub.f32 %v2393, %v2394
        %v2396 = vand.u32 %v2395, 4294901760
        %2397 = vmatpush1.msra.mxu0 %v2396
        %2398 = vmatprep.subr.mxu0 0.0
        %v2399 = vand.u32 %v2157, 4294901760
        %v2400 = vsub.f32 %v2157, %v2399
        %v2401 = vand.u32 %v2400, 4294901760
        %v2402 = vsub.f32 %v2400, %v2401
        %v2403 = vand.u32 %v2402, 4294901760
        %2404 = vmatpush1.msra.mxu0 %v2403
        %2405 = vmatprep.subr.mxu0 0.0
        %v2406 = vand.u32 %v2158, 4294901760
        %v2407 = vsub.f32 %v2158, %v2406
        %v2408 = vand.u32 %v2407, 4294901760
        %v2409 = vsub.f32 %v2407, %v2408
        %v2410 = vand.u32 %v2409, 4294901760
        %2411 = vmatpush1.msra.mxu0 %v2410
        %2412 = vmatprep.subr.mxu0 0.0
        %v2413 = vand.u32 %v2159, 4294901760
        %v2414 = vsub.f32 %v2159, %v2413
        %v2415 = vand.u32 %v2414, 4294901760
        %v2416 = vsub.f32 %v2414, %v2415
        %v2417 = vand.u32 %v2416, 4294901760
        %2418 = vmatpush1.msra.mxu0 %v2417
        %2419 = vmatprep.subr.mxu0 0.0
        %v2420 = vand.u32 %v2160, 4294901760
        %v2421 = vsub.f32 %v2160, %v2420
        %v2422 = vand.u32 %v2421, 4294901760
        %v2423 = vsub.f32 %v2421, %v2422
        %v2424 = vand.u32 %v2423, 4294901760
        %2425 = vmatpush1.msra.mxu0 %v2424
        %2426 = vmatprep.subr.mxu0 0.0
        %v2427 = vand.u32 %v2161, 4294901760
        %v2428 = vsub.f32 %v2161, %v2427
        %v2429 = vand.u32 %v2428, 4294901760
        %v2430 = vsub.f32 %v2428, %v2429
        %v2431 = vand.u32 %v2430, 4294901760
        %2432 = vmatpush1.msra.mxu0 %v2431
        %2433 = vmatprep.subr.mxu0 0.0
        %v2434 = vand.u32 %v2162, 4294901760
        %v2435 = vsub.f32 %v2162, %v2434
        %v2436 = vand.u32 %v2435, 4294901760
        %v2437 = vsub.f32 %v2435, %v2436
        %v2438 = vand.u32 %v2437, 4294901760
        %2439 = vmatpush1.msra.mxu0 %v2438
        %2440 = vmatprep.subr.mxu0 0.0
        %v2441 = vand.u32 %v2163, 4294901760
        %v2442 = vsub.f32 %v2163, %v2441
        %v2443 = vand.u32 %v2442, 4294901760
        %v2444 = vsub.f32 %v2442, %v2443
        %v2445 = vand.u32 %v2444, 4294901760
        %2446 = vmatpush1.msra.mxu0 %v2445
        %2447 = vmatprep.subr.mxu0 0.0
        %v2448 = vand.u32 %v2164, 4294901760
        %v2449 = vsub.f32 %v2164, %v2448
        %v2450 = vand.u32 %v2449, 4294901760
        %v2451 = vsub.f32 %v2449, %v2450
        %v2452 = vand.u32 %v2451, 4294901760
        %2453 = vmatpush1.msra.mxu0 %v2452
        %2454 = vmatprep.subr.mxu0 0.0
        %v2455 = vand.u32 %v2165, 4294901760
        %v2456 = vsub.f32 %v2165, %v2455
        %v2457 = vand.u32 %v2456, 4294901760
        %v2458 = vsub.f32 %v2456, %v2457
        %v2459 = vand.u32 %v2458, 4294901760
        %2460 = vmatpush1.msra.mxu0 %v2459
        %2461 = vmatprep.subr.mxu0 0.0
        %v2462 = vand.u32 %v2166, 4294901760
        %v2463 = vsub.f32 %v2166, %v2462
        %v2464 = vand.u32 %v2463, 4294901760
        %v2465 = vsub.f32 %v2463, %v2464
        %v2466 = vand.u32 %v2465, 4294901760
        %2467 = vmatpush1.msra.mxu0 %v2466
        %2468 = vmatprep.subr.mxu0 0.0
        %v2469 = vand.u32 %v2167, 4294901760
        %v2470 = vsub.f32 %v2167, %v2469
        %v2471 = vand.u32 %v2470, 4294901760
        %v2472 = vsub.f32 %v2470, %v2471
        %v2473 = vand.u32 %v2472, 4294901760
        %2474 = vmatpush1.msra.mxu0 %v2473
        %2475 = vmatprep.subr.mxu0 0.0
        %v2476 = vand.u32 %v2168, 4294901760
        %v2477 = vsub.f32 %v2168, %v2476
        %v2478 = vand.u32 %v2477, 4294901760
        %v2479 = vsub.f32 %v2477, %v2478
        %v2480 = vand.u32 %v2479, 4294901760
        %2481 = vmatpush1.msra.mxu0 %v2480
        %2482 = vmatprep.subr.mxu0 0.0
        %v2483 = vand.u32 %v2169, 4294901760
        %v2484 = vsub.f32 %v2169, %v2483
        %v2485 = vand.u32 %v2484, 4294901760
        %v2486 = vsub.f32 %v2484, %v2485
        %v2487 = vand.u32 %v2486, 4294901760
        %2488 = vmatpush1.msra.mxu0 %v2487
        %2489 = vmatprep.subr.mxu0 0.0
        %v2490 = vand.u32 %v2170, 4294901760
        %v2491 = vsub.f32 %v2170, %v2490
        %v2492 = vand.u32 %v2491, 4294901760
        %v2493 = vsub.f32 %v2491, %v2492
        %v2494 = vand.u32 %v2493, 4294901760
        %2495 = vmatpush1.msra.mxu0 %v2494
        %2496 = vmatprep.subr.mxu0 0.0
        %v2497 = vand.u32 %v2171, 4294901760
        %v2498 = vsub.f32 %v2171, %v2497
        %v2499 = vand.u32 %v2498, 4294901760
        %v2500 = vsub.f32 %v2498, %v2499
        %v2501 = vand.u32 %v2500, 4294901760
        %2502 = vmatpush1.msra.mxu0 %v2501
        %2503 = vmatprep.subr.mxu0 0.0
        %v2504 = vand.u32 %v2172, 4294901760
        %v2505 = vsub.f32 %v2172, %v2504
        %v2506 = vand.u32 %v2505, 4294901760
        %v2507 = vsub.f32 %v2505, %v2506
        %v2508 = vand.u32 %v2507, 4294901760
        %2509 = vmatpush1.msra.mxu0 %v2508
        %2510 = vmatprep.subr.mxu0 0.0
        %v2511 = vand.u32 %v2173, 4294901760
        %v2512 = vsub.f32 %v2173, %v2511
        %v2513 = vand.u32 %v2512, 4294901760
        %v2514 = vsub.f32 %v2512, %v2513
        %v2515 = vand.u32 %v2514, 4294901760
        %2516 = vmatpush1.msra.mxu0 %v2515
        %2517 = vmatprep.subr.mxu0 0.0
        %v2518 = vand.u32 %v2174, 4294901760
        %v2519 = vsub.f32 %v2174, %v2518
        %v2520 = vand.u32 %v2519, 4294901760
        %v2521 = vsub.f32 %v2519, %v2520
        %v2522 = vand.u32 %v2521, 4294901760
        %2523 = vmatpush1.msra.mxu0 %v2522
        %v2524 = vand.u32 %v2185, 4294901760
        %2525 = vmatprep.mubr.f32.mxu0 %v2524
        %v2526 = vand.u32 %v2182, 4294901760
        %2527 = vmatmul.mubr.f32.gmra.mrb[0].mxu0 %v2526
        %v2528 = vpop.f32.mrb[0].mxu0
        %v2529 = vadd.f32 %v2297, %v2528
        %v2530 = vpop.f32.mrb[0].mxu0
        %2531 = vdwg.mxu0
        %2532 = vmatprep.subr.mxu0 0.0
        %v2533 = vand.u32 %v2143, 4294901760
        %v2534 = vsub.f32 %v2143, %v2533
        %2535 = vmatpush1.msra.mxu0 %v2534
        %2536 = vmatprep.subr.mxu0 0.0
        %v2537 = vand.u32 %v2144, 4294901760
        %v2538 = vsub.f32 %v2144, %v2537
        %2539 = vmatpush1.msra.mxu0 %v2538
        %2540 = vmatprep.subr.mxu0 0.0
        %v2541 = vand.u32 %v2145, 4294901760
        %v2542 = vsub.f32 %v2145, %v2541
        %2543 = vmatpush1.msra.mxu0 %v2542
        %2544 = vmatprep.subr.mxu0 0.0
        %v2545 = vand.u32 %v2146, 4294901760
        %v2546 = vsub.f32 %v2146, %v2545
        %2547 = vmatpush1.msra.mxu0 %v2546
        %2548 = vmatprep.subr.mxu0 0.0
        %v2549 = vand.u32 %v2147, 4294901760
        %v2550 = vsub.f32 %v2147, %v2549
        %2551 = vmatpush1.msra.mxu0 %v2550
        %2552 = vmatprep.subr.mxu0 0.0
        %v2553 = vand.u32 %v2148, 4294901760
        %v2554 = vsub.f32 %v2148, %v2553
        %2555 = vmatpush1.msra.mxu0 %v2554
        %2556 = vmatprep.subr.mxu0 0.0
        %v2557 = vand.u32 %v2149, 4294901760
        %v2558 = vsub.f32 %v2149, %v2557
        %2559 = vmatpush1.msra.mxu0 %v2558
        %2560 = vmatprep.subr.mxu0 0.0
        %v2561 = vand.u32 %v2150, 4294901760
        %v2562 = vsub.f32 %v2150, %v2561
        %2563 = vmatpush1.msra.mxu0 %v2562
        %2564 = vmatprep.subr.mxu0 0.0
        %v2565 = vand.u32 %v2151, 4294901760
        %v2566 = vsub.f32 %v2151, %v2565
        %2567 = vmatpush1.msra.mxu0 %v2566
        %2568 = vmatprep.subr.mxu0 0.0
        %v2569 = vand.u32 %v2152, 4294901760
        %v2570 = vsub.f32 %v2152, %v2569
        %2571 = vmatpush1.msra.mxu0 %v2570
        %2572 = vmatprep.subr.mxu0 0.0
        %v2573 = vand.u32 %v2153, 4294901760
        %v2574 = vsub.f32 %v2153, %v2573
        %2575 = vmatpush1.msra.mxu0 %v2574
        %2576 = vmatprep.subr.mxu0 0.0
        %v2577 = vand.u32 %v2154, 4294901760
        %v2578 = vsub.f32 %v2154, %v2577
        %2579 = vmatpush1.msra.mxu0 %v2578
        %2580 = vmatprep.subr.mxu0 0.0
        %v2581 = vand.u32 %v2155, 4294901760
        %v2582 = vsub.f32 %v2155, %v2581
        %2583 = vmatpush1.msra.mxu0 %v2582
        %2584 = vmatprep.subr.mxu0 0.0
        %v2585 = vand.u32 %v2156, 4294901760
        %v2586 = vsub.f32 %v2156, %v2585
        %2587 = vmatpush1.msra.mxu0 %v2586
        %2588 = vmatprep.subr.mxu0 0.0
        %v2589 = vand.u32 %v2157, 4294901760
        %v2590 = vsub.f32 %v2157, %v2589
        %2591 = vmatpush1.msra.mxu0 %v2590
        %2592 = vmatprep.subr.mxu0 0.0
        %v2593 = vand.u32 %v2158, 4294901760
        %v2594 = vsub.f32 %v2158, %v2593
        %2595 = vmatpush1.msra.mxu0 %v2594
        %2596 = vmatprep.subr.mxu0 0.0
        %v2597 = vand.u32 %v2159, 4294901760
        %v2598 = vsub.f32 %v2159, %v2597
        %2599 = vmatpush1.msra.mxu0 %v2598
        %2600 = vmatprep.subr.mxu0 0.0
        %v2601 = vand.u32 %v2160, 4294901760
        %v2602 = vsub.f32 %v2160, %v2601
        %2603 = vmatpush1.msra.mxu0 %v2602
        %2604 = vmatprep.subr.mxu0 0.0
        %v2605 = vand.u32 %v2161, 4294901760
        %v2606 = vsub.f32 %v2161, %v2605
        %2607 = vmatpush1.msra.mxu0 %v2606
        %2608 = vmatprep.subr.mxu0 0.0
        %v2609 = vand.u32 %v2162, 4294901760
        %v2610 = vsub.f32 %v2162, %v2609
        %2611 = vmatpush1.msra.mxu0 %v2610
        %2612 = vmatprep.subr.mxu0 0.0
        %v2613 = vand.u32 %v2163, 4294901760
        %v2614 = vsub.f32 %v2163, %v2613
        %2615 = vmatpush1.msra.mxu0 %v2614
        %2616 = vmatprep.subr.mxu0 0.0
        %v2617 = vand.u32 %v2164, 4294901760
        %v2618 = vsub.f32 %v2164, %v2617
        %2619 = vmatpush1.msra.mxu0 %v2618
        %2620 = vmatprep.subr.mxu0 0.0
        %v2621 = vand.u32 %v2165, 4294901760
        %v2622 = vsub.f32 %v2165, %v2621
        %2623 = vmatpush1.msra.mxu0 %v2622
        %2624 = vmatprep.subr.mxu0 0.0
        %v2625 = vand.u32 %v2166, 4294901760
        %v2626 = vsub.f32 %v2166, %v2625
        %2627 = vmatpush1.msra.mxu0 %v2626
        %2628 = vmatprep.subr.mxu0 0.0
        %v2629 = vand.u32 %v2167, 4294901760
        %v2630 = vsub.f32 %v2167, %v2629
        %2631 = vmatpush1.msra.mxu0 %v2630
        %2632 = vmatprep.subr.mxu0 0.0
        %v2633 = vand.u32 %v2168, 4294901760
        %v2634 = vsub.f32 %v2168, %v2633
        %2635 = vmatpush1.msra.mxu0 %v2634
        %2636 = vmatprep.subr.mxu0 0.0
        %v2637 = vand.u32 %v2169, 4294901760
        %v2638 = vsub.f32 %v2169, %v2637
        %2639 = vmatpush1.msra.mxu0 %v2638
        %2640 = vmatprep.subr.mxu0 0.0
        %v2641 = vand.u32 %v2170, 4294901760
        %v2642 = vsub.f32 %v2170, %v2641
        %2643 = vmatpush1.msra.mxu0 %v2642
        %2644 = vmatprep.subr.mxu0 0.0
        %v2645 = vand.u32 %v2171, 4294901760
        %v2646 = vsub.f32 %v2171, %v2645
        %2647 = vmatpush1.msra.mxu0 %v2646
        %2648 = vmatprep.subr.mxu0 0.0
        %v2649 = vand.u32 %v2172, 4294901760
        %v2650 = vsub.f32 %v2172, %v2649
        %2651 = vmatpush1.msra.mxu0 %v2650
        %2652 = vmatprep.subr.mxu0 0.0
        %v2653 = vand.u32 %v2173, 4294901760
        %v2654 = vsub.f32 %v2173, %v2653
        %2655 = vmatpush1.msra.mxu0 %v2654
        %2656 = vmatprep.subr.mxu0 0.0
        %v2657 = vand.u32 %v2174, 4294901760
        %v2658 = vsub.f32 %v2174, %v2657
        %2659 = vmatpush1.msra.mxu0 %v2658
        %v2660 = vand.u32 %v2185, 4294901760
        %v2661 = vsub.f32 %v2185, %v2660
        %2662 = vmatprep.mubr.f32.mxu0 %v2661
        %v2663 = vand.u32 %v2182, 4294901760
        %v2664 = vsub.f32 %v2182, %v2663
        %2665 = vmatmul.mubr.f32.gmra.mrb[0].mxu0 %v2664
        %v2666 = vpop.f32.mrb[0].mxu0
        %v2667 = vadd.f32 %v2529, %v2666
        %v2668 = vpop.f32.mrb[0].mxu0
        %2669 = vdwg.mxu0
        %2670 = vmatprep.subr.mxu0 0.0
        %v2671 = vand.u32 %v2143, 4294901760
        %2672 = vmatpush1.msra.mxu0 %v2671
        %2673 = vmatprep.subr.mxu0 0.0
        %v2674 = vand.u32 %v2144, 4294901760
        %2675 = vmatpush1.msra.mxu0 %v2674
        %2676 = vmatprep.subr.mxu0 0.0
        %v2677 = vand.u32 %v2145, 4294901760
        %2678 = vmatpush1.msra.mxu0 %v2677
        %2679 = vmatprep.subr.mxu0 0.0
        %v2680 = vand.u32 %v2146, 4294901760
        %2681 = vmatpush1.msra.mxu0 %v2680
        %2682 = vmatprep.subr.mxu0 0.0
        %v2683 = vand.u32 %v2147, 4294901760
        %2684 = vmatpush1.msra.mxu0 %v2683
        %2685 = vmatprep.subr.mxu0 0.0
        %v2686 = vand.u32 %v2148, 4294901760
        %2687 = vmatpush1.msra.mxu0 %v2686
        %2688 = vmatprep.subr.mxu0 0.0
        %v2689 = vand.u32 %v2149, 4294901760
        %2690 = vmatpush1.msra.mxu0 %v2689
        %2691 = vmatprep.subr.mxu0 0.0
        %v2692 = vand.u32 %v2150, 4294901760
        %2693 = vmatpush1.msra.mxu0 %v2692
        %2694 = vmatprep.subr.mxu0 0.0
        %v2695 = vand.u32 %v2151, 4294901760
        %2696 = vmatpush1.msra.mxu0 %v2695
        %2697 = vmatprep.subr.mxu0 0.0
        %v2698 = vand.u32 %v2152, 4294901760
        %2699 = vmatpush1.msra.mxu0 %v2698
        %2700 = vmatprep.subr.mxu0 0.0
        %v2701 = vand.u32 %v2153, 4294901760
        %2702 = vmatpush1.msra.mxu0 %v2701
        %2703 = vmatprep.subr.mxu0 0.0
        %v2704 = vand.u32 %v2154, 4294901760
        %2705 = vmatpush1.msra.mxu0 %v2704
        %2706 = vmatprep.subr.mxu0 0.0
        %v2707 = vand.u32 %v2155, 4294901760
        %2708 = vmatpush1.msra.mxu0 %v2707
        %2709 = vmatprep.subr.mxu0 0.0
        %v2710 = vand.u32 %v2156, 4294901760
        %2711 = vmatpush1.msra.mxu0 %v2710
        %2712 = vmatprep.subr.mxu0 0.0
        %v2713 = vand.u32 %v2157, 4294901760
        %2714 = vmatpush1.msra.mxu0 %v2713
        %2715 = vmatprep.subr.mxu0 0.0
        %v2716 = vand.u32 %v2158, 4294901760
        %2717 = vmatpush1.msra.mxu0 %v2716
        %2718 = vmatprep.subr.mxu0 0.0
        %v2719 = vand.u32 %v2159, 4294901760
        %2720 = vmatpush1.msra.mxu0 %v2719
        %2721 = vmatprep.subr.mxu0 0.0
        %v2722 = vand.u32 %v2160, 4294901760
        %2723 = vmatpush1.msra.mxu0 %v2722
        %2724 = vmatprep.subr.mxu0 0.0
        %v2725 = vand.u32 %v2161, 4294901760
        %2726 = vmatpush1.msra.mxu0 %v2725
        %2727 = vmatprep.subr.mxu0 0.0
        %v2728 = vand.u32 %v2162, 4294901760
        %2729 = vmatpush1.msra.mxu0 %v2728
        %2730 = vmatprep.subr.mxu0 0.0
        %v2731 = vand.u32 %v2163, 4294901760
        %2732 = vmatpush1.msra.mxu0 %v2731
        %2733 = vmatprep.subr.mxu0 0.0
        %v2734 = vand.u32 %v2164, 4294901760
        %2735 = vmatpush1.msra.mxu0 %v2734
        %2736 = vmatprep.subr.mxu0 0.0
        %v2737 = vand.u32 %v2165, 4294901760
        %2738 = vmatpush1.msra.mxu0 %v2737
        %2739 = vmatprep.subr.mxu0 0.0
        %v2740 = vand.u32 %v2166, 4294901760
        %2741 = vmatpush1.msra.mxu0 %v2740
        %2742 = vmatprep.subr.mxu0 0.0
        %v2743 = vand.u32 %v2167, 4294901760
        %2744 = vmatpush1.msra.mxu0 %v2743
        %2745 = vmatprep.subr.mxu0 0.0
        %v2746 = vand.u32 %v2168, 4294901760
        %2747 = vmatpush1.msra.mxu0 %v2746
        %2748 = vmatprep.subr.mxu0 0.0
        %v2749 = vand.u32 %v2169, 4294901760
        %2750 = vmatpush1.msra.mxu0 %v2749
        %2751 = vmatprep.subr.mxu0 0.0
        %v2752 = vand.u32 %v2170, 4294901760
        %2753 = vmatpush1.msra.mxu0 %v2752
        %2754 = vmatprep.subr.mxu0 0.0
        %v2755 = vand.u32 %v2171, 4294901760
        %2756 = vmatpush1.msra.mxu0 %v2755
        %2757 = vmatprep.subr.mxu0 0.0
        %v2758 = vand.u32 %v2172, 4294901760
        %2759 = vmatpush1.msra.mxu0 %v2758
        %2760 = vmatprep.subr.mxu0 0.0
        %v2761 = vand.u32 %v2173, 4294901760
        %2762 = vmatpush1.msra.mxu0 %v2761
        %2763 = vmatprep.subr.mxu0 0.0
        %v2764 = vand.u32 %v2174, 4294901760
        %2765 = vmatpush1.msra.mxu0 %v2764
        %v2766 = vand.u32 %v2185, 4294901760
        %v2767 = vsub.f32 %v2185, %v2766
        %v2768 = vand.u32 %v2767, 4294901760
        %2769 = vmatprep.mubr.f32.mxu0 %v2768
        %v2770 = vand.u32 %v2182, 4294901760
        %v2771 = vsub.f32 %v2182, %v2770
        %v2772 = vand.u32 %v2771, 4294901760
        %2773 = vmatmul.mubr.f32.gmra.mrb[0].mxu0 %v2772
        %v2774 = vpop.f32.mrb[0].mxu0
        %v2775 = vadd.f32 %v2667, %v2774
        %v2776 = vpop.f32.mrb[0].mxu0
        %2777 = vdwg.mxu0
        %2778 = vmatprep.subr.mxu0 0.0
        %v2779 = vand.u32 %v2143, 4294901760
        %v2780 = vsub.f32 %v2143, %v2779
        %v2781 = vand.u32 %v2780, 4294901760
        %2782 = vmatpush1.msra.mxu0 %v2781
        %2783 = vmatprep.subr.mxu0 0.0
        %v2784 = vand.u32 %v2144, 4294901760
        %v2785 = vsub.f32 %v2144, %v2784
        %v2786 = vand.u32 %v2785, 4294901760
        %2787 = vmatpush1.msra.mxu0 %v2786
        %2788 = vmatprep.subr.mxu0 0.0
        %v2789 = vand.u32 %v2145, 4294901760
        %v2790 = vsub.f32 %v2145, %v2789
        %v2791 = vand.u32 %v2790, 4294901760
        %2792 = vmatpush1.msra.mxu0 %v2791
        %2793 = vmatprep.subr.mxu0 0.0
        %v2794 = vand.u32 %v2146, 4294901760
        %v2795 = vsub.f32 %v2146, %v2794
        %v2796 = vand.u32 %v2795, 4294901760
        %2797 = vmatpush1.msra.mxu0 %v2796
        %2798 = vmatprep.subr.mxu0 0.0
        %v2799 = vand.u32 %v2147, 4294901760
        %v2800 = vsub.f32 %v2147, %v2799
        %v2801 = vand.u32 %v2800, 4294901760
        %2802 = vmatpush1.msra.mxu0 %v2801
        %2803 = vmatprep.subr.mxu0 0.0
        %v2804 = vand.u32 %v2148, 4294901760
        %v2805 = vsub.f32 %v2148, %v2804
        %v2806 = vand.u32 %v2805, 4294901760
        %2807 = vmatpush1.msra.mxu0 %v2806
        %2808 = vmatprep.subr.mxu0 0.0
        %v2809 = vand.u32 %v2149, 4294901760
        %v2810 = vsub.f32 %v2149, %v2809
        %v2811 = vand.u32 %v2810, 4294901760
        %2812 = vmatpush1.msra.mxu0 %v2811
        %2813 = vmatprep.subr.mxu0 0.0
        %v2814 = vand.u32 %v2150, 4294901760
        %v2815 = vsub.f32 %v2150, %v2814
        %v2816 = vand.u32 %v2815, 4294901760
        %2817 = vmatpush1.msra.mxu0 %v2816
        %2818 = vmatprep.subr.mxu0 0.0
        %v2819 = vand.u32 %v2151, 4294901760
        %v2820 = vsub.f32 %v2151, %v2819
        %v2821 = vand.u32 %v2820, 4294901760
        %2822 = vmatpush1.msra.mxu0 %v2821
        %2823 = vmatprep.subr.mxu0 0.0
        %v2824 = vand.u32 %v2152, 4294901760
        %v2825 = vsub.f32 %v2152, %v2824
        %v2826 = vand.u32 %v2825, 4294901760
        %2827 = vmatpush1.msra.mxu0 %v2826
        %2828 = vmatprep.subr.mxu0 0.0
        %v2829 = vand.u32 %v2153, 4294901760
        %v2830 = vsub.f32 %v2153, %v2829
        %v2831 = vand.u32 %v2830, 4294901760
        %2832 = vmatpush1.msra.mxu0 %v2831
        %2833 = vmatprep.subr.mxu0 0.0
        %v2834 = vand.u32 %v2154, 4294901760
        %v2835 = vsub.f32 %v2154, %v2834
        %v2836 = vand.u32 %v2835, 4294901760
        %2837 = vmatpush1.msra.mxu0 %v2836
        %2838 = vmatprep.subr.mxu0 0.0
        %v2839 = vand.u32 %v2155, 4294901760
        %v2840 = vsub.f32 %v2155, %v2839
        %v2841 = vand.u32 %v2840, 4294901760
        %2842 = vmatpush1.msra.mxu0 %v2841
        %2843 = vmatprep.subr.mxu0 0.0
        %v2844 = vand.u32 %v2156, 4294901760
        %v2845 = vsub.f32 %v2156, %v2844
        %v2846 = vand.u32 %v2845, 4294901760
        %2847 = vmatpush1.msra.mxu0 %v2846
        %2848 = vmatprep.subr.mxu0 0.0
        %v2849 = vand.u32 %v2157, 4294901760
        %v2850 = vsub.f32 %v2157, %v2849
        %v2851 = vand.u32 %v2850, 4294901760
        %2852 = vmatpush1.msra.mxu0 %v2851
        %2853 = vmatprep.subr.mxu0 0.0
        %v2854 = vand.u32 %v2158, 4294901760
        %v2855 = vsub.f32 %v2158, %v2854
        %v2856 = vand.u32 %v2855, 4294901760
        %2857 = vmatpush1.msra.mxu0 %v2856
        %2858 = vmatprep.subr.mxu0 0.0
        %v2859 = vand.u32 %v2159, 4294901760
        %v2860 = vsub.f32 %v2159, %v2859
        %v2861 = vand.u32 %v2860, 4294901760
        %2862 = vmatpush1.msra.mxu0 %v2861
        %2863 = vmatprep.subr.mxu0 0.0
        %v2864 = vand.u32 %v2160, 4294901760
        %v2865 = vsub.f32 %v2160, %v2864
        %v2866 = vand.u32 %v2865, 4294901760
        %2867 = vmatpush1.msra.mxu0 %v2866
        %2868 = vmatprep.subr.mxu0 0.0
        %v2869 = vand.u32 %v2161, 4294901760
        %v2870 = vsub.f32 %v2161, %v2869
        %v2871 = vand.u32 %v2870, 4294901760
        %2872 = vmatpush1.msra.mxu0 %v2871
        %2873 = vmatprep.subr.mxu0 0.0
        %v2874 = vand.u32 %v2162, 4294901760
        %v2875 = vsub.f32 %v2162, %v2874
        %v2876 = vand.u32 %v2875, 4294901760
        %2877 = vmatpush1.msra.mxu0 %v2876
        %2878 = vmatprep.subr.mxu0 0.0
        %v2879 = vand.u32 %v2163, 4294901760
        %v2880 = vsub.f32 %v2163, %v2879
        %v2881 = vand.u32 %v2880, 4294901760
        %2882 = vmatpush1.msra.mxu0 %v2881
        %2883 = vmatprep.subr.mxu0 0.0
        %v2884 = vand.u32 %v2164, 4294901760
        %v2885 = vsub.f32 %v2164, %v2884
        %v2886 = vand.u32 %v2885, 4294901760
        %2887 = vmatpush1.msra.mxu0 %v2886
        %2888 = vmatprep.subr.mxu0 0.0
        %v2889 = vand.u32 %v2165, 4294901760
        %v2890 = vsub.f32 %v2165, %v2889
        %v2891 = vand.u32 %v2890, 4294901760
        %2892 = vmatpush1.msra.mxu0 %v2891
        %2893 = vmatprep.subr.mxu0 0.0
        %v2894 = vand.u32 %v2166, 4294901760
        %v2895 = vsub.f32 %v2166, %v2894
        %v2896 = vand.u32 %v2895, 4294901760
        %2897 = vmatpush1.msra.mxu0 %v2896
        %2898 = vmatprep.subr.mxu0 0.0
        %v2899 = vand.u32 %v2167, 4294901760
        %v2900 = vsub.f32 %v2167, %v2899
        %v2901 = vand.u32 %v2900, 4294901760
        %2902 = vmatpush1.msra.mxu0 %v2901
        %2903 = vmatprep.subr.mxu0 0.0
        %v2904 = vand.u32 %v2168, 4294901760
        %v2905 = vsub.f32 %v2168, %v2904
        %v2906 = vand.u32 %v2905, 4294901760
        %2907 = vmatpush1.msra.mxu0 %v2906
        %2908 = vmatprep.subr.mxu0 0.0
        %v2909 = vand.u32 %v2169, 4294901760
        %v2910 = vsub.f32 %v2169, %v2909
        %v2911 = vand.u32 %v2910, 4294901760
        %2912 = vmatpush1.msra.mxu0 %v2911
        %2913 = vmatprep.subr.mxu0 0.0
        %v2914 = vand.u32 %v2170, 4294901760
        %v2915 = vsub.f32 %v2170, %v2914
        %v2916 = vand.u32 %v2915, 4294901760
        %2917 = vmatpush1.msra.mxu0 %v2916
        %2918 = vmatprep.subr.mxu0 0.0
        %v2919 = vand.u32 %v2171, 4294901760
        %v2920 = vsub.f32 %v2171, %v2919
        %v2921 = vand.u32 %v2920, 4294901760
        %2922 = vmatpush1.msra.mxu0 %v2921
        %2923 = vmatprep.subr.mxu0 0.0
        %v2924 = vand.u32 %v2172, 4294901760
        %v2925 = vsub.f32 %v2172, %v2924
        %v2926 = vand.u32 %v2925, 4294901760
        %2927 = vmatpush1.msra.mxu0 %v2926
        %2928 = vmatprep.subr.mxu0 0.0
        %v2929 = vand.u32 %v2173, 4294901760
        %v2930 = vsub.f32 %v2173, %v2929
        %v2931 = vand.u32 %v2930, 4294901760
        %2932 = vmatpush1.msra.mxu0 %v2931
        %2933 = vmatprep.subr.mxu0 0.0
        %v2934 = vand.u32 %v2174, 4294901760
        %v2935 = vsub.f32 %v2174, %v2934
        %v2936 = vand.u32 %v2935, 4294901760
        %2937 = vmatpush1.msra.mxu0 %v2936
        %v2938 = vand.u32 %v2185, 4294901760
        %2939 = vmatprep.mubr.f32.mxu0 %v2938
        %v2940 = vand.u32 %v2182, 4294901760
        %2941 = vmatmul.mubr.f32.gmra.mrb[0].mxu0 %v2940
        %v2942 = vpop.f32.mrb[0].mxu0
        %v2943 = vadd.f32 %v2775, %v2942
        %v2944 = vpop.f32.mrb[0].mxu0
        %2945 = vdwg.mxu0
        %2946 = vmatprep.subr.mxu0 0.0
        %v2947 = vand.u32 %v2143, 4294901760
        %2948 = vmatpush1.msra.mxu0 %v2947
        %2949 = vmatprep.subr.mxu0 0.0
        %v2950 = vand.u32 %v2144, 4294901760
        %2951 = vmatpush1.msra.mxu0 %v2950
        %2952 = vmatprep.subr.mxu0 0.0
        %v2953 = vand.u32 %v2145, 4294901760
        %2954 = vmatpush1.msra.mxu0 %v2953
        %2955 = vmatprep.subr.mxu0 0.0
        %v2956 = vand.u32 %v2146, 4294901760
        %2957 = vmatpush1.msra.mxu0 %v2956
        %2958 = vmatprep.subr.mxu0 0.0
        %v2959 = vand.u32 %v2147, 4294901760
        %2960 = vmatpush1.msra.mxu0 %v2959
        %2961 = vmatprep.subr.mxu0 0.0
        %v2962 = vand.u32 %v2148, 4294901760
        %2963 = vmatpush1.msra.mxu0 %v2962
        %2964 = vmatprep.subr.mxu0 0.0
        %v2965 = vand.u32 %v2149, 4294901760
        %2966 = vmatpush1.msra.mxu0 %v2965
        %2967 = vmatprep.subr.mxu0 0.0
        %v2968 = vand.u32 %v2150, 4294901760
        %2969 = vmatpush1.msra.mxu0 %v2968
        %2970 = vmatprep.subr.mxu0 0.0
        %v2971 = vand.u32 %v2151, 4294901760
        %2972 = vmatpush1.msra.mxu0 %v2971
        %2973 = vmatprep.subr.mxu0 0.0
        %v2974 = vand.u32 %v2152, 4294901760
        %2975 = vmatpush1.msra.mxu0 %v2974
        %2976 = vmatprep.subr.mxu0 0.0
        %v2977 = vand.u32 %v2153, 4294901760
        %2978 = vmatpush1.msra.mxu0 %v2977
        %2979 = vmatprep.subr.mxu0 0.0
        %v2980 = vand.u32 %v2154, 4294901760
        %2981 = vmatpush1.msra.mxu0 %v2980
        %2982 = vmatprep.subr.mxu0 0.0
        %v2983 = vand.u32 %v2155, 4294901760
        %2984 = vmatpush1.msra.mxu0 %v2983
        %2985 = vmatprep.subr.mxu0 0.0
        %v2986 = vand.u32 %v2156, 4294901760
        %2987 = vmatpush1.msra.mxu0 %v2986
        %2988 = vmatprep.subr.mxu0 0.0
        %v2989 = vand.u32 %v2157, 4294901760
        %2990 = vmatpush1.msra.mxu0 %v2989
        %2991 = vmatprep.subr.mxu0 0.0
        %v2992 = vand.u32 %v2158, 4294901760
        %2993 = vmatpush1.msra.mxu0 %v2992
        %2994 = vmatprep.subr.mxu0 0.0
        %v2995 = vand.u32 %v2159, 4294901760
        %2996 = vmatpush1.msra.mxu0 %v2995
        %2997 = vmatprep.subr.mxu0 0.0
        %v2998 = vand.u32 %v2160, 4294901760
        %2999 = vmatpush1.msra.mxu0 %v2998
        %3000 = vmatprep.subr.mxu0 0.0
        %v3001 = vand.u32 %v2161, 4294901760
        %3002 = vmatpush1.msra.mxu0 %v3001
        %3003 = vmatprep.subr.mxu0 0.0
        %v3004 = vand.u32 %v2162, 4294901760
        %3005 = vmatpush1.msra.mxu0 %v3004
        %3006 = vmatprep.subr.mxu0 0.0
        %v3007 = vand.u32 %v2163, 4294901760
        %3008 = vmatpush1.msra.mxu0 %v3007
        %3009 = vmatprep.subr.mxu0 0.0
        %v3010 = vand.u32 %v2164, 4294901760
        %3011 = vmatpush1.msra.mxu0 %v3010
        %3012 = vmatprep.subr.mxu0 0.0
        %v3013 = vand.u32 %v2165, 4294901760
        %3014 = vmatpush1.msra.mxu0 %v3013
        %3015 = vmatprep.subr.mxu0 0.0
        %v3016 = vand.u32 %v2166, 4294901760
        %3017 = vmatpush1.msra.mxu0 %v3016
        %3018 = vmatprep.subr.mxu0 0.0
        %v3019 = vand.u32 %v2167, 4294901760
        %3020 = vmatpush1.msra.mxu0 %v3019
        %3021 = vmatprep.subr.mxu0 0.0
        %v3022 = vand.u32 %v2168, 4294901760
        %3023 = vmatpush1.msra.mxu0 %v3022
        %3024 = vmatprep.subr.mxu0 0.0
        %v3025 = vand.u32 %v2169, 4294901760
        %3026 = vmatpush1.msra.mxu0 %v3025
        %3027 = vmatprep.subr.mxu0 0.0
        %v3028 = vand.u32 %v2170, 4294901760
        %3029 = vmatpush1.msra.mxu0 %v3028
        %3030 = vmatprep.subr.mxu0 0.0
        %v3031 = vand.u32 %v2171, 4294901760
        %3032 = vmatpush1.msra.mxu0 %v3031
        %3033 = vmatprep.subr.mxu0 0.0
        %v3034 = vand.u32 %v2172, 4294901760
        %3035 = vmatpush1.msra.mxu0 %v3034
        %3036 = vmatprep.subr.mxu0 0.0
        %v3037 = vand.u32 %v2173, 4294901760
        %3038 = vmatpush1.msra.mxu0 %v3037
        %3039 = vmatprep.subr.mxu0 0.0
        %v3040 = vand.u32 %v2174, 4294901760
        %3041 = vmatpush1.msra.mxu0 %v3040
        %v3042 = vand.u32 %v2185, 4294901760
        %3043 = vmatprep.mubr.f32.mxu0 %v3042
        %v3044 = vand.u32 %v2182, 4294901760
        %3045 = vmatmul.mubr.f32.gmra.mrb[0].mxu0 %v3044
        %v3046 = vpop.f32.mrb[0].mxu0
        %v3047 = vadd.f32 %v2943, %v3046
        %v3048 = vpop.f32.mrb[0].mxu0
        %3049 = vdwg.mxu0
        %v3050 = vadd.f32 %v2135, %v3047
        %v3051 = vld [vmem:[%s321] sm:$0x1]
        %v3053 = vlaneseq
        %v3054 = vshrl.u32 %v3053, 7
        %v3055 = vsub.s32 0, %v3054
        %v3056 = vrot.slane %v3051, %v3055
        %v3058 = vadd.f32 %v3050, %v3056
        %3059 = vst [vmem:[%s317] sm:$0xff] %v3058
        %s3060 = sand.u32 %s165, 1
        %s3061 = scalar_lea.sflag [#allocation5], %s3060
        %s3062 = sand.u32 %s165, 1
        %s3063 = smul.addr %s3062, 8
        %s3064 = scalar_lea.vmem [#allocation9], %s3063
        // Predicated region
        $region49: #{tpu_custom_call.1} parent=35 // pred_check
          %p3065 = pneg %p175
        $region50: #{tpu_custom_call.1} parent=35 // pred_check_branch
          %3067 = sbr.rel (%p3065) target = $region52
        $region51: #{tpu_custom_call.1} parent=35 // pred_region
          %s3069 = ssub.s32 128, 128
          %3070 = vsyncadd %s3061, %s3069
          %s3071 = sadd.s32 %s31, %s30
          %s3072 = sadd.s32 %s3071, %s29
          %s3073 = smul.addr %s3072, 128
          %s3074 = scalar_lea.hbm %s4, %s3073
          %s3076 = sshll.u32 %s3064, 4
          %s3077 = int_to_ptr.vmem [resolvable:$true] %s3076
          %3079 = dma.vmem_to_hbm [thread:$0]  %s3077, 128, %s3074, %s3061
        $region52: #{tpu_custom_call.1} parent=35 // pred_fallthru
          _
      $region36: #{tpu_custom_call.1} parent=5 // pred_fallthru
        _
      %p3080 = scmp.le.s32.totalorder 2, %s19
      // Predicated region
      $region53: #{tpu_custom_call.1} parent=5 // pred_check
        %p3081 = pneg %p3080
      $region54: #{tpu_custom_call.1} parent=5 // pred_check_branch
        %3083 = sbr.rel (%p3081) target = $region56
      $region55: #{tpu_custom_call.1} parent=5 // pred_region
        %s3084 = ssub.s32 %s19, 2
        // Predicated region
        $region57: #{tpu_custom_call.1} parent=55 // pred_check
          %p3085 = pneg %p181
        $region58: #{tpu_custom_call.1} parent=55 // pred_check_branch
          %3087 = sbr.rel (%p3085) target = $region60
        $region59: #{tpu_custom_call.1} parent=55 // pred_region
          %s3088 = sand.u32 %s166, 1
          %s3089 = scalar_lea.sflag [#allocation5], %s3088
          %s3090 = sand.u32 %s166, 1
          %s3091 = smul.addr %s3090, 8
          %s3092 = scalar_lea.vmem [#allocation9], %s3091
          %3093 = dma.done %s3089, 128
        $region60: #{tpu_custom_call.1} parent=55 // pred_fallthru
          _
      $region56: #{tpu_custom_call.1} parent=5 // pred_fallthru
        _
    $region6: #{tpu_custom_call.1} parent=1 // loop_footer
      %s23 = sadd.s32 1, %s19
    $region7: #{tpu_custom_call.1} parent=1 // loop_footer_branch
      %18 = sbr.rel target = $region3
    $region8: #{tpu_custom_call.1} parent=1 // loop_exit
      _
    %3094 = vsyncpa [#allocation4], 1
    %s3095 = scalar_lea.sflag [#allocation4], 1
    %3096 = vsyncpa %s3095, 1
    %3097 = vsyncpa [#allocation7], 1
    %s3098 = scalar_lea.sflag [#allocation7], 1
    %3099 = vsyncpa %s3098, 1
    %3100 = vsyncpa [#allocation5], 1
    %s3101 = scalar_lea.sflag [#allocation5], 1
    %3102 = vsyncpa %s3101, 1

</llo_original>
